<compile_context>
chip_gen: v7x
topology: tpu7x:2x2x1
jax: 0.10.0
libtpu: 0.0.40
codegen_flags: <defaults>
</compile_context>

<pallas_src>
import functools

import jax
import jax.numpy as jnp
import numpy as np
from jax.experimental import pallas as pl
from jax.experimental.pallas import tpu as pltpu


NEG_SLOPE = 0.01  # nn.LeakyReLU default negative_slope


def _round_up(x, m):
    return (x + m - 1) // m * m


# --------------------------------------------------------------------------
# Fused kernel: conv3x3+bias+LeakyReLU -> conv3x3+bias+LeakyReLU -> maxpool2x2
# Works on one image per grid step in (C, flattened-padded-space) layout.
# --------------------------------------------------------------------------
def _fused_down_kernel(x_ref, w1_ref, b1_ref, w2_ref, b2_ref,
                       mask_ref, se_ref, so_ref,
                       feat_ref, down_ref, h1p_ref,
                       *, H, W, Cout, neg_slope):
    Wp = W + 2                 # padded width
    B = H * Wp                 # number of "base" positions computed per conv
    Ho, Wo = H // 2, W // 2
    P2r = h1p_ref.shape[1]     # padded flattened length (>= B + 2*Wp + 2)
    head = Wp + 1

    def lrelu(v):
        return jnp.where(v >= 0.0, v, neg_slope * v)

    # ---- conv1: 9 shifted (Cout,Cin)@(Cin,B) matmuls on the padded flat input ----
    acc1 = jnp.zeros((Cout, B), jnp.float32)
    for dy in range(3):
        for dx in range(3):
            off = dy * Wp + dx
            acc1 = acc1 + jnp.dot(w1_ref[dy * 3 + dx],
                                  x_ref[0, :, off:off + B],
                                  preferred_element_type=jnp.float32)
    # bias + LeakyReLU, then zero the pad-column garbage so it acts as conv2 padding.
    h1 = lrelu(acc1 + b1_ref[...]) * mask_ref[...]          # (Cout, B)

    # ---- zero-padded conv2 input lives entirely in VMEM scratch ----
    h1p_ref[:, 0:head] = jnp.zeros((Cout, head), jnp.float32)
    h1p_ref[:, head:head + B] = h1
    h1p_ref[:, head + B:P2r] = jnp.zeros((Cout, P2r - head - B), jnp.float32)

    # ---- conv2: 9 shifted matmuls on the VMEM-resident h1 ----
    acc2 = jnp.zeros((Cout, B), jnp.float32)
    for dy in range(3):
        for dx in range(3):
            off = dy * Wp + dx
            acc2 = acc2 + jnp.dot(w2_ref[dy * 3 + dx],
                                  h1p_ref[:, off:off + B],
                                  preferred_element_type=jnp.float32)
    feat = lrelu(acc2 + b2_ref[...])                        # (Cout, B); pad cols garbage

    # ---- strip pad columns row by row; output is already (1, Cout, H*W) = NCHW-flat ----
    for h in range(H):
        feat_ref[0, :, h * W:(h + 1) * W] = (
            feat[:, h * Wp:h * Wp + W].astype(feat_ref.dtype))

    # ---- 2x2 max-pool straight out of the VMEM-resident feat value ----
    se = se_ref[...]                                        # (W, Wo) selects even cols
    so = so_ref[...]                                        # (W, Wo) selects odd cols
    for h2 in range(Ho):
        r0 = feat[:, (2 * h2) * Wp:(2 * h2) * Wp + W]        # row 2*h2     (Cout, W)
        r1 = feat[:, (2 * h2 + 1) * Wp:(2 * h2 + 1) * Wp + W]  # row 2*h2+1
        vm = jnp.maximum(r0, r1)
        ev = jnp.dot(vm, se, preferred_element_type=jnp.float32)   # vm[:, 2k]
        od = jnp.dot(vm, so, preferred_element_type=jnp.float32)   # vm[:, 2k+1]
        down_ref[0, :, h2 * Wo:(h2 + 1) * Wo] = (
            jnp.maximum(ev, od).astype(down_ref.dtype))


# --------------------------------------------------------------------------
# Down.forward
# --------------------------------------------------------------------------
def down_forward(x_nchw, w1, b1, w2, b2):
    """Pallas forward of Down: returns (feat, down_sampled), both NCHW."""
    N, Cin, H, W = x_nchw.shape
    Cout = w1.shape[0]
    assert H % 2 == 0 and W % 2 == 0, "MaxPool2d(2) path assumes even H, W"

    Hp, Wp = H + 2, W + 2
    B = H * Wp
    Ho, Wo = H // 2, W // 2
    P2r = _round_up(B + 2 * Wp + 2, 8)   # flattened padded length incl. conv overrun

    # Stay in NCHW: pad spatial, flatten (H+2, W+2) -> Hp*Wp, pad tail rows.
    # (~one cheap pass over x; no NHWC transpose anywhere.)
    xp = jnp.pad(x_nchw, ((0, 0), (0, 0), (1, 1), (1, 1)))
    x_flat = xp.reshape(N, Cin, Hp * Wp)
    x_flat = jnp.pad(x_flat, ((0, 0), (0, 0), (0, P2r - Hp * Wp)))

    # Weights as (9, Cout, Cin_of_that_layer); bias as (Cout, 1) columns.
    w1t = jnp.transpose(w1, (2, 3, 0, 1)).reshape(9, Cout, Cin).astype(jnp.float32)
    w2t = jnp.transpose(w2, (2, 3, 0, 1)).reshape(9, Cout, Cout).astype(jnp.float32)
    b1c = b1.reshape(Cout, 1).astype(jnp.float32)
    b2c = b2.reshape(Cout, 1).astype(jnp.float32)

    # Small constant helpers: pad-column mask and even/odd column selectors.
    col = np.arange(B) % Wp
    mask = jnp.asarray((col < W).astype(np.float32)).reshape(1, B)
    se_np = np.zeros((W, Wo), np.float32)
    so_np = np.zeros((W, Wo), np.float32)
    se_np[2 * np.arange(Wo), np.arange(Wo)] = 1.0
    so_np[2 * np.arange(Wo) + 1, np.arange(Wo)] = 1.0
    se = jnp.asarray(se_np)
    so = jnp.asarray(so_np)

    # VMEM budget (generous headroom, floored at the smallest default scoped limit).
    f4 = 4
    est = (2 * (Cin * P2r + Cout * H * W + Cout * Ho * Wo) * f4
           + (9 * Cout * Cin + 9 * Cout * Cout + 2 * Cout + B + 2 * W * Wo) * f4
           + Cout * P2r * f4
           + 8 * Cout * B * f4)
    vmem_limit = int(min(48 << 20, max(16 << 20, 4 * est)))

    kernel = functools.partial(_fused_down_kernel, H=H, W=W, Cout=Cout,
                               neg_slope=NEG_SLOPE)

    feat_flat, down_flat = pl.pallas_call(
        kernel,
        out_shape=(jax.ShapeDtypeStruct((N, Cout, H * W), x_nchw.dtype),
                   jax.ShapeDtypeStruct((N, Cout, Ho * Wo), x_nchw.dtype)),
        grid=(N,),
        in_specs=[
            pl.BlockSpec((1, Cin, P2r), lambda n: (n, 0, 0)),      # padded flat image
            pl.BlockSpec((9, Cout, Cin), lambda n: (0, 0, 0)),     # conv1 weights
            pl.BlockSpec((Cout, 1), lambda n: (0, 0)),             # conv1 bias
            pl.BlockSpec((9, Cout, Cout), lambda n: (0, 0, 0)),    # conv2 weights
            pl.BlockSpec((Cout, 1), lambda n: (0, 0)),             # conv2 bias
            pl.BlockSpec((1, B), lambda n: (0, 0)),                # pad-col mask
            pl.BlockSpec((W, Wo), lambda n: (0, 0)),               # even-col selector
            pl.BlockSpec((W, Wo), lambda n: (0, 0)),               # odd-col selector
        ],
        out_specs=(pl.BlockSpec((1, Cout, H * W), lambda n: (n, 0, 0)),
                   pl.BlockSpec((1, Cout, Ho * Wo), lambda n: (n, 0, 0))),
        scratch_shapes=[pltpu.VMEM((Cout, P2r), jnp.float32)],     # h1 (padded) in VMEM
        compiler_params=pltpu.CompilerParams(
            dimension_semantics=("parallel",),
            vmem_limit_bytes=vmem_limit),
    )(x_flat, w1t, b1c, w2t, b2c, mask, se, so)

    # Free (metadata-only) reshapes: outputs are already channel-major.
    feat = feat_flat.reshape(N, Cout, H, W)
    down = down_flat.reshape(N, Cout, Ho, Wo)
    return feat, down


if __name__ == "__main__":
    N, Cin, Cout, H, W = 2, 4, 8, 16, 16

    key = jax.random.PRNGKey(0)
    kx, kw1, kb1, kw2, kb2 = jax.random.split(key, 5)
    x = jax.random.normal(kx, (N, Cin, H, W), dtype=jnp.float32)
    w1 = jax.random.normal(kw1, (Cout, Cin, 3, 3), jnp.float32) * (1.0 / (3.0 * Cin ** 0.5))
    b1 = jax.random.normal(kb1, (Cout,), jnp.float32) * 0.1
    w2 = jax.random.normal(kw2, (Cout, Cout, 3, 3), jnp.float32) * (1.0 / (3.0 * Cout ** 0.5))
    b2 = jax.random.normal(kb2, (Cout,), jnp.float32) * 0.1

    feat, down = jax.jit(down_forward)(x, w1, b1, w2, b2)
    feat = jax.block_until_ready(feat)
    down = jax.block_until_ready(down)

    # Plain-JAX reference mirroring the PyTorch module.
    def ref_down(x, w1, b1, w2, b2):
        def conv(v, w, b):
            y = jax.lax.conv_general_dilated(
                v, w, window_strides=(1, 1), padding=((1, 1), (1, 1)),
                dimension_numbers=("NCHW", "OIHW", "NCHW"),
                precision=jax.lax.Precision.HIGHEST)
            return y + b.reshape(1, -1, 1, 1)

        def lrelu(v):
            return jnp.where(v >= 0, v, NEG_SLOPE * v)

        f = lrelu(conv(lrelu(conv(x, w1, b1)), w2, b2))
        d = jax.lax.reduce_window(f, -jnp.inf, jax.lax.max,
                                  (1, 1, 2, 2), (1, 1, 2, 2), "VALID")
        return f, d

    feat_ref, down_ref = ref_down(x, w1, b1, w2, b2)

    assert feat.shape == (N, Cout, H, W), feat.shape
    assert down.shape == (N, Cout, H // 2, W // 2), down.shape
    assert jnp.allclose(feat, feat_ref, atol=2e-2, rtol=2e-2), "feat mismatch vs reference"
    assert jnp.allclose(down, down_ref, atol=2e-2, rtol=2e-2), "down mismatch vs reference"

    print("KERNEL_OK")
</pallas_src>

<mosaic_0001>
module attributes {stable_mosaic.version = 11 : i64} {
  func.func @_fused_down_kernel(%arg0: i32, %arg1: memref<1x4x328xf32, #tpu.memory_space<vmem>>, %arg2: memref<9x8x4xf32, #tpu.memory_space<vmem>>, %arg3: memref<8x1xf32, #tpu.memory_space<vmem>>, %arg4: memref<9x8x8xf32, #tpu.memory_space<vmem>>, %arg5: memref<8x1xf32, #tpu.memory_space<vmem>>, %arg6: memref<1x288xf32, #tpu.memory_space<vmem>>, %arg7: memref<16x8xf32, #tpu.memory_space<vmem>>, %arg8: memref<16x8xf32, #tpu.memory_space<vmem>>, %arg9: memref<1x8x256xf32, #tpu.memory_space<vmem>>, %arg10: memref<1x8x64xf32, #tpu.memory_space<vmem>>, %arg11: memref<8x328xf32, #tpu.memory_space<vmem>>) attributes {dimension_semantics = [#tpu.dimension_semantics<parallel>], iteration_bounds = array<i64: 2>, scalar_prefetch = 0 : i64, scratch_operands = 1 : i64, tpu.core_type = #tpu.core_type<tc>, window_params = [{transform_indices = @transform_0, window_bounds = array<i64: 1, 4, 328>}, {pipeline_mode = #tpu.pipeline_mode<synchronous>, transform_indices = @transform_1, window_bounds = array<i64: 9, 8, 4>}, {pipeline_mode = #tpu.pipeline_mode<synchronous>, transform_indices = @transform_2, window_bounds = array<i64: 8, 1>}, {pipeline_mode = #tpu.pipeline_mode<synchronous>, transform_indices = @transform_3, window_bounds = array<i64: 9, 8, 8>}, {pipeline_mode = #tpu.pipeline_mode<synchronous>, transform_indices = @transform_4, window_bounds = array<i64: 8, 1>}, {pipeline_mode = #tpu.pipeline_mode<synchronous>, transform_indices = @transform_5, window_bounds = array<i64: 1, 288>}, {pipeline_mode = #tpu.pipeline_mode<synchronous>, transform_indices = @transform_6, window_bounds = array<i64: 16, 8>}, {pipeline_mode = #tpu.pipeline_mode<synchronous>, transform_indices = @transform_7, window_bounds = array<i64: 16, 8>}, {transform_indices = @transform_8, window_bounds = array<i64: 1, 8, 256>}, {transform_indices = @transform_9, window_bounds = array<i64: 1, 8, 64>}]} {
    %cst = arith.constant 0.000000e+00 : f32
    %0 = vector.broadcast %cst : f32 to vector<8x288xf32>
    %c0 = arith.constant 0 : index
    %c0_0 = arith.constant 0 : index
    %c0_1 = arith.constant 0 : index
    %1 = vector.load %arg2[%c0, %c0_0, %c0_1] : memref<9x8x4xf32, #tpu.memory_space<vmem>>, vector<1x8x4xf32>
    %2 = vector.shape_cast %1 : vector<1x8x4xf32> to vector<8x4xf32>
    %c0_2 = arith.constant 0 : index
    %c0_3 = arith.constant 0 : index
    %c0_4 = arith.constant 0 : index
    %3 = vector.load %arg1[%c0_2, %c0_3, %c0_4] : memref<1x4x328xf32, #tpu.memory_space<vmem>>, vector<1x4x288xf32>
    %4 = vector.shape_cast %3 : vector<1x4x288xf32> to vector<4x288xf32>
    %cst_5 = arith.constant dense<0.000000e+00> : vector<8x288xf32>
    %5 = tpu.matmul %2, %4, %cst_5 {dimension_numbers = #tpu.dot_dimension_numbers<[1], [0], [0], [1], [0, 0, 1, 1], [], []>} : vector<8x4xf32>, vector<4x288xf32>, vector<8x288xf32> -> vector<8x288xf32>
    %6 = arith.addf %0, %5 : vector<8x288xf32>
    %c1 = arith.constant 1 : index
    %c0_6 = arith.constant 0 : index
    %c0_7 = arith.constant 0 : index
    %7 = vector.load %arg2[%c1, %c0_6, %c0_7] : memref<9x8x4xf32, #tpu.memory_space<vmem>>, vector<1x8x4xf32>
    %8 = vector.shape_cast %7 : vector<1x8x4xf32> to vector<8x4xf32>
    %c0_8 = arith.constant 0 : index
    %c0_9 = arith.constant 0 : index
    %c1_10 = arith.constant 1 : index
    %9 = vector.load %arg1[%c0_8, %c0_9, %c1_10] : memref<1x4x328xf32, #tpu.memory_space<vmem>>, vector<1x4x288xf32>
    %10 = vector.shape_cast %9 : vector<1x4x288xf32> to vector<4x288xf32>
    %cst_11 = arith.constant dense<0.000000e+00> : vector<8x288xf32>
    %11 = tpu.matmul %8, %10, %cst_11 {dimension_numbers = #tpu.dot_dimension_numbers<[1], [0], [0], [1], [0, 0, 1, 1], [], []>} : vector<8x4xf32>, vector<4x288xf32>, vector<8x288xf32> -> vector<8x288xf32>
    %12 = arith.addf %6, %11 : vector<8x288xf32>
    %c2 = arith.constant 2 : index
    %c0_12 = arith.constant 0 : index
    %c0_13 = arith.constant 0 : index
    %13 = vector.load %arg2[%c2, %c0_12, %c0_13] : memref<9x8x4xf32, #tpu.memory_space<vmem>>, vector<1x8x4xf32>
    %14 = vector.shape_cast %13 : vector<1x8x4xf32> to vector<8x4xf32>
    %c0_14 = arith.constant 0 : index
    %c0_15 = arith.constant 0 : index
    %c2_16 = arith.constant 2 : index
    %15 = vector.load %arg1[%c0_14, %c0_15, %c2_16] : memref<1x4x328xf32, #tpu.memory_space<vmem>>, vector<1x4x288xf32>
    %16 = vector.shape_cast %15 : vector<1x4x288xf32> to vector<4x288xf32>
    %cst_17 = arith.constant dense<0.000000e+00> : vector<8x288xf32>
    %17 = tpu.matmul %14, %16, %cst_17 {dimension_numbers = #tpu.dot_dimension_numbers<[1], [0], [0], [1], [0, 0, 1, 1], [], []>} : vector<8x4xf32>, vector<4x288xf32>, vector<8x288xf32> -> vector<8x288xf32>
    %18 = arith.addf %12, %17 : vector<8x288xf32>
    %c3 = arith.constant 3 : index
    %c0_18 = arith.constant 0 : index
    %c0_19 = arith.constant 0 : index
    %19 = vector.load %arg2[%c3, %c0_18, %c0_19] : memref<9x8x4xf32, #tpu.memory_space<vmem>>, vector<1x8x4xf32>
    %20 = vector.shape_cast %19 : vector<1x8x4xf32> to vector<8x4xf32>
    %c0_20 = arith.constant 0 : index
    %c0_21 = arith.constant 0 : index
    %c18 = arith.constant 18 : index
    %21 = vector.load %arg1[%c0_20, %c0_21, %c18] : memref<1x4x328xf32, #tpu.memory_space<vmem>>, vector<1x4x288xf32>
    %22 = vector.shape_cast %21 : vector<1x4x288xf32> to vector<4x288xf32>
    %cst_22 = arith.constant dense<0.000000e+00> : vector<8x288xf32>
    %23 = tpu.matmul %20, %22, %cst_22 {dimension_numbers = #tpu.dot_dimension_numbers<[1], [0], [0], [1], [0, 0, 1, 1], [], []>} : vector<8x4xf32>, vector<4x288xf32>, vector<8x288xf32> -> vector<8x288xf32>
    %24 = arith.addf %18, %23 : vector<8x288xf32>
    %c4 = arith.constant 4 : index
    %c0_23 = arith.constant 0 : index
    %c0_24 = arith.constant 0 : index
    %25 = vector.load %arg2[%c4, %c0_23, %c0_24] : memref<9x8x4xf32, #tpu.memory_space<vmem>>, vector<1x8x4xf32>
    %26 = vector.shape_cast %25 : vector<1x8x4xf32> to vector<8x4xf32>
    %c0_25 = arith.constant 0 : index
    %c0_26 = arith.constant 0 : index
    %c19 = arith.constant 19 : index
    %27 = vector.load %arg1[%c0_25, %c0_26, %c19] : memref<1x4x328xf32, #tpu.memory_space<vmem>>, vector<1x4x288xf32>
    %28 = vector.shape_cast %27 : vector<1x4x288xf32> to vector<4x288xf32>
    %cst_27 = arith.constant dense<0.000000e+00> : vector<8x288xf32>
    %29 = tpu.matmul %26, %28, %cst_27 {dimension_numbers = #tpu.dot_dimension_numbers<[1], [0], [0], [1], [0, 0, 1, 1], [], []>} : vector<8x4xf32>, vector<4x288xf32>, vector<8x288xf32> -> vector<8x288xf32>
    %30 = arith.addf %24, %29 : vector<8x288xf32>
    %c5 = arith.constant 5 : index
    %c0_28 = arith.constant 0 : index
    %c0_29 = arith.constant 0 : index
    %31 = vector.load %arg2[%c5, %c0_28, %c0_29] : memref<9x8x4xf32, #tpu.memory_space<vmem>>, vector<1x8x4xf32>
    %32 = vector.shape_cast %31 : vector<1x8x4xf32> to vector<8x4xf32>
    %c0_30 = arith.constant 0 : index
    %c0_31 = arith.constant 0 : index
    %c20 = arith.constant 20 : index
    %33 = vector.load %arg1[%c0_30, %c0_31, %c20] : memref<1x4x328xf32, #tpu.memory_space<vmem>>, vector<1x4x288xf32>
    %34 = vector.shape_cast %33 : vector<1x4x288xf32> to vector<4x288xf32>
    %cst_32 = arith.constant dense<0.000000e+00> : vector<8x288xf32>
    %35 = tpu.matmul %32, %34, %cst_32 {dimension_numbers = #tpu.dot_dimension_numbers<[1], [0], [0], [1], [0, 0, 1, 1], [], []>} : vector<8x4xf32>, vector<4x288xf32>, vector<8x288xf32> -> vector<8x288xf32>
    %36 = arith.addf %30, %35 : vector<8x288xf32>
    %c6 = arith.constant 6 : index
    %c0_33 = arith.constant 0 : index
    %c0_34 = arith.constant 0 : index
    %37 = vector.load %arg2[%c6, %c0_33, %c0_34] : memref<9x8x4xf32, #tpu.memory_space<vmem>>, vector<1x8x4xf32>
    %38 = vector.shape_cast %37 : vector<1x8x4xf32> to vector<8x4xf32>
    %c0_35 = arith.constant 0 : index
    %c0_36 = arith.constant 0 : index
    %c36 = arith.constant 36 : index
    %39 = vector.load %arg1[%c0_35, %c0_36, %c36] : memref<1x4x328xf32, #tpu.memory_space<vmem>>, vector<1x4x288xf32>
    %40 = vector.shape_cast %39 : vector<1x4x288xf32> to vector<4x288xf32>
    %cst_37 = arith.constant dense<0.000000e+00> : vector<8x288xf32>
    %41 = tpu.matmul %38, %40, %cst_37 {dimension_numbers = #tpu.dot_dimension_numbers<[1], [0], [0], [1], [0, 0, 1, 1], [], []>} : vector<8x4xf32>, vector<4x288xf32>, vector<8x288xf32> -> vector<8x288xf32>
    %42 = arith.addf %36, %41 : vector<8x288xf32>
    %c7 = arith.constant 7 : index
    %c0_38 = arith.constant 0 : index
    %c0_39 = arith.constant 0 : index
    %43 = vector.load %arg2[%c7, %c0_38, %c0_39] : memref<9x8x4xf32, #tpu.memory_space<vmem>>, vector<1x8x4xf32>
    %44 = vector.shape_cast %43 : vector<1x8x4xf32> to vector<8x4xf32>
    %c0_40 = arith.constant 0 : index
    %c0_41 = arith.constant 0 : index
    %c37 = arith.constant 37 : index
    %45 = vector.load %arg1[%c0_40, %c0_41, %c37] : memref<1x4x328xf32, #tpu.memory_space<vmem>>, vector<1x4x288xf32>
    %46 = vector.shape_cast %45 : vector<1x4x288xf32> to vector<4x288xf32>
    %cst_42 = arith.constant dense<0.000000e+00> : vector<8x288xf32>
    %47 = tpu.matmul %44, %46, %cst_42 {dimension_numbers = #tpu.dot_dimension_numbers<[1], [0], [0], [1], [0, 0, 1, 1], [], []>} : vector<8x4xf32>, vector<4x288xf32>, vector<8x288xf32> -> vector<8x288xf32>
    %48 = arith.addf %42, %47 : vector<8x288xf32>
    %c8 = arith.constant 8 : index
    %c0_43 = arith.constant 0 : index
    %c0_44 = arith.constant 0 : index
    %49 = vector.load %arg2[%c8, %c0_43, %c0_44] : memref<9x8x4xf32, #tpu.memory_space<vmem>>, vector<1x8x4xf32>
    %50 = vector.shape_cast %49 : vector<1x8x4xf32> to vector<8x4xf32>
    %c0_45 = arith.constant 0 : index
    %c0_46 = arith.constant 0 : index
    %c38 = arith.constant 38 : index
    %51 = vector.load %arg1[%c0_45, %c0_46, %c38] : memref<1x4x328xf32, #tpu.memory_space<vmem>>, vector<1x4x288xf32>
    %52 = vector.shape_cast %51 : vector<1x4x288xf32> to vector<4x288xf32>
    %cst_47 = arith.constant dense<0.000000e+00> : vector<8x288xf32>
    %53 = tpu.matmul %50, %52, %cst_47 {dimension_numbers = #tpu.dot_dimension_numbers<[1], [0], [0], [1], [0, 0, 1, 1], [], []>} : vector<8x4xf32>, vector<4x288xf32>, vector<8x288xf32> -> vector<8x288xf32>
    %54 = arith.addf %48, %53 : vector<8x288xf32>
    %c0_48 = arith.constant 0 : index
    %c0_49 = arith.constant 0 : index
    %55 = vector.load %arg3[%c0_48, %c0_49] : memref<8x1xf32, #tpu.memory_space<vmem>>, vector<8x1xf32>
    %56 = vector.broadcast %55 : vector<8x1xf32> to vector<8x288xf32>
    %57 = arith.addf %54, %56 : vector<8x288xf32>
    %cst_50 = arith.constant 0.000000e+00 : f32
    %58 = vector.broadcast %cst_50 : f32 to vector<8x288xf32>
    %59 = arith.cmpf oge, %57, %58 : vector<8x288xf32>
    %cst_51 = arith.constant 0.00999999977 : f32
    %60 = vector.broadcast %cst_51 : f32 to vector<8x288xf32>
    %61 = arith.mulf %60, %57 : vector<8x288xf32>
    %62 = arith.select %59, %57, %61 : vector<8x288xi1>, vector<8x288xf32>
    %c0_52 = arith.constant 0 : index
    %c0_53 = arith.constant 0 : index
    %63 = vector.load %arg6[%c0_52, %c0_53] : memref<1x288xf32, #tpu.memory_space<vmem>>, vector<1x288xf32>
    %64 = vector.broadcast %63 : vector<1x288xf32> to vector<8x288xf32>
    %65 = arith.mulf %62, %64 : vector<8x288xf32>
    %cst_54 = arith.constant 0.000000e+00 : f32
    %66 = vector.broadcast %cst_54 : f32 to vector<8x19xf32>
    %c0_55 = arith.constant 0 : index
    %c0_56 = arith.constant 0 : index
    %67 = vector.load %arg11[%c0_55, %c0_56] : memref<8x328xf32, #tpu.memory_space<vmem>>, vector<8x19xf32>
    tpu.vector_store %arg11[%c0_55, %c0_56], %66 {strides = array<i32>} : memref<8x328xf32, #tpu.memory_space<vmem>>, vector<8x19xf32>,
    %c0_57 = arith.constant 0 : index
    %c19_58 = arith.constant 19 : index
    %68 = vector.load %arg11[%c0_57, %c19_58] : memref<8x328xf32, #tpu.memory_space<vmem>>, vector<8x288xf32>
    tpu.vector_store %arg11[%c0_57, %c19_58], %65 {strides = array<i32>} : memref<8x328xf32, #tpu.memory_space<vmem>>, vector<8x288xf32>,
    %cst_59 = arith.constant 0.000000e+00 : f32
    %69 = vector.broadcast %cst_59 : f32 to vector<8x21xf32>
    %c0_60 = arith.constant 0 : index
    %c307 = arith.constant 307 : index
    %70 = vector.load %arg11[%c0_60, %c307] : memref<8x328xf32, #tpu.memory_space<vmem>>, vector<8x21xf32>
    tpu.vector_store %arg11[%c0_60, %c307], %69 {strides = array<i32>} : memref<8x328xf32, #tpu.memory_space<vmem>>, vector<8x21xf32>,
    %cst_61 = arith.constant 0.000000e+00 : f32
    %71 = vector.broadcast %cst_61 : f32 to vector<8x288xf32>
    %c0_62 = arith.constant 0 : index
    %c0_63 = arith.constant 0 : index
    %c0_64 = arith.constant 0 : index
    %72 = vector.load %arg4[%c0_62, %c0_63, %c0_64] : memref<9x8x8xf32, #tpu.memory_space<vmem>>, vector<1x8x8xf32>
    %73 = vector.shape_cast %72 : vector<1x8x8xf32> to vector<8x8xf32>
    %c0_65 = arith.constant 0 : index
    %c0_66 = arith.constant 0 : index
    %74 = vector.load %arg11[%c0_65, %c0_66] : memref<8x328xf32, #tpu.memory_space<vmem>>, vector<8x288xf32>
    %cst_67 = arith.constant dense<0.000000e+00> : vector<8x288xf32>
    %75 = tpu.matmul %73, %74, %cst_67 {dimension_numbers = #tpu.dot_dimension_numbers<[1], [0], [0], [1], [0, 0, 1, 1], [], []>} : vector<8x8xf32>, vector<8x288xf32>, vector<8x288xf32> -> vector<8x288xf32>
    %76 = arith.addf %71, %75 : vector<8x288xf32>
    %c1_68 = arith.constant 1 : index
    %c0_69 = arith.constant 0 : index
    %c0_70 = arith.constant 0 : index
    %77 = vector.load %arg4[%c1_68, %c0_69, %c0_70] : memref<9x8x8xf32, #tpu.memory_space<vmem>>, vector<1x8x8xf32>
    %78 = vector.shape_cast %77 : vector<1x8x8xf32> to vector<8x8xf32>
    %c0_71 = arith.constant 0 : index
    %c1_72 = arith.constant 1 : index
    %79 = vector.load %arg11[%c0_71, %c1_72] : memref<8x328xf32, #tpu.memory_space<vmem>>, vector<8x288xf32>
    %cst_73 = arith.constant dense<0.000000e+00> : vector<8x288xf32>
    %80 = tpu.matmul %78, %79, %cst_73 {dimension_numbers = #tpu.dot_dimension_numbers<[1], [0], [0], [1], [0, 0, 1, 1], [], []>} : vector<8x8xf32>, vector<8x288xf32>, vector<8x288xf32> -> vector<8x288xf32>
    %81 = arith.addf %76, %80 : vector<8x288xf32>
    %c2_74 = arith.constant 2 : index
    %c0_75 = arith.constant 0 : index
    %c0_76 = arith.constant 0 : index
    %82 = vector.load %arg4[%c2_74, %c0_75, %c0_76] : memref<9x8x8xf32, #tpu.memory_space<vmem>>, vector<1x8x8xf32>
    %83 = vector.shape_cast %82 : vector<1x8x8xf32> to vector<8x8xf32>
    %c0_77 = arith.constant 0 : index
    %c2_78 = arith.constant 2 : index
    %84 = vector.load %arg11[%c0_77, %c2_78] : memref<8x328xf32, #tpu.memory_space<vmem>>, vector<8x288xf32>
    %cst_79 = arith.constant dense<0.000000e+00> : vector<8x288xf32>
    %85 = tpu.matmul %83, %84, %cst_79 {dimension_numbers = #tpu.dot_dimension_numbers<[1], [0], [0], [1], [0, 0, 1, 1], [], []>} : vector<8x8xf32>, vector<8x288xf32>, vector<8x288xf32> -> vector<8x288xf32>
    %86 = arith.addf %81, %85 : vector<8x288xf32>
    %c3_80 = arith.constant 3 : index
    %c0_81 = arith.constant 0 : index
    %c0_82 = arith.constant 0 : index
    %87 = vector.load %arg4[%c3_80, %c0_81, %c0_82] : memref<9x8x8xf32, #tpu.memory_space<vmem>>, vector<1x8x8xf32>
    %88 = vector.shape_cast %87 : vector<1x8x8xf32> to vector<8x8xf32>
    %c0_83 = arith.constant 0 : index
    %c18_84 = arith.constant 18 : index
    %89 = vector.load %arg11[%c0_83, %c18_84] : memref<8x328xf32, #tpu.memory_space<vmem>>, vector<8x288xf32>
    %cst_85 = arith.constant dense<0.000000e+00> : vector<8x288xf32>
    %90 = tpu.matmul %88, %89, %cst_85 {dimension_numbers = #tpu.dot_dimension_numbers<[1], [0], [0], [1], [0, 0, 1, 1], [], []>} : vector<8x8xf32>, vector<8x288xf32>, vector<8x288xf32> -> vector<8x288xf32>
    %91 = arith.addf %86, %90 : vector<8x288xf32>
    %c4_86 = arith.constant 4 : index
    %c0_87 = arith.constant 0 : index
    %c0_88 = arith.constant 0 : index
    %92 = vector.load %arg4[%c4_86, %c0_87, %c0_88] : memref<9x8x8xf32, #tpu.memory_space<vmem>>, vector<1x8x8xf32>
    %93 = vector.shape_cast %92 : vector<1x8x8xf32> to vector<8x8xf32>
    %c0_89 = arith.constant 0 : index
    %c19_90 = arith.constant 19 : index
    %94 = vector.load %arg11[%c0_89, %c19_90] : memref<8x328xf32, #tpu.memory_space<vmem>>, vector<8x288xf32>
    %cst_91 = arith.constant dense<0.000000e+00> : vector<8x288xf32>
    %95 = tpu.matmul %93, %94, %cst_91 {dimension_numbers = #tpu.dot_dimension_numbers<[1], [0], [0], [1], [0, 0, 1, 1], [], []>} : vector<8x8xf32>, vector<8x288xf32>, vector<8x288xf32> -> vector<8x288xf32>
    %96 = arith.addf %91, %95 : vector<8x288xf32>
    %c5_92 = arith.constant 5 : index
    %c0_93 = arith.constant 0 : index
    %c0_94 = arith.constant 0 : index
    %97 = vector.load %arg4[%c5_92, %c0_93, %c0_94] : memref<9x8x8xf32, #tpu.memory_space<vmem>>, vector<1x8x8xf32>
    %98 = vector.shape_cast %97 : vector<1x8x8xf32> to vector<8x8xf32>
    %c0_95 = arith.constant 0 : index
    %c20_96 = arith.constant 20 : index
    %99 = vector.load %arg11[%c0_95, %c20_96] : memref<8x328xf32, #tpu.memory_space<vmem>>, vector<8x288xf32>
    %cst_97 = arith.constant dense<0.000000e+00> : vector<8x288xf32>
    %100 = tpu.matmul %98, %99, %cst_97 {dimension_numbers = #tpu.dot_dimension_numbers<[1], [0], [0], [1], [0, 0, 1, 1], [], []>} : vector<8x8xf32>, vector<8x288xf32>, vector<8x288xf32> -> vector<8x288xf32>
    %101 = arith.addf %96, %100 : vector<8x288xf32>
    %c6_98 = arith.constant 6 : index
    %c0_99 = arith.constant 0 : index
    %c0_100 = arith.constant 0 : index
    %102 = vector.load %arg4[%c6_98, %c0_99, %c0_100] : memref<9x8x8xf32, #tpu.memory_space<vmem>>, vector<1x8x8xf32>
    %103 = vector.shape_cast %102 : vector<1x8x8xf32> to vector<8x8xf32>
    %c0_101 = arith.constant 0 : index
    %c36_102 = arith.constant 36 : index
    %104 = vector.load %arg11[%c0_101, %c36_102] : memref<8x328xf32, #tpu.memory_space<vmem>>, vector<8x288xf32>
    %cst_103 = arith.constant dense<0.000000e+00> : vector<8x288xf32>
    %105 = tpu.matmul %103, %104, %cst_103 {dimension_numbers = #tpu.dot_dimension_numbers<[1], [0], [0], [1], [0, 0, 1, 1], [], []>} : vector<8x8xf32>, vector<8x288xf32>, vector<8x288xf32> -> vector<8x288xf32>
    %106 = arith.addf %101, %105 : vector<8x288xf32>
    %c7_104 = arith.constant 7 : index
    %c0_105 = arith.constant 0 : index
    %c0_106 = arith.constant 0 : index
    %107 = vector.load %arg4[%c7_104, %c0_105, %c0_106] : memref<9x8x8xf32, #tpu.memory_space<vmem>>, vector<1x8x8xf32>
    %108 = vector.shape_cast %107 : vector<1x8x8xf32> to vector<8x8xf32>
    %c0_107 = arith.constant 0 : index
    %c37_108 = arith.constant 37 : index
    %109 = vector.load %arg11[%c0_107, %c37_108] : memref<8x328xf32, #tpu.memory_space<vmem>>, vector<8x288xf32>
    %cst_109 = arith.constant dense<0.000000e+00> : vector<8x288xf32>
    %110 = tpu.matmul %108, %109, %cst_109 {dimension_numbers = #tpu.dot_dimension_numbers<[1], [0], [0], [1], [0, 0, 1, 1], [], []>} : vector<8x8xf32>, vector<8x288xf32>, vector<8x288xf32> -> vector<8x288xf32>
    %111 = arith.addf %106, %110 : vector<8x288xf32>
    %c8_110 = arith.constant 8 : index
    %c0_111 = arith.constant 0 : index
    %c0_112 = arith.constant 0 : index
    %112 = vector.load %arg4[%c8_110, %c0_111, %c0_112] : memref<9x8x8xf32, #tpu.memory_space<vmem>>, vector<1x8x8xf32>
    %113 = vector.shape_cast %112 : vector<1x8x8xf32> to vector<8x8xf32>
    %c0_113 = arith.constant 0 : index
    %c38_114 = arith.constant 38 : index
    %114 = vector.load %arg11[%c0_113, %c38_114] : memref<8x328xf32, #tpu.memory_space<vmem>>, vector<8x288xf32>
    %cst_115 = arith.constant dense<0.000000e+00> : vector<8x288xf32>
    %115 = tpu.matmul %113, %114, %cst_115 {dimension_numbers = #tpu.dot_dimension_numbers<[1], [0], [0], [1], [0, 0, 1, 1], [], []>} : vector<8x8xf32>, vector<8x288xf32>, vector<8x288xf32> -> vector<8x288xf32>
    %116 = arith.addf %111, %115 : vector<8x288xf32>
    %c0_116 = arith.constant 0 : index
    %c0_117 = arith.constant 0 : index
    %117 = vector.load %arg5[%c0_116, %c0_117] : memref<8x1xf32, #tpu.memory_space<vmem>>, vector<8x1xf32>
    %118 = vector.broadcast %117 : vector<8x1xf32> to vector<8x288xf32>
    %119 = arith.addf %116, %118 : vector<8x288xf32>
    %cst_118 = arith.constant 0.000000e+00 : f32
    %120 = vector.broadcast %cst_118 : f32 to vector<8x288xf32>
    %121 = arith.cmpf oge, %119, %120 : vector<8x288xf32>
    %cst_119 = arith.constant 0.00999999977 : f32
    %122 = vector.broadcast %cst_119 : f32 to vector<8x288xf32>
    %123 = arith.mulf %122, %119 : vector<8x288xf32>
    %124 = arith.select %121, %119, %123 : vector<8x288xi1>, vector<8x288xf32>
    %125 = vector.extract_strided_slice %124 {offsets = [0, 0], sizes = [8, 16], strides = [1, 1]} : vector<8x288xf32> to vector<8x16xf32>
    %c0_120 = arith.constant 0 : index
    %c0_121 = arith.constant 0 : index
    %c0_122 = arith.constant 0 : index
    %126 = vector.load %arg9[%c0_120, %c0_121, %c0_122] : memref<1x8x256xf32, #tpu.memory_space<vmem>>, vector<1x8x16xf32>
    %127 = vector.shape_cast %126 : vector<1x8x16xf32> to vector<8x16xf32>
    %128 = vector.shape_cast %125 : vector<8x16xf32> to vector<1x8x16xf32>
    tpu.vector_store %arg9[%c0_120, %c0_121, %c0_122], %128 {strides = array<i32>} : memref<1x8x256xf32, #tpu.memory_space<vmem>>, vector<1x8x16xf32>,
    %129 = vector.extract_strided_slice %124 {offsets = [0, 18], sizes = [8, 16], strides = [1, 1]} : vector<8x288xf32> to vector<8x16xf32>
    %c0_123 = arith.constant 0 : index
    %c0_124 = arith.constant 0 : index
    %c16 = arith.constant 16 : index
    %130 = vector.load %arg9[%c0_123, %c0_124, %c16] : memref<1x8x256xf32, #tpu.memory_space<vmem>>, vector<1x8x16xf32>
    %131 = vector.shape_cast %130 : vector<1x8x16xf32> to vector<8x16xf32>
    %132 = vector.shape_cast %129 : vector<8x16xf32> to vector<1x8x16xf32>
    tpu.vector_store %arg9[%c0_123, %c0_124, %c16], %132 {strides = array<i32>} : memref<1x8x256xf32, #tpu.memory_space<vmem>>, vector<1x8x16xf32>,
    %133 = vector.extract_strided_slice %124 {offsets = [0, 36], sizes = [8, 16], strides = [1, 1]} : vector<8x288xf32> to vector<8x16xf32>
    %c0_125 = arith.constant 0 : index
    %c0_126 = arith.constant 0 : index
    %c32 = arith.constant 32 : index
    %134 = vector.load %arg9[%c0_125, %c0_126, %c32] : memref<1x8x256xf32, #tpu.memory_space<vmem>>, vector<1x8x16xf32>
    %135 = vector.shape_cast %134 : vector<1x8x16xf32> to vector<8x16xf32>
    %136 = vector.shape_cast %133 : vector<8x16xf32> to vector<1x8x16xf32>
    tpu.vector_store %arg9[%c0_125, %c0_126, %c32], %136 {strides = array<i32>} : memref<1x8x256xf32, #tpu.memory_space<vmem>>, vector<1x8x16xf32>,
    %137 = vector.extract_strided_slice %124 {offsets = [0, 54], sizes = [8, 16], strides = [1, 1]} : vector<8x288xf32> to vector<8x16xf32>
    %c0_127 = arith.constant 0 : index
    %c0_128 = arith.constant 0 : index
    %c48 = arith.constant 48 : index
    %138 = vector.load %arg9[%c0_127, %c0_128, %c48] : memref<1x8x256xf32, #tpu.memory_space<vmem>>, vector<1x8x16xf32>
    %139 = vector.shape_cast %138 : vector<1x8x16xf32> to vector<8x16xf32>
    %140 = vector.shape_cast %137 : vector<8x16xf32> to vector<1x8x16xf32>
    tpu.vector_store %arg9[%c0_127, %c0_128, %c48], %140 {strides = array<i32>} : memref<1x8x256xf32, #tpu.memory_space<vmem>>, vector<1x8x16xf32>,
    %141 = vector.extract_strided_slice %124 {offsets = [0, 72], sizes = [8, 16], strides = [1, 1]} : vector<8x288xf32> to vector<8x16xf32>
    %c0_129 = arith.constant 0 : index
    %c0_130 = arith.constant 0 : index
    %c64 = arith.constant 64 : index
    %142 = vector.load %arg9[%c0_129, %c0_130, %c64] : memref<1x8x256xf32, #tpu.memory_space<vmem>>, vector<1x8x16xf32>
    %143 = vector.shape_cast %142 : vector<1x8x16xf32> to vector<8x16xf32>
    %144 = vector.shape_cast %141 : vector<8x16xf32> to vector<1x8x16xf32>
    tpu.vector_store %arg9[%c0_129, %c0_130, %c64], %144 {strides = array<i32>} : memref<1x8x256xf32, #tpu.memory_space<vmem>>, vector<1x8x16xf32>,
    %145 = vector.extract_strided_slice %124 {offsets = [0, 90], sizes = [8, 16], strides = [1, 1]} : vector<8x288xf32> to vector<8x16xf32>
    %c0_131 = arith.constant 0 : index
    %c0_132 = arith.constant 0 : index
    %c80 = arith.constant 80 : index
    %146 = vector.load %arg9[%c0_131, %c0_132, %c80] : memref<1x8x256xf32, #tpu.memory_space<vmem>>, vector<1x8x16xf32>
    %147 = vector.shape_cast %146 : vector<1x8x16xf32> to vector<8x16xf32>
    %148 = vector.shape_cast %145 : vector<8x16xf32> to vector<1x8x16xf32>
    tpu.vector_store %arg9[%c0_131, %c0_132, %c80], %148 {strides = array<i32>} : memref<1x8x256xf32, #tpu.memory_space<vmem>>, vector<1x8x16xf32>,
    %149 = vector.extract_strided_slice %124 {offsets = [0, 108], sizes = [8, 16], strides = [1, 1]} : vector<8x288xf32> to vector<8x16xf32>
    %c0_133 = arith.constant 0 : index
    %c0_134 = arith.constant 0 : index
    %c96 = arith.constant 96 : index
    %150 = vector.load %arg9[%c0_133, %c0_134, %c96] : memref<1x8x256xf32, #tpu.memory_space<vmem>>, vector<1x8x16xf32>
    %151 = vector.shape_cast %150 : vector<1x8x16xf32> to vector<8x16xf32>
    %152 = vector.shape_cast %149 : vector<8x16xf32> to vector<1x8x16xf32>
    tpu.vector_store %arg9[%c0_133, %c0_134, %c96], %152 {strides = array<i32>} : memref<1x8x256xf32, #tpu.memory_space<vmem>>, vector<1x8x16xf32>,
    %153 = vector.extract_strided_slice %124 {offsets = [0, 126], sizes = [8, 16], strides = [1, 1]} : vector<8x288xf32> to vector<8x16xf32>
    %c0_135 = arith.constant 0 : index
    %c0_136 = arith.constant 0 : index
    %c112 = arith.constant 112 : index
    %154 = vector.load %arg9[%c0_135, %c0_136, %c112] : memref<1x8x256xf32, #tpu.memory_space<vmem>>, vector<1x8x16xf32>
    %155 = vector.shape_cast %154 : vector<1x8x16xf32> to vector<8x16xf32>
    %156 = vector.shape_cast %153 : vector<8x16xf32> to vector<1x8x16xf32>
    tpu.vector_store %arg9[%c0_135, %c0_136, %c112], %156 {strides = array<i32>} : memref<1x8x256xf32, #tpu.memory_space<vmem>>, vector<1x8x16xf32>,
    %157 = vector.extract_strided_slice %124 {offsets = [0, 144], sizes = [8, 16], strides = [1, 1]} : vector<8x288xf32> to vector<8x16xf32>
    %c0_137 = arith.constant 0 : index
    %c0_138 = arith.constant 0 : index
    %c128 = arith.constant 128 : index
    %158 = vector.load %arg9[%c0_137, %c0_138, %c128] : memref<1x8x256xf32, #tpu.memory_space<vmem>>, vector<1x8x16xf32>
    %159 = vector.shape_cast %158 : vector<1x8x16xf32> to vector<8x16xf32>
    %160 = vector.shape_cast %157 : vector<8x16xf32> to vector<1x8x16xf32>
    tpu.vector_store %arg9[%c0_137, %c0_138, %c128], %160 {strides = array<i32>} : memref<1x8x256xf32, #tpu.memory_space<vmem>>, vector<1x8x16xf32>,
    %161 = vector.extract_strided_slice %124 {offsets = [0, 162], sizes = [8, 16], strides = [1, 1]} : vector<8x288xf32> to vector<8x16xf32>
    %c0_139 = arith.constant 0 : index
    %c0_140 = arith.constant 0 : index
    %c144 = arith.constant 144 : index
    %162 = vector.load %arg9[%c0_139, %c0_140, %c144] : memref<1x8x256xf32, #tpu.memory_space<vmem>>, vector<1x8x16xf32>
    %163 = vector.shape_cast %162 : vector<1x8x16xf32> to vector<8x16xf32>
    %164 = vector.shape_cast %161 : vector<8x16xf32> to vector<1x8x16xf32>
    tpu.vector_store %arg9[%c0_139, %c0_140, %c144], %164 {strides = array<i32>} : memref<1x8x256xf32, #tpu.memory_space<vmem>>, vector<1x8x16xf32>,
    %165 = vector.extract_strided_slice %124 {offsets = [0, 180], sizes = [8, 16], strides = [1, 1]} : vector<8x288xf32> to vector<8x16xf32>
    %c0_141 = arith.constant 0 : index
    %c0_142 = arith.constant 0 : index
    %c160 = arith.constant 160 : index
    %166 = vector.load %arg9[%c0_141, %c0_142, %c160] : memref<1x8x256xf32, #tpu.memory_space<vmem>>, vector<1x8x16xf32>
    %167 = vector.shape_cast %166 : vector<1x8x16xf32> to vector<8x16xf32>
    %168 = vector.shape_cast %165 : vector<8x16xf32> to vector<1x8x16xf32>
    tpu.vector_store %arg9[%c0_141, %c0_142, %c160], %168 {strides = array<i32>} : memref<1x8x256xf32, #tpu.memory_space<vmem>>, vector<1x8x16xf32>,
    %169 = vector.extract_strided_slice %124 {offsets = [0, 198], sizes = [8, 16], strides = [1, 1]} : vector<8x288xf32> to vector<8x16xf32>
    %c0_143 = arith.constant 0 : index
    %c0_144 = arith.constant 0 : index
    %c176 = arith.constant 176 : index
    %170 = vector.load %arg9[%c0_143, %c0_144, %c176] : memref<1x8x256xf32, #tpu.memory_space<vmem>>, vector<1x8x16xf32>
    %171 = vector.shape_cast %170 : vector<1x8x16xf32> to vector<8x16xf32>
    %172 = vector.shape_cast %169 : vector<8x16xf32> to vector<1x8x16xf32>
    tpu.vector_store %arg9[%c0_143, %c0_144, %c176], %172 {strides = array<i32>} : memref<1x8x256xf32, #tpu.memory_space<vmem>>, vector<1x8x16xf32>,
    %173 = vector.extract_strided_slice %124 {offsets = [0, 216], sizes = [8, 16], strides = [1, 1]} : vector<8x288xf32> to vector<8x16xf32>
    %c0_145 = arith.constant 0 : index
    %c0_146 = arith.constant 0 : index
    %c192 = arith.constant 192 : index
    %174 = vector.load %arg9[%c0_145, %c0_146, %c192] : memref<1x8x256xf32, #tpu.memory_space<vmem>>, vector<1x8x16xf32>
    %175 = vector.shape_cast %174 : vector<1x8x16xf32> to vector<8x16xf32>
    %176 = vector.shape_cast %173 : vector<8x16xf32> to vector<1x8x16xf32>
    tpu.vector_store %arg9[%c0_145, %c0_146, %c192], %176 {strides = array<i32>} : memref<1x8x256xf32, #tpu.memory_space<vmem>>, vector<1x8x16xf32>,
    %177 = vector.extract_strided_slice %124 {offsets = [0, 234], sizes = [8, 16], strides = [1, 1]} : vector<8x288xf32> to vector<8x16xf32>
    %c0_147 = arith.constant 0 : index
    %c0_148 = arith.constant 0 : index
    %c208 = arith.constant 208 : index
    %178 = vector.load %arg9[%c0_147, %c0_148, %c208] : memref<1x8x256xf32, #tpu.memory_space<vmem>>, vector<1x8x16xf32>
    %179 = vector.shape_cast %178 : vector<1x8x16xf32> to vector<8x16xf32>
    %180 = vector.shape_cast %177 : vector<8x16xf32> to vector<1x8x16xf32>
    tpu.vector_store %arg9[%c0_147, %c0_148, %c208], %180 {strides = array<i32>} : memref<1x8x256xf32, #tpu.memory_space<vmem>>, vector<1x8x16xf32>,
    %181 = vector.extract_strided_slice %124 {offsets = [0, 252], sizes = [8, 16], strides = [1, 1]} : vector<8x288xf32> to vector<8x16xf32>
    %c0_149 = arith.constant 0 : index
    %c0_150 = arith.constant 0 : index
    %c224 = arith.constant 224 : index
    %182 = vector.load %arg9[%c0_149, %c0_150, %c224] : memref<1x8x256xf32, #tpu.memory_space<vmem>>, vector<1x8x16xf32>
    %183 = vector.shape_cast %182 : vector<1x8x16xf32> to vector<8x16xf32>
    %184 = vector.shape_cast %181 : vector<8x16xf32> to vector<1x8x16xf32>
    tpu.vector_store %arg9[%c0_149, %c0_150, %c224], %184 {strides = array<i32>} : memref<1x8x256xf32, #tpu.memory_space<vmem>>, vector<1x8x16xf32>,
    %185 = vector.extract_strided_slice %124 {offsets = [0, 270], sizes = [8, 16], strides = [1, 1]} : vector<8x288xf32> to vector<8x16xf32>
    %c0_151 = arith.constant 0 : index
    %c0_152 = arith.constant 0 : index
    %c240 = arith.constant 240 : index
    %186 = vector.load %arg9[%c0_151, %c0_152, %c240] : memref<1x8x256xf32, #tpu.memory_space<vmem>>, vector<1x8x16xf32>
    %187 = vector.shape_cast %186 : vector<1x8x16xf32> to vector<8x16xf32>
    %188 = vector.shape_cast %185 : vector<8x16xf32> to vector<1x8x16xf32>
    tpu.vector_store %arg9[%c0_151, %c0_152, %c240], %188 {strides = array<i32>} : memref<1x8x256xf32, #tpu.memory_space<vmem>>, vector<1x8x16xf32>,
    %c0_153 = arith.constant 0 : index
    %c0_154 = arith.constant 0 : index
    %189 = vector.load %arg7[%c0_153, %c0_154] : memref<16x8xf32, #tpu.memory_space<vmem>>, vector<16x8xf32>
    %c0_155 = arith.constant 0 : index
    %c0_156 = arith.constant 0 : index
    %190 = vector.load %arg8[%c0_155, %c0_156] : memref<16x8xf32, #tpu.memory_space<vmem>>, vector<16x8xf32>
    %191 = vector.extract_strided_slice %124 {offsets = [0, 0], sizes = [8, 16], strides = [1, 1]} : vector<8x288xf32> to vector<8x16xf32>
    %192 = vector.extract_strided_slice %124 {offsets = [0, 18], sizes = [8, 16], strides = [1, 1]} : vector<8x288xf32> to vector<8x16xf32>
    %193 = arith.maximumf %191, %192 : vector<8x16xf32>
    %cst_157 = arith.constant dense<0.000000e+00> : vector<8x8xf32>
    %194 = tpu.matmul %193, %189, %cst_157 {dimension_numbers = #tpu.dot_dimension_numbers<[1], [0], [0], [1], [0, 0, 1, 1], [], []>} : vector<8x16xf32>, vector<16x8xf32>, vector<8x8xf32> -> vector<8x8xf32>
    %cst_158 = arith.constant dense<0.000000e+00> : vector<8x8xf32>
    %195 = tpu.matmul %193, %190, %cst_158 {dimension_numbers = #tpu.dot_dimension_numbers<[1], [0], [0], [1], [0, 0, 1, 1], [], []>} : vector<8x16xf32>, vector<16x8xf32>, vector<8x8xf32> -> vector<8x8xf32>
    %196 = arith.maximumf %194, %195 : vector<8x8xf32>
    %c0_159 = arith.constant 0 : index
    %c0_160 = arith.constant 0 : index
    %c0_161 = arith.constant 0 : index
    %197 = vector.load %arg10[%c0_159, %c0_160, %c0_161] : memref<1x8x64xf32, #tpu.memory_space<vmem>>, vector<1x8x8xf32>
    %198 = vector.shape_cast %197 : vector<1x8x8xf32> to vector<8x8xf32>
    %199 = vector.shape_cast %196 : vector<8x8xf32> to vector<1x8x8xf32>
    tpu.vector_store %arg10[%c0_159, %c0_160, %c0_161], %199 {strides = array<i32>} : memref<1x8x64xf32, #tpu.memory_space<vmem>>, vector<1x8x8xf32>,
    %200 = vector.extract_strided_slice %124 {offsets = [0, 36], sizes = [8, 16], strides = [1, 1]} : vector<8x288xf32> to vector<8x16xf32>
    %201 = vector.extract_strided_slice %124 {offsets = [0, 54], sizes = [8, 16], strides = [1, 1]} : vector<8x288xf32> to vector<8x16xf32>
    %202 = arith.maximumf %200, %201 : vector<8x16xf32>
    %cst_162 = arith.constant dense<0.000000e+00> : vector<8x8xf32>
    %203 = tpu.matmul %202, %189, %cst_162 {dimension_numbers = #tpu.dot_dimension_numbers<[1], [0], [0], [1], [0, 0, 1, 1], [], []>} : vector<8x16xf32>, vector<16x8xf32>, vector<8x8xf32> -> vector<8x8xf32>
    %cst_163 = arith.constant dense<0.000000e+00> : vector<8x8xf32>
    %204 = tpu.matmul %202, %190, %cst_163 {dimension_numbers = #tpu.dot_dimension_numbers<[1], [0], [0], [1], [0, 0, 1, 1], [], []>} : vector<8x16xf32>, vector<16x8xf32>, vector<8x8xf32> -> vector<8x8xf32>
    %205 = arith.maximumf %203, %204 : vector<8x8xf32>
    %c0_164 = arith.constant 0 : index
    %c0_165 = arith.constant 0 : index
    %c8_166 = arith.constant 8 : index
    %206 = vector.load %arg10[%c0_164, %c0_165, %c8_166] : memref<1x8x64xf32, #tpu.memory_space<vmem>>, vector<1x8x8xf32>
    %207 = vector.shape_cast %206 : vector<1x8x8xf32> to vector<8x8xf32>
    %208 = vector.shape_cast %205 : vector<8x8xf32> to vector<1x8x8xf32>
    tpu.vector_store %arg10[%c0_164, %c0_165, %c8_166], %208 {strides = array<i32>} : memref<1x8x64xf32, #tpu.memory_space<vmem>>, vector<1x8x8xf32>,
    %209 = vector.extract_strided_slice %124 {offsets = [0, 72], sizes = [8, 16], strides = [1, 1]} : vector<8x288xf32> to vector<8x16xf32>
    %210 = vector.extract_strided_slice %124 {offsets = [0, 90], sizes = [8, 16], strides = [1, 1]} : vector<8x288xf32> to vector<8x16xf32>
    %211 = arith.maximumf %209, %210 : vector<8x16xf32>
    %cst_167 = arith.constant dense<0.000000e+00> : vector<8x8xf32>
    %212 = tpu.matmul %211, %189, %cst_167 {dimension_numbers = #tpu.dot_dimension_numbers<[1], [0], [0], [1], [0, 0, 1, 1], [], []>} : vector<8x16xf32>, vector<16x8xf32>, vector<8x8xf32> -> vector<8x8xf32>
    %cst_168 = arith.constant dense<0.000000e+00> : vector<8x8xf32>
    %213 = tpu.matmul %211, %190, %cst_168 {dimension_numbers = #tpu.dot_dimension_numbers<[1], [0], [0], [1], [0, 0, 1, 1], [], []>} : vector<8x16xf32>, vector<16x8xf32>, vector<8x8xf32> -> vector<8x8xf32>
    %214 = arith.maximumf %212, %213 : vector<8x8xf32>
    %c0_169 = arith.constant 0 : index
    %c0_170 = arith.constant 0 : index
    %c16_171 = arith.constant 16 : index
    %215 = vector.load %arg10[%c0_169, %c0_170, %c16_171] : memref<1x8x64xf32, #tpu.memory_space<vmem>>, vector<1x8x8xf32>
    %216 = vector.shape_cast %215 : vector<1x8x8xf32> to vector<8x8xf32>
    %217 = vector.shape_cast %214 : vector<8x8xf32> to vector<1x8x8xf32>
    tpu.vector_store %arg10[%c0_169, %c0_170, %c16_171], %217 {strides = array<i32>} : memref<1x8x64xf32, #tpu.memory_space<vmem>>, vector<1x8x8xf32>,
    %218 = vector.extract_strided_slice %124 {offsets = [0, 108], sizes = [8, 16], strides = [1, 1]} : vector<8x288xf32> to vector<8x16xf32>
    %219 = vector.extract_strided_slice %124 {offsets = [0, 126], sizes = [8, 16], strides = [1, 1]} : vector<8x288xf32> to vector<8x16xf32>
    %220 = arith.maximumf %218, %219 : vector<8x16xf32>
    %cst_172 = arith.constant dense<0.000000e+00> : vector<8x8xf32>
    %221 = tpu.matmul %220, %189, %cst_172 {dimension_numbers = #tpu.dot_dimension_numbers<[1], [0], [0], [1], [0, 0, 1, 1], [], []>} : vector<8x16xf32>, vector<16x8xf32>, vector<8x8xf32> -> vector<8x8xf32>
    %cst_173 = arith.constant dense<0.000000e+00> : vector<8x8xf32>
    %222 = tpu.matmul %220, %190, %cst_173 {dimension_numbers = #tpu.dot_dimension_numbers<[1], [0], [0], [1], [0, 0, 1, 1], [], []>} : vector<8x16xf32>, vector<16x8xf32>, vector<8x8xf32> -> vector<8x8xf32>
    %223 = arith.maximumf %221, %222 : vector<8x8xf32>
    %c0_174 = arith.constant 0 : index
    %c0_175 = arith.constant 0 : index
    %c24 = arith.constant 24 : index
    %224 = vector.load %arg10[%c0_174, %c0_175, %c24] : memref<1x8x64xf32, #tpu.memory_space<vmem>>, vector<1x8x8xf32>
    %225 = vector.shape_cast %224 : vector<1x8x8xf32> to vector<8x8xf32>
    %226 = vector.shape_cast %223 : vector<8x8xf32> to vector<1x8x8xf32>
    tpu.vector_store %arg10[%c0_174, %c0_175, %c24], %226 {strides = array<i32>} : memref<1x8x64xf32, #tpu.memory_space<vmem>>, vector<1x8x8xf32>,
    %227 = vector.extract_strided_slice %124 {offsets = [0, 144], sizes = [8, 16], strides = [1, 1]} : vector<8x288xf32> to vector<8x16xf32>
    %228 = vector.extract_strided_slice %124 {offsets = [0, 162], sizes = [8, 16], strides = [1, 1]} : vector<8x288xf32> to vector<8x16xf32>
    %229 = arith.maximumf %227, %228 : vector<8x16xf32>
    %cst_176 = arith.constant dense<0.000000e+00> : vector<8x8xf32>
    %230 = tpu.matmul %229, %189, %cst_176 {dimension_numbers = #tpu.dot_dimension_numbers<[1], [0], [0], [1], [0, 0, 1, 1], [], []>} : vector<8x16xf32>, vector<16x8xf32>, vector<8x8xf32> -> vector<8x8xf32>
    %cst_177 = arith.constant dense<0.000000e+00> : vector<8x8xf32>
    %231 = tpu.matmul %229, %190, %cst_177 {dimension_numbers = #tpu.dot_dimension_numbers<[1], [0], [0], [1], [0, 0, 1, 1], [], []>} : vector<8x16xf32>, vector<16x8xf32>, vector<8x8xf32> -> vector<8x8xf32>
    %232 = arith.maximumf %230, %231 : vector<8x8xf32>
    %c0_178 = arith.constant 0 : index
    %c0_179 = arith.constant 0 : index
    %c32_180 = arith.constant 32 : index
    %233 = vector.load %arg10[%c0_178, %c0_179, %c32_180] : memref<1x8x64xf32, #tpu.memory_space<vmem>>, vector<1x8x8xf32>
    %234 = vector.shape_cast %233 : vector<1x8x8xf32> to vector<8x8xf32>
    %235 = vector.shape_cast %232 : vector<8x8xf32> to vector<1x8x8xf32>
    tpu.vector_store %arg10[%c0_178, %c0_179, %c32_180], %235 {strides = array<i32>} : memref<1x8x64xf32, #tpu.memory_space<vmem>>, vector<1x8x8xf32>,
    %236 = vector.extract_strided_slice %124 {offsets = [0, 180], sizes = [8, 16], strides = [1, 1]} : vector<8x288xf32> to vector<8x16xf32>
    %237 = vector.extract_strided_slice %124 {offsets = [0, 198], sizes = [8, 16], strides = [1, 1]} : vector<8x288xf32> to vector<8x16xf32>
    %238 = arith.maximumf %236, %237 : vector<8x16xf32>
    %cst_181 = arith.constant dense<0.000000e+00> : vector<8x8xf32>
    %239 = tpu.matmul %238, %189, %cst_181 {dimension_numbers = #tpu.dot_dimension_numbers<[1], [0], [0], [1], [0, 0, 1, 1], [], []>} : vector<8x16xf32>, vector<16x8xf32>, vector<8x8xf32> -> vector<8x8xf32>
    %cst_182 = arith.constant dense<0.000000e+00> : vector<8x8xf32>
    %240 = tpu.matmul %238, %190, %cst_182 {dimension_numbers = #tpu.dot_dimension_numbers<[1], [0], [0], [1], [0, 0, 1, 1], [], []>} : vector<8x16xf32>, vector<16x8xf32>, vector<8x8xf32> -> vector<8x8xf32>
    %241 = arith.maximumf %239, %240 : vector<8x8xf32>
    %c0_183 = arith.constant 0 : index
    %c0_184 = arith.constant 0 : index
    %c40 = arith.constant 40 : index
    %242 = vector.load %arg10[%c0_183, %c0_184, %c40] : memref<1x8x64xf32, #tpu.memory_space<vmem>>, vector<1x8x8xf32>
    %243 = vector.shape_cast %242 : vector<1x8x8xf32> to vector<8x8xf32>
    %244 = vector.shape_cast %241 : vector<8x8xf32> to vector<1x8x8xf32>
    tpu.vector_store %arg10[%c0_183, %c0_184, %c40], %244 {strides = array<i32>} : memref<1x8x64xf32, #tpu.memory_space<vmem>>, vector<1x8x8xf32>,
    %245 = vector.extract_strided_slice %124 {offsets = [0, 216], sizes = [8, 16], strides = [1, 1]} : vector<8x288xf32> to vector<8x16xf32>
    %246 = vector.extract_strided_slice %124 {offsets = [0, 234], sizes = [8, 16], strides = [1, 1]} : vector<8x288xf32> to vector<8x16xf32>
    %247 = arith.maximumf %245, %246 : vector<8x16xf32>
    %cst_185 = arith.constant dense<0.000000e+00> : vector<8x8xf32>
    %248 = tpu.matmul %247, %189, %cst_185 {dimension_numbers = #tpu.dot_dimension_numbers<[1], [0], [0], [1], [0, 0, 1, 1], [], []>} : vector<8x16xf32>, vector<16x8xf32>, vector<8x8xf32> -> vector<8x8xf32>
    %cst_186 = arith.constant dense<0.000000e+00> : vector<8x8xf32>
    %249 = tpu.matmul %247, %190, %cst_186 {dimension_numbers = #tpu.dot_dimension_numbers<[1], [0], [0], [1], [0, 0, 1, 1], [], []>} : vector<8x16xf32>, vector<16x8xf32>, vector<8x8xf32> -> vector<8x8xf32>
    %250 = arith.maximumf %248, %249 : vector<8x8xf32>
    %c0_187 = arith.constant 0 : index
    %c0_188 = arith.constant 0 : index
    %c48_189 = arith.constant 48 : index
    %251 = vector.load %arg10[%c0_187, %c0_188, %c48_189] : memref<1x8x64xf32, #tpu.memory_space<vmem>>, vector<1x8x8xf32>
    %252 = vector.shape_cast %251 : vector<1x8x8xf32> to vector<8x8xf32>
    %253 = vector.shape_cast %250 : vector<8x8xf32> to vector<1x8x8xf32>
    tpu.vector_store %arg10[%c0_187, %c0_188, %c48_189], %253 {strides = array<i32>} : memref<1x8x64xf32, #tpu.memory_space<vmem>>, vector<1x8x8xf32>,
    %254 = vector.extract_strided_slice %124 {offsets = [0, 252], sizes = [8, 16], strides = [1, 1]} : vector<8x288xf32> to vector<8x16xf32>
    %255 = vector.extract_strided_slice %124 {offsets = [0, 270], sizes = [8, 16], strides = [1, 1]} : vector<8x288xf32> to vector<8x16xf32>
    %256 = arith.maximumf %254, %255 : vector<8x16xf32>
    %cst_190 = arith.constant dense<0.000000e+00> : vector<8x8xf32>
    %257 = tpu.matmul %256, %189, %cst_190 {dimension_numbers = #tpu.dot_dimension_numbers<[1], [0], [0], [1], [0, 0, 1, 1], [], []>} : vector<8x16xf32>, vector<16x8xf32>, vector<8x8xf32> -> vector<8x8xf32>
    %cst_191 = arith.constant dense<0.000000e+00> : vector<8x8xf32>
    %258 = tpu.matmul %256, %190, %cst_191 {dimension_numbers = #tpu.dot_dimension_numbers<[1], [0], [0], [1], [0, 0, 1, 1], [], []>} : vector<8x16xf32>, vector<16x8xf32>, vector<8x8xf32> -> vector<8x8xf32>
    %259 = arith.maximumf %257, %258 : vector<8x8xf32>
    %c0_192 = arith.constant 0 : index
    %c0_193 = arith.constant 0 : index
    %c56 = arith.constant 56 : index
    %260 = vector.load %arg10[%c0_192, %c0_193, %c56] : memref<1x8x64xf32, #tpu.memory_space<vmem>>, vector<1x8x8xf32>
    %261 = vector.shape_cast %260 : vector<1x8x8xf32> to vector<8x8xf32>
    %262 = vector.shape_cast %259 : vector<8x8xf32> to vector<1x8x8xf32>
    tpu.vector_store %arg10[%c0_192, %c0_193, %c56], %262 {strides = array<i32>} : memref<1x8x64xf32, #tpu.memory_space<vmem>>, vector<1x8x8xf32>,
    return
  }
  func.func @transform_0(%arg0: i32) -> (i32, i32, i32) {
    %c0_i32 = arith.constant 0 : i32
    %c0_i32_0 = arith.constant 0 : i32
    %c0_i32_1 = arith.constant 0 : i32
    return %arg0, %c0_i32, %c0_i32_0 : i32, i32, i32
  }
  func.func @transform_1(%arg0: i32) -> (i32, i32, i32) {
    %c0_i32 = arith.constant 0 : i32
    %c0_i32_0 = arith.constant 0 : i32
    %c0_i32_1 = arith.constant 0 : i32
    %c0_i32_2 = arith.constant 0 : i32
    return %c0_i32, %c0_i32_0, %c0_i32_1 : i32, i32, i32
  }
  func.func @transform_2(%arg0: i32) -> (i32, i32) {
    %c0_i32 = arith.constant 0 : i32
    %c0_i32_0 = arith.constant 0 : i32
    %c0_i32_1 = arith.constant 0 : i32
    return %c0_i32, %c0_i32_0 : i32, i32
  }
  func.func @transform_3(%arg0: i32) -> (i32, i32, i32) {
    %c0_i32 = arith.constant 0 : i32
    %c0_i32_0 = arith.constant 0 : i32
    %c0_i32_1 = arith.constant 0 : i32
    %c0_i32_2 = arith.constant 0 : i32
    return %c0_i32, %c0_i32_0, %c0_i32_1 : i32, i32, i32
  }
  func.func @transform_4(%arg0: i32) -> (i32, i32) {
    %c0_i32 = arith.constant 0 : i32
    %c0_i32_0 = arith.constant 0 : i32
    %c0_i32_1 = arith.constant 0 : i32
    return %c0_i32, %c0_i32_0 : i32, i32
  }
  func.func @transform_5(%arg0: i32) -> (i32, i32) {
    %c0_i32 = arith.constant 0 : i32
    %c0_i32_0 = arith.constant 0 : i32
    %c0_i32_1 = arith.constant 0 : i32
    return %c0_i32, %c0_i32_0 : i32, i32
  }
  func.func @transform_6(%arg0: i32) -> (i32, i32) {
    %c0_i32 = arith.constant 0 : i32
    %c0_i32_0 = arith.constant 0 : i32
    %c0_i32_1 = arith.constant 0 : i32
    return %c0_i32, %c0_i32_0 : i32, i32
  }
  func.func @transform_7(%arg0: i32) -> (i32, i32) {
    %c0_i32 = arith.constant 0 : i32
    %c0_i32_0 = arith.constant 0 : i32
    %c0_i32_1 = arith.constant 0 : i32
    return %c0_i32, %c0_i32_0 : i32, i32
  }
  func.func @transform_8(%arg0: i32) -> (i32, i32, i32) {
    %c0_i32 = arith.constant 0 : i32
    %c0_i32_0 = arith.constant 0 : i32
    %c0_i32_1 = arith.constant 0 : i32
    return %arg0, %c0_i32, %c0_i32_0 : i32, i32, i32
  }
  func.func @transform_9(%arg0: i32) -> (i32, i32, i32) {
    %c0_i32 = arith.constant 0 : i32
    %c0_i32_0 = arith.constant 0 : i32
    %c0_i32_1 = arith.constant 0 : i32
    return %arg0, %c0_i32, %c0_i32_0 : i32, i32, i32
  }
}

</mosaic_0001>

<llo_original>
// kernel: down_forward.1
$region0: #{down_forward.1}
  #allocation0 [shape = 'u32[]', space=smem, size = 0x4, offset = 0x4, fixed_abs, tag = 'smem constant byte address 0x4 - core index']
  #allocation1 [shape = 'u32[144,128]{1,0:T(1,128)}', space=vmem, size = 0x12000, scoped, tag = 'internal scratch']
  #allocation2 [shape = 'f32[8,328]{1,0:T(8,128)}', space=vmem, size = 0x3000, scoped, tag = 'scratch operand']
  %s0 = inlined_call_operand.vmem [shape: f32[2,4,328], index: 0, kind: input, shape index: {}]
  %s1 = inlined_call_operand.vmem [shape: f32[9,8,4], index: 1, kind: input, shape index: {}]
  %s2 = inlined_call_operand.vmem [shape: f32[8,1], index: 2, kind: input, shape index: {}]
  %s3 = inlined_call_operand.vmem [shape: f32[9,8,8], index: 3, kind: input, shape index: {}]
  %s4 = inlined_call_operand.vmem [shape: f32[8,1], index: 4, kind: input, shape index: {}]
  %s5 = inlined_call_operand.vmem [shape: f32[1,288], index: 5, kind: input, shape index: {}]
  %s6 = inlined_call_operand.vmem [shape: f32[16,8], index: 6, kind: input, shape index: {}]
  %s7 = inlined_call_operand.vmem [shape: f32[16,8], index: 7, kind: input, shape index: {}]
  %s8 = inlined_call_operand.vmem [shape: f32[2,8,256], index: 8, kind: output, shape index: {0}]
  %s9 = inlined_call_operand.vmem [shape: f32[2,8,64], index: 9, kind: output, shape index: {1}]
  %10 = xla_tuple %s8, %s9
  %s11 = sld [smem:[#allocation0]]
  $region73: #{down_forward.1} parent=0
    _
  %s13 = ssub.s32 1, %s11
  %s14 = scalar_select 0, %s13, %s11
  loop: start=0, step=1, limit=4
  $region2: #{down_forward.1} parent=0 // loop_pre_header
    _
  $region3: #{down_forward.1} parent=0 // loop_header
    %s16 = sphi 0, %s20
    %p17 = scmp.ge.s32.totalorder %s16, 4
    %s26 = sphi 0, %s28
    %s29 = sphi 0, %s26
    %s30 = sphi 0, %s29
    %s46 = sphi 0, %s30
    %s50 = sphi 0, %s50
    %s52 = sphi 0, %s50
    %s53 = sphi 0, %s52
    %s67 = sphi 0, %s53
    %s71 = sphi 0, %s71
    %s73 = sphi 0, %s71
    %s74 = sphi 0, %s73
    %s88 = sphi 0, %s74
    %s92 = sphi 0, %s92
    %s94 = sphi 0, %s92
    %s95 = sphi 0, %s94
    %s109 = sphi 0, %s95
    %s113 = sphi 0, %s113
    %s115 = sphi 0, %s113
    %s116 = sphi 0, %s115
    %s130 = sphi 0, %s116
    %s134 = sphi 0, %s134
    %s136 = sphi 0, %s134
    %s137 = sphi 0, %s136
    %s151 = sphi 0, %s137
    %s155 = sphi 0, %s155
    %s157 = sphi 0, %s155
    %s158 = sphi 0, %s157
    %s172 = sphi 0, %s158
    %s176 = sphi 0, %s176
    %s178 = sphi 0, %s176
    %s179 = sphi 0, %s178
    %s193 = sphi 0, %s179
    %s199 = sphi 0, %s201
    %s202 = sphi 0, %s199
    %s203 = sphi 0, %s202
    %s219 = sphi 0, %s203
    %s225 = sphi 0, %s227
    %s228 = sphi 0, %s225
    %s229 = sphi 0, %s228
    %s245 = sphi 0, %s229
  $region4: #{down_forward.1} parent=0 // loop_header_branch
    %19 = sbr.rel (%p17) target = $region8
  $region5: #{down_forward.1} parent=0 // loop_body
    %s21 = ssub.s32 %s16, 1
    %s22 = ssub.s32 %s16, 2
    %s23 = sadd.s32 %s16, 1
    %s24 = ssub.s32 %s16, %s23
    %p25 = scmp.eq.s32.totalorder %s24, 0
    %s27 = sadd.s32 %s26, 1
    %s28 = scalar_select %p25, %s26, %s27
    %p31 = pneg %p25
    %p32 = scmp.eq.s32.totalorder %s16, 1
    %p33 = por %p31, %p32
    %p34 = scmp.ne.s32.totalorder %s26, %s29
    %p35 = scmp.eq.s32.totalorder %s16, 0
    %p36 = por %p34, %p35
    %p37 = scmp.ne.s32.totalorder %s26, %s29
    %p38 = scmp.eq.s32.totalorder %s21, 1
    %p39 = por %p37, %p38
    %p40 = scmp.ne.s32.totalorder %s29, %s30
    %p41 = scmp.eq.s32.totalorder %s21, 0
    %p42 = por %p40, %p41
    %p43 = scmp.ne.s32.totalorder %s29, %s30
    %p44 = scmp.eq.s32.totalorder %s22, 1
    %p45 = por %p43, %p44
    %p47 = scmp.ne.s32.totalorder %s30, %s46
    %p48 = scmp.eq.s32.totalorder %s22, 0
    %p49 = por %p47, %p48
    %s51 = sadd.s32 %s50, 1
    %p54 = scmp.eq.s32.totalorder %s16, 1
    %p55 = scmp.ne.s32.totalorder %s50, %s52
    %p56 = scmp.eq.s32.totalorder %s16, 0
    %p57 = por %p55, %p56
    %p58 = scmp.ne.s32.totalorder %s50, %s52
    %p59 = scmp.eq.s32.totalorder %s21, 1
    %p60 = por %p58, %p59
    %p61 = scmp.ne.s32.totalorder %s52, %s53
    %p62 = scmp.eq.s32.totalorder %s21, 0
    %p63 = por %p61, %p62
    %p64 = scmp.ne.s32.totalorder %s52, %s53
    %p65 = scmp.eq.s32.totalorder %s22, 1
    %p66 = por %p64, %p65
    %p68 = scmp.ne.s32.totalorder %s53, %s67
    %p69 = scmp.eq.s32.totalorder %s22, 0
    %p70 = por %p68, %p69
    %s72 = sadd.s32 %s71, 1
    %p75 = scmp.eq.s32.totalorder %s16, 1
    %p76 = scmp.ne.s32.totalorder %s71, %s73
    %p77 = scmp.eq.s32.totalorder %s16, 0
    %p78 = por %p76, %p77
    %p79 = scmp.ne.s32.totalorder %s71, %s73
    %p80 = scmp.eq.s32.totalorder %s21, 1
    %p81 = por %p79, %p80
    %p82 = scmp.ne.s32.totalorder %s73, %s74
    %p83 = scmp.eq.s32.totalorder %s21, 0
    %p84 = por %p82, %p83
    %p85 = scmp.ne.s32.totalorder %s73, %s74
    %p86 = scmp.eq.s32.totalorder %s22, 1
    %p87 = por %p85, %p86
    %p89 = scmp.ne.s32.totalorder %s74, %s88
    %p90 = scmp.eq.s32.totalorder %s22, 0
    %p91 = por %p89, %p90
    %s93 = sadd.s32 %s92, 1
    %p96 = scmp.eq.s32.totalorder %s16, 1
    %p97 = scmp.ne.s32.totalorder %s92, %s94
    %p98 = scmp.eq.s32.totalorder %s16, 0
    %p99 = por %p97, %p98
    %p100 = scmp.ne.s32.totalorder %s92, %s94
    %p101 = scmp.eq.s32.totalorder %s21, 1
    %p102 = por %p100, %p101
    %p103 = scmp.ne.s32.totalorder %s94, %s95
    %p104 = scmp.eq.s32.totalorder %s21, 0
    %p105 = por %p103, %p104
    %p106 = scmp.ne.s32.totalorder %s94, %s95
    %p107 = scmp.eq.s32.totalorder %s22, 1
    %p108 = por %p106, %p107
    %p110 = scmp.ne.s32.totalorder %s95, %s109
    %p111 = scmp.eq.s32.totalorder %s22, 0
    %p112 = por %p110, %p111
    %s114 = sadd.s32 %s113, 1
    %p117 = scmp.eq.s32.totalorder %s16, 1
    %p118 = scmp.ne.s32.totalorder %s113, %s115
    %p119 = scmp.eq.s32.totalorder %s16, 0
    %p120 = por %p118, %p119
    %p121 = scmp.ne.s32.totalorder %s113, %s115
    %p122 = scmp.eq.s32.totalorder %s21, 1
    %p123 = por %p121, %p122
    %p124 = scmp.ne.s32.totalorder %s115, %s116
    %p125 = scmp.eq.s32.totalorder %s21, 0
    %p126 = por %p124, %p125
    %p127 = scmp.ne.s32.totalorder %s115, %s116
    %p128 = scmp.eq.s32.totalorder %s22, 1
    %p129 = por %p127, %p128
    %p131 = scmp.ne.s32.totalorder %s116, %s130
    %p132 = scmp.eq.s32.totalorder %s22, 0
    %p133 = por %p131, %p132
    %s135 = sadd.s32 %s134, 1
    %p138 = scmp.eq.s32.totalorder %s16, 1
    %p139 = scmp.ne.s32.totalorder %s134, %s136
    %p140 = scmp.eq.s32.totalorder %s16, 0
    %p141 = por %p139, %p140
    %p142 = scmp.ne.s32.totalorder %s134, %s136
    %p143 = scmp.eq.s32.totalorder %s21, 1
    %p144 = por %p142, %p143
    %p145 = scmp.ne.s32.totalorder %s136, %s137
    %p146 = scmp.eq.s32.totalorder %s21, 0
    %p147 = por %p145, %p146
    %p148 = scmp.ne.s32.totalorder %s136, %s137
    %p149 = scmp.eq.s32.totalorder %s22, 1
    %p150 = por %p148, %p149
    %p152 = scmp.ne.s32.totalorder %s137, %s151
    %p153 = scmp.eq.s32.totalorder %s22, 0
    %p154 = por %p152, %p153
    %s156 = sadd.s32 %s155, 1
    %p159 = scmp.eq.s32.totalorder %s16, 1
    %p160 = scmp.ne.s32.totalorder %s155, %s157
    %p161 = scmp.eq.s32.totalorder %s16, 0
    %p162 = por %p160, %p161
    %p163 = scmp.ne.s32.totalorder %s155, %s157
    %p164 = scmp.eq.s32.totalorder %s21, 1
    %p165 = por %p163, %p164
    %p166 = scmp.ne.s32.totalorder %s157, %s158
    %p167 = scmp.eq.s32.totalorder %s21, 0
    %p168 = por %p166, %p167
    %p169 = scmp.ne.s32.totalorder %s157, %s158
    %p170 = scmp.eq.s32.totalorder %s22, 1
    %p171 = por %p169, %p170
    %p173 = scmp.ne.s32.totalorder %s158, %s172
    %p174 = scmp.eq.s32.totalorder %s22, 0
    %p175 = por %p173, %p174
    %s177 = sadd.s32 %s176, 1
    %p180 = scmp.eq.s32.totalorder %s16, 1
    %p181 = scmp.ne.s32.totalorder %s176, %s178
    %p182 = scmp.eq.s32.totalorder %s16, 0
    %p183 = por %p181, %p182
    %p184 = scmp.ne.s32.totalorder %s176, %s178
    %p185 = scmp.eq.s32.totalorder %s21, 1
    %p186 = por %p184, %p185
    %p187 = scmp.ne.s32.totalorder %s178, %s179
    %p188 = scmp.eq.s32.totalorder %s21, 0
    %p189 = por %p187, %p188
    %p190 = scmp.ne.s32.totalorder %s178, %s179
    %p191 = scmp.eq.s32.totalorder %s22, 1
    %p192 = por %p190, %p191
    %p194 = scmp.ne.s32.totalorder %s179, %s193
    %p195 = scmp.eq.s32.totalorder %s22, 0
    %p196 = por %p194, %p195
    %s197 = ssub.s32 %s16, %s23
    %p198 = scmp.eq.s32.totalorder %s197, 0
    %s200 = sadd.s32 %s199, 1
    %s201 = scalar_select %p198, %s199, %s200
    %p204 = pneg %p198
    %p205 = scmp.eq.s32.totalorder %s16, 1
    %p206 = por %p204, %p205
    %p207 = scmp.ne.s32.totalorder %s199, %s202
    %p208 = scmp.eq.s32.totalorder %s16, 0
    %p209 = por %p207, %p208
    %p210 = scmp.ne.s32.totalorder %s199, %s202
    %p211 = scmp.eq.s32.totalorder %s21, 1
    %p212 = por %p210, %p211
    %p213 = scmp.ne.s32.totalorder %s202, %s203
    %p214 = scmp.eq.s32.totalorder %s21, 0
    %p215 = por %p213, %p214
    %p216 = scmp.ne.s32.totalorder %s202, %s203
    %p217 = scmp.eq.s32.totalorder %s22, 1
    %p218 = por %p216, %p217
    %p220 = scmp.ne.s32.totalorder %s203, %s219
    %p221 = scmp.eq.s32.totalorder %s22, 0
    %p222 = por %p220, %p221
    %s223 = ssub.s32 %s16, %s23
    %p224 = scmp.eq.s32.totalorder %s223, 0
    %s226 = sadd.s32 %s225, 1
    %s227 = scalar_select %p224, %s225, %s226
    %p230 = pneg %p224
    %p231 = scmp.eq.s32.totalorder %s16, 1
    %p232 = por %p230, %p231
    %p233 = scmp.ne.s32.totalorder %s225, %s228
    %p234 = scmp.eq.s32.totalorder %s16, 0
    %p235 = por %p233, %p234
    %p236 = scmp.ne.s32.totalorder %s225, %s228
    %p237 = scmp.eq.s32.totalorder %s21, 1
    %p238 = por %p236, %p237
    %p239 = scmp.ne.s32.totalorder %s228, %s229
    %p240 = scmp.eq.s32.totalorder %s21, 0
    %p241 = por %p239, %p240
    %p242 = scmp.ne.s32.totalorder %s228, %s229
    %p243 = scmp.eq.s32.totalorder %s22, 1
    %p244 = por %p242, %p243
    %p246 = scmp.ne.s32.totalorder %s229, %s245
    %p247 = scmp.eq.s32.totalorder %s22, 0
    %p248 = por %p246, %p247
    %p249 = scmp.le.s32.totalorder 1, %s16
    %p250 = scmp.lt.s32.totalorder %s16, 3
    %p251 = pnand %p249, %p250
    %p252 = pneg %p251
    // Predicated region
    $region9: #{down_forward.1} parent=5 // pred_check
      _
    $region10: #{down_forward.1} parent=5 // pred_check_branch
      %254 = sbr.rel (%p251) target = $region12
    $region11: #{down_forward.1} parent=5 // pred_region
      %s255 = ssub.s32 %s16, 1
      // Predicated region
      $region13: #{down_forward.1} parent=11 // pred_check
        %p256 = pneg %p63
      $region14: #{down_forward.1} parent=11 // pred_check_branch
        %258 = sbr.rel (%p256) target = $region16
      $region15: #{down_forward.1} parent=11 // pred_region
        _
      $region16: #{down_forward.1} parent=11 // pred_fallthru
        _
      // Predicated region
      $region17: #{down_forward.1} parent=11 // pred_check
        %p259 = pneg %p84
      $region18: #{down_forward.1} parent=11 // pred_check_branch
        %261 = sbr.rel (%p259) target = $region20
      $region19: #{down_forward.1} parent=11 // pred_region
        _
      $region20: #{down_forward.1} parent=11 // pred_fallthru
        _
      // Predicated region
      $region21: #{down_forward.1} parent=11 // pred_check
        %p262 = pneg %p105
      $region22: #{down_forward.1} parent=11 // pred_check_branch
        %264 = sbr.rel (%p262) target = $region24
      $region23: #{down_forward.1} parent=11 // pred_region
        _
      $region24: #{down_forward.1} parent=11 // pred_fallthru
        _
      // Predicated region
      $region25: #{down_forward.1} parent=11 // pred_check
        %p265 = pneg %p126
      $region26: #{down_forward.1} parent=11 // pred_check_branch
        %267 = sbr.rel (%p265) target = $region28
      $region27: #{down_forward.1} parent=11 // pred_region
        _
      $region28: #{down_forward.1} parent=11 // pred_fallthru
        _
      // Predicated region
      $region29: #{down_forward.1} parent=11 // pred_check
        %p268 = pneg %p147
      $region30: #{down_forward.1} parent=11 // pred_check_branch
        %270 = sbr.rel (%p268) target = $region32
      $region31: #{down_forward.1} parent=11 // pred_region
        _
      $region32: #{down_forward.1} parent=11 // pred_fallthru
        _
      // Predicated region
      $region33: #{down_forward.1} parent=11 // pred_check
        %p271 = pneg %p168
      $region34: #{down_forward.1} parent=11 // pred_check_branch
        %273 = sbr.rel (%p271) target = $region36
      $region35: #{down_forward.1} parent=11 // pred_region
        _
      $region36: #{down_forward.1} parent=11 // pred_fallthru
        _
      // Predicated region
      $region37: #{down_forward.1} parent=11 // pred_check
        %p274 = pneg %p189
      $region38: #{down_forward.1} parent=11 // pred_check_branch
        %276 = sbr.rel (%p274) target = $region40
      $region39: #{down_forward.1} parent=11 // pred_region
        _
      $region40: #{down_forward.1} parent=11 // pred_fallthru
        _
    $region12: #{down_forward.1} parent=5 // pred_fallthru
      _
    %p277 = scmp.lt.s32.totalorder %s16, 2
    // Predicated region
    $region41: #{down_forward.1} parent=5 // pred_check
      %p278 = pneg %p277
    $region42: #{down_forward.1} parent=5 // pred_check_branch
      %280 = sbr.rel (%p278) target = $region44
    $region43: #{down_forward.1} parent=5 // pred_region
      // Predicated region
      $region45: #{down_forward.1} parent=43 // pred_check
        %p281 = pneg %p36
      $region46: #{down_forward.1} parent=43 // pred_check_branch
        %283 = sbr.rel (%p281) target = $region48
      $region47: #{down_forward.1} parent=43 // pred_region
        %p284 = scmp.lt.s32.totalorder %s16, 1
        %s285 = scalar_select %p284, %s16, 1
        %s286 = smul.addr %s285, 3
        %s287 = smul.addr %s286, 4
        %s288 = scalar_lea.vmem %s0, %s287
      $region48: #{down_forward.1} parent=43 // pred_fallthru
        _
    $region44: #{down_forward.1} parent=5 // pred_fallthru
      _
    %p289 = scmp.le.s32.totalorder 1, %s16
    %p290 = scmp.lt.s32.totalorder %s16, 3
    %p291 = pnand %p289, %p290
    %p292 = pneg %p291
    // Predicated region
    $region49: #{down_forward.1} parent=5 // pred_check
      _
    $region50: #{down_forward.1} parent=5 // pred_check_branch
      %294 = sbr.rel (%p291) target = $region52
    $region51: #{down_forward.1} parent=5 // pred_region
      %s295 = ssub.s32 %s16, 1
      %p296 = scmp.lt.s32.totalorder %s21, 1
      %s297 = scalar_select %p296, %s21, 1
      %s298 = smul.addr %s297, 3
      %s299 = smul.addr %s298, 4
      %s300 = scalar_lea.vmem %s0, %s299
      %p301 = pneg %p42
      %p302 = pneg %p39
      %p303 = pneg %p63
      %p304 = pneg %p60
      %p305 = pneg %p84
      %p306 = pneg %p81
      %p307 = pneg %p105
      %p308 = pneg %p102
      %p309 = pneg %p126
      %p310 = pneg %p123
      %p311 = pneg %p147
      %p312 = pneg %p144
      %p313 = pneg %p168
      %p314 = pneg %p165
      %p315 = pneg %p189
      %p316 = pneg %p186
      %p317 = pneg %p215
      %p318 = pneg %p212
      %p319 = scmp.lt.s32.totalorder %s21, 1
      %s320 = scalar_select %p319, %s21, 1
      %s321 = smul.addr %s320, 2
      %s322 = smul.addr %s321, 8
      %s323 = scalar_lea.vmem %s8, %s322
      %p324 = pneg %p241
      %p325 = pneg %p238
      %p326 = scmp.lt.s32.totalorder %s21, 1
      %s327 = scalar_select %p326, %s21, 1
      %s328 = smul.addr %s327, 8
      %s329 = scalar_lea.vmem %s9, %s328
      %p330 = scmp.lt.s32.totalorder %s21, 1
      %s331 = scalar_select %p330, %s21, 1
      %s332 = smul.addr %s331, 3
      %s333 = smul.addr %s332, 4
      %s334 = scalar_lea.vmem %s0, %s333
      %p335 = scmp.lt.s32.totalorder %s21, 1
      %s336 = scalar_select %p335, %s21, 1
      %s337 = smul.addr %s336, 2
      %s338 = smul.addr %s337, 8
      %s339 = scalar_lea.vmem %s8, %s338
      %p340 = scmp.lt.s32.totalorder %s21, 1
      %s341 = scalar_select %p340, %s21, 1
      %s342 = smul.addr %s341, 8
      %s343 = scalar_lea.vmem %s9, %s342
      %v344 = vld [vmem:[%s1] sm:$0xff]
      %v345 = vld [vmem:[%s334] sm:$0xff]
      %v346 = vld [vmem:[%s334 + $0x8] sm:$0xf]
      %s347 = scalar_lea.vmem %s1, 8
      %v348 = vld [vmem:[%s347] sm:$0xff]
      %v351 = vcombine.high %v345, %v345
      %352 = vrot.lane.b32.xlu0 %v345, 127
      %v353 = vpop.permute.xlu0 %352
      %354 = vrot.lane.b32.xlu0 %v351, 127
      %v355 = vpop.permute.xlu0 %354
      %356 = vrot.lane.b32.xlu0 %v346, 127
      %v357 = vpop.permute.xlu0 %356
      %vm358 = vcmask 1039360
      %v359 = vsel %vm358, %v353, %v355
      %v360 = vsel %vm358, %v355, %v357
      %vm361 = vcmask 31744
      %v363 = vsel %vm361, %v348, 0
      %vm365 = vcmask 1043456
      %v366 = vsel %vm365, %v359, 0
      %v368 = vsel %vm365, %v360, 0
      %v370 = vsel %vm365, %v357, 0
      %372 = vmatprep.subr.mxu0 %v368
      %373 = vmatpush1.msra.mxu0 %v366
      %374 = vmatprep.subr.mxu0 0.0
      %375 = vmatpush1.msra.mxu0 0.0
      %376 = vmatprep.subr.mxu0 0.0
      %377 = vmatpush1.msra.mxu0 0.0
      %378 = vmatprep.subr.mxu0 0.0
      %379 = vmatpush1.msra.mxu0 0.0
      %380 = vmatprep.subr.mxu0 0.0
      %381 = vmatpush1.msra.mxu0 0.0
      %382 = vmatprep.subr.mxu0 0.0
      %383 = vmatpush1.msra.mxu0 0.0
      %384 = vmatprep.subr.mxu0 0.0
      %385 = vmatpush1.msra.mxu0 0.0
      %386 = vmatprep.subr.mxu0 0.0
      %387 = vmatpush1.msra.mxu0 0.0
      %388 = vmatprep.subr.mxu0 0.0
      %389 = vmatpush1.msra.mxu0 0.0
      %390 = vmatprep.subr.mxu0 0.0
      %391 = vmatpush1.msra.mxu0 0.0
      %392 = vmatprep.subr.mxu0 0.0
      %393 = vmatpush1.msra.mxu0 0.0
      %394 = vmatprep.subr.mxu0 0.0
      %395 = vmatpush1.msra.mxu0 0.0
      %396 = vmatprep.subr.mxu0 0.0
      %397 = vmatpush1.msra.mxu0 0.0
      %398 = vmatprep.subr.mxu0 0.0
      %399 = vmatpush1.msra.mxu0 0.0
      %400 = vmatprep.subr.mxu0 0.0
      %401 = vmatpush1.msra.mxu0 0.0
      %402 = vmatprep.subr.mxu0 0.0
      %403 = vmatpush1.msra.mxu0 0.0
      %404 = vmatprep.subr.mxu0 0.0
      %405 = vmatpush1.msra.mxu0 0.0
      %406 = vmatprep.subr.mxu0 0.0
      %407 = vmatpush1.msra.mxu0 0.0
      %408 = vmatprep.subr.mxu0 0.0
      %409 = vmatpush1.msra.mxu0 0.0
      %410 = vmatprep.subr.mxu0 0.0
      %411 = vmatpush1.msra.mxu0 0.0
      %412 = vmatprep.subr.mxu0 0.0
      %413 = vmatpush1.msra.mxu0 0.0
      %414 = vmatprep.subr.mxu0 0.0
      %415 = vmatpush1.msra.mxu0 0.0
      %416 = vmatprep.subr.mxu0 0.0
      %417 = vmatpush1.msra.mxu0 0.0
      %418 = vmatprep.subr.mxu0 0.0
      %419 = vmatpush1.msra.mxu0 0.0
      %420 = vmatprep.subr.mxu0 0.0
      %421 = vmatpush1.msra.mxu0 0.0
      %422 = vmatprep.subr.mxu0 0.0
      %423 = vmatpush1.msra.mxu0 0.0
      %424 = vmatprep.subr.mxu0 0.0
      %425 = vmatpush1.msra.mxu0 0.0
      %426 = vmatprep.subr.mxu0 0.0
      %427 = vmatpush1.msra.mxu0 0.0
      %428 = vmatprep.subr.mxu0 0.0
      %429 = vmatpush1.msra.mxu0 0.0
      %430 = vmatprep.subr.mxu0 0.0
      %431 = vmatpush1.msra.mxu0 0.0
      %432 = vmatprep.subr.mxu0 0.0
      %433 = vmatpush1.msra.mxu0 0.0
      %434 = vmatprep.subr.mxu0 0.0
      %435 = vmatpush1.msra.mxu0 0.0
      %436 = vmatprep.mubr.f32.mxu0 0.0
      %437 = vmatmul.mubr.f32.gmra.mrb[0].mxu0 %v363
      %v438 = vpop.f32.mrb[0].mxu0
      %v439 = vadd.f32 0.0, %v438
      %v440 = vpop.f32.mrb[0].mxu0
      %v441 = vadd.f32 0.0, %v440
      %442 = vdwg.mxu0
      %443 = vmatprep.subr.mxu0 0.0
      %444 = vmatpush1.msra.mxu0 %v370
      %445 = vmatprep.subr.mxu0 0.0
      %446 = vmatpush1.msra.mxu0 0.0
      %447 = vmatprep.subr.mxu0 0.0
      %448 = vmatpush1.msra.mxu0 0.0
      %449 = vmatprep.subr.mxu0 0.0
      %450 = vmatpush1.msra.mxu0 0.0
      %451 = vmatprep.subr.mxu0 0.0
      %452 = vmatpush1.msra.mxu0 0.0
      %453 = vmatprep.subr.mxu0 0.0
      %454 = vmatpush1.msra.mxu0 0.0
      %455 = vmatprep.subr.mxu0 0.0
      %456 = vmatpush1.msra.mxu0 0.0
      %457 = vmatprep.subr.mxu0 0.0
      %458 = vmatpush1.msra.mxu0 0.0
      %459 = vmatprep.subr.mxu0 0.0
      %460 = vmatpush1.msra.mxu0 0.0
      %461 = vmatprep.subr.mxu0 0.0
      %462 = vmatpush1.msra.mxu0 0.0
      %463 = vmatprep.subr.mxu0 0.0
      %464 = vmatpush1.msra.mxu0 0.0
      %465 = vmatprep.subr.mxu0 0.0
      %466 = vmatpush1.msra.mxu0 0.0
      %467 = vmatprep.subr.mxu0 0.0
      %468 = vmatpush1.msra.mxu0 0.0
      %469 = vmatprep.subr.mxu0 0.0
      %470 = vmatpush1.msra.mxu0 0.0
      %471 = vmatprep.subr.mxu0 0.0
      %472 = vmatpush1.msra.mxu0 0.0
      %473 = vmatprep.subr.mxu0 0.0
      %474 = vmatpush1.msra.mxu0 0.0
      %475 = vmatprep.subr.mxu0 0.0
      %476 = vmatpush1.msra.mxu0 0.0
      %477 = vmatprep.subr.mxu0 0.0
      %478 = vmatpush1.msra.mxu0 0.0
      %479 = vmatprep.subr.mxu0 0.0
      %480 = vmatpush1.msra.mxu0 0.0
      %481 = vmatprep.subr.mxu0 0.0
      %482 = vmatpush1.msra.mxu0 0.0
      %483 = vmatprep.subr.mxu0 0.0
      %484 = vmatpush1.msra.mxu0 0.0
      %485 = vmatprep.subr.mxu0 0.0
      %486 = vmatpush1.msra.mxu0 0.0
      %487 = vmatprep.subr.mxu0 0.0
      %488 = vmatpush1.msra.mxu0 0.0
      %489 = vmatprep.subr.mxu0 0.0
      %490 = vmatpush1.msra.mxu0 0.0
      %491 = vmatprep.subr.mxu0 0.0
      %492 = vmatpush1.msra.mxu0 0.0
      %493 = vmatprep.subr.mxu0 0.0
      %494 = vmatpush1.msra.mxu0 0.0
      %495 = vmatprep.subr.mxu0 0.0
      %496 = vmatpush1.msra.mxu0 0.0
      %497 = vmatprep.subr.mxu0 0.0
      %498 = vmatpush1.msra.mxu0 0.0
      %499 = vmatprep.subr.mxu0 0.0
      %500 = vmatpush1.msra.mxu0 0.0
      %501 = vmatprep.subr.mxu0 0.0
      %502 = vmatpush1.msra.mxu0 0.0
      %503 = vmatprep.subr.mxu0 0.0
      %504 = vmatpush1.msra.mxu0 0.0
      %505 = vmatprep.subr.mxu0 0.0
      %506 = vmatpush1.msra.mxu0 0.0
      %507 = vmatprep.mubr.f32.mxu0 0.0
      %508 = vmatmul.mubr.f32.gmra.mrb[0].mxu0 %v363
      %v509 = vpop.f32.mrb[0].mxu0
      %v510 = vadd.f32 0.0, %v509
      %v511 = vpop.f32.mrb[0].mxu0
      %512 = vdwg.mxu0
      %v514 = vsel %vm361, %v344, 0
      %v516 = vsel %vm365, %v345, 0
      %v518 = vsel %vm365, %v351, 0
      %v520 = vsel %vm365, %v346, 0
      %522 = vmatprep.subr.mxu0 %v518
      %523 = vmatpush1.msra.mxu0 %v516
      %524 = vmatprep.subr.mxu0 0.0
      %525 = vmatpush1.msra.mxu0 0.0
      %526 = vmatprep.subr.mxu0 0.0
      %527 = vmatpush1.msra.mxu0 0.0
      %528 = vmatprep.subr.mxu0 0.0
      %529 = vmatpush1.msra.mxu0 0.0
      %530 = vmatprep.subr.mxu0 0.0
      %531 = vmatpush1.msra.mxu0 0.0
      %532 = vmatprep.subr.mxu0 0.0
      %533 = vmatpush1.msra.mxu0 0.0
      %534 = vmatprep.subr.mxu0 0.0
      %535 = vmatpush1.msra.mxu0 0.0
      %536 = vmatprep.subr.mxu0 0.0
      %537 = vmatpush1.msra.mxu0 0.0
      %538 = vmatprep.subr.mxu0 0.0
      %539 = vmatpush1.msra.mxu0 0.0
      %540 = vmatprep.subr.mxu0 0.0
      %541 = vmatpush1.msra.mxu0 0.0
      %542 = vmatprep.subr.mxu0 0.0
      %543 = vmatpush1.msra.mxu0 0.0
      %544 = vmatprep.subr.mxu0 0.0
      %545 = vmatpush1.msra.mxu0 0.0
      %546 = vmatprep.subr.mxu0 0.0
      %547 = vmatpush1.msra.mxu0 0.0
      %548 = vmatprep.subr.mxu0 0.0
      %549 = vmatpush1.msra.mxu0 0.0
      %550 = vmatprep.subr.mxu0 0.0
      %551 = vmatpush1.msra.mxu0 0.0
      %552 = vmatprep.subr.mxu0 0.0
      %553 = vmatpush1.msra.mxu0 0.0
      %554 = vmatprep.subr.mxu0 0.0
      %555 = vmatpush1.msra.mxu0 0.0
      %556 = vmatprep.subr.mxu0 0.0
      %557 = vmatpush1.msra.mxu0 0.0
      %558 = vmatprep.subr.mxu0 0.0
      %559 = vmatpush1.msra.mxu0 0.0
      %560 = vmatprep.subr.mxu0 0.0
      %561 = vmatpush1.msra.mxu0 0.0
      %562 = vmatprep.subr.mxu0 0.0
      %563 = vmatpush1.msra.mxu0 0.0
      %564 = vmatprep.subr.mxu0 0.0
      %565 = vmatpush1.msra.mxu0 0.0
      %566 = vmatprep.subr.mxu0 0.0
      %567 = vmatpush1.msra.mxu0 0.0
      %568 = vmatprep.subr.mxu0 0.0
      %569 = vmatpush1.msra.mxu0 0.0
      %570 = vmatprep.subr.mxu0 0.0
      %571 = vmatpush1.msra.mxu0 0.0
      %572 = vmatprep.subr.mxu0 0.0
      %573 = vmatpush1.msra.mxu0 0.0
      %574 = vmatprep.subr.mxu0 0.0
      %575 = vmatpush1.msra.mxu0 0.0
      %576 = vmatprep.subr.mxu0 0.0
      %577 = vmatpush1.msra.mxu0 0.0
      %578 = vmatprep.subr.mxu0 0.0
      %579 = vmatpush1.msra.mxu0 0.0
      %580 = vmatprep.subr.mxu0 0.0
      %581 = vmatpush1.msra.mxu0 0.0
      %582 = vmatprep.subr.mxu0 0.0
      %583 = vmatpush1.msra.mxu0 0.0
      %584 = vmatprep.subr.mxu0 0.0
      %585 = vmatpush1.msra.mxu0 0.0
      %586 = vmatprep.mubr.f32.mxu0 0.0
      %587 = vmatmul.mubr.f32.gmra.mrb[0].mxu0 %v514
      %v588 = vpop.f32.mrb[0].mxu0
      %v589 = vadd.f32 %v439, %v588
      %v590 = vpop.f32.mrb[0].mxu0
      %v591 = vadd.f32 %v441, %v590
      %592 = vdwg.mxu0
      %593 = vmatprep.subr.mxu0 0.0
      %594 = vmatpush1.msra.mxu0 %v520
      %595 = vmatprep.subr.mxu0 0.0
      %596 = vmatpush1.msra.mxu0 0.0
      %597 = vmatprep.subr.mxu0 0.0
      %598 = vmatpush1.msra.mxu0 0.0
      %599 = vmatprep.subr.mxu0 0.0
      %600 = vmatpush1.msra.mxu0 0.0
      %601 = vmatprep.subr.mxu0 0.0
      %602 = vmatpush1.msra.mxu0 0.0
      %603 = vmatprep.subr.mxu0 0.0
      %604 = vmatpush1.msra.mxu0 0.0
      %605 = vmatprep.subr.mxu0 0.0
      %606 = vmatpush1.msra.mxu0 0.0
      %607 = vmatprep.subr.mxu0 0.0
      %608 = vmatpush1.msra.mxu0 0.0
      %609 = vmatprep.subr.mxu0 0.0
      %610 = vmatpush1.msra.mxu0 0.0
      %611 = vmatprep.subr.mxu0 0.0
      %612 = vmatpush1.msra.mxu0 0.0
      %613 = vmatprep.subr.mxu0 0.0
      %614 = vmatpush1.msra.mxu0 0.0
      %615 = vmatprep.subr.mxu0 0.0
      %616 = vmatpush1.msra.mxu0 0.0
      %617 = vmatprep.subr.mxu0 0.0
      %618 = vmatpush1.msra.mxu0 0.0
      %619 = vmatprep.subr.mxu0 0.0
      %620 = vmatpush1.msra.mxu0 0.0
      %621 = vmatprep.subr.mxu0 0.0
      %622 = vmatpush1.msra.mxu0 0.0
      %623 = vmatprep.subr.mxu0 0.0
      %624 = vmatpush1.msra.mxu0 0.0
      %625 = vmatprep.subr.mxu0 0.0
      %626 = vmatpush1.msra.mxu0 0.0
      %627 = vmatprep.subr.mxu0 0.0
      %628 = vmatpush1.msra.mxu0 0.0
      %629 = vmatprep.subr.mxu0 0.0
      %630 = vmatpush1.msra.mxu0 0.0
      %631 = vmatprep.subr.mxu0 0.0
      %632 = vmatpush1.msra.mxu0 0.0
      %633 = vmatprep.subr.mxu0 0.0
      %634 = vmatpush1.msra.mxu0 0.0
      %635 = vmatprep.subr.mxu0 0.0
      %636 = vmatpush1.msra.mxu0 0.0
      %637 = vmatprep.subr.mxu0 0.0
      %638 = vmatpush1.msra.mxu0 0.0
      %639 = vmatprep.subr.mxu0 0.0
      %640 = vmatpush1.msra.mxu0 0.0
      %641 = vmatprep.subr.mxu0 0.0
      %642 = vmatpush1.msra.mxu0 0.0
      %643 = vmatprep.subr.mxu0 0.0
      %644 = vmatpush1.msra.mxu0 0.0
      %645 = vmatprep.subr.mxu0 0.0
      %646 = vmatpush1.msra.mxu0 0.0
      %647 = vmatprep.subr.mxu0 0.0
      %648 = vmatpush1.msra.mxu0 0.0
      %649 = vmatprep.subr.mxu0 0.0
      %650 = vmatpush1.msra.mxu0 0.0
      %651 = vmatprep.subr.mxu0 0.0
      %652 = vmatpush1.msra.mxu0 0.0
      %653 = vmatprep.subr.mxu0 0.0
      %654 = vmatpush1.msra.mxu0 0.0
      %655 = vmatprep.subr.mxu0 0.0
      %656 = vmatpush1.msra.mxu0 0.0
      %657 = vmatprep.mubr.f32.mxu0 0.0
      %658 = vmatmul.mubr.f32.gmra.mrb[0].mxu0 %v514
      %v659 = vpop.f32.mrb[0].mxu0
      %v660 = vadd.f32 %v510, %v659
      %v661 = vpop.f32.mrb[0].mxu0
      %662 = vdwg.mxu0
      %s663 = scalar_lea.vmem %s1, 16
      %v664 = vld [vmem:[%s663] sm:$0xff]
      %v665 = vld [vmem:[%s334] sm:$0xff]
      %v666 = vld [vmem:[%s334 + $0x8] sm:$0xf]
      %v669 = vcombine.high %v665, %v665
      %670 = vrot.lane.b32.xlu0 %v665, 126
      %v671 = vpop.permute.xlu0 %670
      %672 = vrot.lane.b32.xlu0 %v669, 126
      %v673 = vpop.permute.xlu0 %672
      %674 = vrot.lane.b32.xlu0 %v666, 126
      %v675 = vpop.permute.xlu0 %674
      %vm676 = vcmask 1031168
      %v677 = vsel %vm676, %v671, %v673
      %v678 = vsel %vm676, %v673, %v675
      %v680 = vsel %vm361, %v664, 0
      %v682 = vsel %vm365, %v677, 0
      %v684 = vsel %vm365, %v678, 0
      %v686 = vsel %vm365, %v675, 0
      %688 = vmatprep.subr.mxu0 %v684
      %689 = vmatpush1.msra.mxu0 %v682
      %690 = vmatprep.subr.mxu0 0.0
      %691 = vmatpush1.msra.mxu0 0.0
      %692 = vmatprep.subr.mxu0 0.0
      %693 = vmatpush1.msra.mxu0 0.0
      %694 = vmatprep.subr.mxu0 0.0
      %695 = vmatpush1.msra.mxu0 0.0
      %696 = vmatprep.subr.mxu0 0.0
      %697 = vmatpush1.msra.mxu0 0.0
      %698 = vmatprep.subr.mxu0 0.0
      %699 = vmatpush1.msra.mxu0 0.0
      %700 = vmatprep.subr.mxu0 0.0
      %701 = vmatpush1.msra.mxu0 0.0
      %702 = vmatprep.subr.mxu0 0.0
      %703 = vmatpush1.msra.mxu0 0.0
      %704 = vmatprep.subr.mxu0 0.0
      %705 = vmatpush1.msra.mxu0 0.0
      %706 = vmatprep.subr.mxu0 0.0
      %707 = vmatpush1.msra.mxu0 0.0
      %708 = vmatprep.subr.mxu0 0.0
      %709 = vmatpush1.msra.mxu0 0.0
      %710 = vmatprep.subr.mxu0 0.0
      %711 = vmatpush1.msra.mxu0 0.0
      %712 = vmatprep.subr.mxu0 0.0
      %713 = vmatpush1.msra.mxu0 0.0
      %714 = vmatprep.subr.mxu0 0.0
      %715 = vmatpush1.msra.mxu0 0.0
      %716 = vmatprep.subr.mxu0 0.0
      %717 = vmatpush1.msra.mxu0 0.0
      %718 = vmatprep.subr.mxu0 0.0
      %719 = vmatpush1.msra.mxu0 0.0
      %720 = vmatprep.subr.mxu0 0.0
      %721 = vmatpush1.msra.mxu0 0.0
      %722 = vmatprep.subr.mxu0 0.0
      %723 = vmatpush1.msra.mxu0 0.0
      %724 = vmatprep.subr.mxu0 0.0
      %725 = vmatpush1.msra.mxu0 0.0
      %726 = vmatprep.subr.mxu0 0.0
      %727 = vmatpush1.msra.mxu0 0.0
      %728 = vmatprep.subr.mxu0 0.0
      %729 = vmatpush1.msra.mxu0 0.0
      %730 = vmatprep.subr.mxu0 0.0
      %731 = vmatpush1.msra.mxu0 0.0
      %732 = vmatprep.subr.mxu0 0.0
      %733 = vmatpush1.msra.mxu0 0.0
      %734 = vmatprep.subr.mxu0 0.0
      %735 = vmatpush1.msra.mxu0 0.0
      %736 = vmatprep.subr.mxu0 0.0
      %737 = vmatpush1.msra.mxu0 0.0
      %738 = vmatprep.subr.mxu0 0.0
      %739 = vmatpush1.msra.mxu0 0.0
      %740 = vmatprep.subr.mxu0 0.0
      %741 = vmatpush1.msra.mxu0 0.0
      %742 = vmatprep.subr.mxu0 0.0
      %743 = vmatpush1.msra.mxu0 0.0
      %744 = vmatprep.subr.mxu0 0.0
      %745 = vmatpush1.msra.mxu0 0.0
      %746 = vmatprep.subr.mxu0 0.0
      %747 = vmatpush1.msra.mxu0 0.0
      %748 = vmatprep.subr.mxu0 0.0
      %749 = vmatpush1.msra.mxu0 0.0
      %750 = vmatprep.subr.mxu0 0.0
      %751 = vmatpush1.msra.mxu0 0.0
      %752 = vmatprep.mubr.f32.mxu0 0.0
      %753 = vmatmul.mubr.f32.gmra.mrb[0].mxu0 %v680
      %v754 = vpop.f32.mrb[0].mxu0
      %v755 = vadd.f32 0.0, %v754
      %v756 = vpop.f32.mrb[0].mxu0
      %v757 = vadd.f32 0.0, %v756
      %758 = vdwg.mxu0
      %759 = vmatprep.subr.mxu0 0.0
      %760 = vmatpush1.msra.mxu0 %v686
      %761 = vmatprep.subr.mxu0 0.0
      %762 = vmatpush1.msra.mxu0 0.0
      %763 = vmatprep.subr.mxu0 0.0
      %764 = vmatpush1.msra.mxu0 0.0
      %765 = vmatprep.subr.mxu0 0.0
      %766 = vmatpush1.msra.mxu0 0.0
      %767 = vmatprep.subr.mxu0 0.0
      %768 = vmatpush1.msra.mxu0 0.0
      %769 = vmatprep.subr.mxu0 0.0
      %770 = vmatpush1.msra.mxu0 0.0
      %771 = vmatprep.subr.mxu0 0.0
      %772 = vmatpush1.msra.mxu0 0.0
      %773 = vmatprep.subr.mxu0 0.0
      %774 = vmatpush1.msra.mxu0 0.0
      %775 = vmatprep.subr.mxu0 0.0
      %776 = vmatpush1.msra.mxu0 0.0
      %777 = vmatprep.subr.mxu0 0.0
      %778 = vmatpush1.msra.mxu0 0.0
      %779 = vmatprep.subr.mxu0 0.0
      %780 = vmatpush1.msra.mxu0 0.0
      %781 = vmatprep.subr.mxu0 0.0
      %782 = vmatpush1.msra.mxu0 0.0
      %783 = vmatprep.subr.mxu0 0.0
      %784 = vmatpush1.msra.mxu0 0.0
      %785 = vmatprep.subr.mxu0 0.0
      %786 = vmatpush1.msra.mxu0 0.0
      %787 = vmatprep.subr.mxu0 0.0
      %788 = vmatpush1.msra.mxu0 0.0
      %789 = vmatprep.subr.mxu0 0.0
      %790 = vmatpush1.msra.mxu0 0.0
      %791 = vmatprep.subr.mxu0 0.0
      %792 = vmatpush1.msra.mxu0 0.0
      %793 = vmatprep.subr.mxu0 0.0
      %794 = vmatpush1.msra.mxu0 0.0
      %795 = vmatprep.subr.mxu0 0.0
      %796 = vmatpush1.msra.mxu0 0.0
      %797 = vmatprep.subr.mxu0 0.0
      %798 = vmatpush1.msra.mxu0 0.0
      %799 = vmatprep.subr.mxu0 0.0
      %800 = vmatpush1.msra.mxu0 0.0
      %801 = vmatprep.subr.mxu0 0.0
      %802 = vmatpush1.msra.mxu0 0.0
      %803 = vmatprep.subr.mxu0 0.0
      %804 = vmatpush1.msra.mxu0 0.0
      %805 = vmatprep.subr.mxu0 0.0
      %806 = vmatpush1.msra.mxu0 0.0
      %807 = vmatprep.subr.mxu0 0.0
      %808 = vmatpush1.msra.mxu0 0.0
      %809 = vmatprep.subr.mxu0 0.0
      %810 = vmatpush1.msra.mxu0 0.0
      %811 = vmatprep.subr.mxu0 0.0
      %812 = vmatpush1.msra.mxu0 0.0
      %813 = vmatprep.subr.mxu0 0.0
      %814 = vmatpush1.msra.mxu0 0.0
      %815 = vmatprep.subr.mxu0 0.0
      %816 = vmatpush1.msra.mxu0 0.0
      %817 = vmatprep.subr.mxu0 0.0
      %818 = vmatpush1.msra.mxu0 0.0
      %819 = vmatprep.subr.mxu0 0.0
      %820 = vmatpush1.msra.mxu0 0.0
      %821 = vmatprep.subr.mxu0 0.0
      %822 = vmatpush1.msra.mxu0 0.0
      %823 = vmatprep.mubr.f32.mxu0 0.0
      %824 = vmatmul.mubr.f32.gmra.mrb[0].mxu0 %v680
      %v825 = vpop.f32.mrb[0].mxu0
      %v826 = vadd.f32 0.0, %v825
      %v827 = vpop.f32.mrb[0].mxu0
      %828 = vdwg.mxu0
      %v829 = vadd.f32 %v589, %v755
      %v830 = vadd.f32 %v591, %v757
      %v831 = vadd.f32 %v660, %v826
      %s832 = scalar_lea.vmem %s1, 24
      %v833 = vld [vmem:[%s832] sm:$0xff]
      %v834 = vld [vmem:[%s334] sm:$0xff]
      %v835 = vld [vmem:[%s334 + $0x8] sm:$0xf]
      %v838 = vcombine.high %v834, %v834
      %839 = vrot.lane.b32.xlu0 %v834, 110
      %v840 = vpop.permute.xlu0 %839
      %841 = vrot.lane.b32.xlu0 %v838, 110
      %v842 = vpop.permute.xlu0 %841
      %843 = vrot.lane.b32.xlu0 %v835, 110
      %v844 = vpop.permute.xlu0 %843
      %vm845 = vcmask 900096
      %v846 = vsel %vm845, %v840, %v842
      %v847 = vsel %vm845, %v842, %v844
      %v849 = vsel %vm361, %v833, 0
      %v851 = vsel %vm365, %v846, 0
      %v853 = vsel %vm365, %v847, 0
      %v855 = vsel %vm365, %v844, 0
      %857 = vmatprep.subr.mxu0 %v853
      %858 = vmatpush1.msra.mxu0 %v851
      %859 = vmatprep.subr.mxu0 0.0
      %860 = vmatpush1.msra.mxu0 0.0
      %861 = vmatprep.subr.mxu0 0.0
      %862 = vmatpush1.msra.mxu0 0.0
      %863 = vmatprep.subr.mxu0 0.0
      %864 = vmatpush1.msra.mxu0 0.0
      %865 = vmatprep.subr.mxu0 0.0
      %866 = vmatpush1.msra.mxu0 0.0
      %867 = vmatprep.subr.mxu0 0.0
      %868 = vmatpush1.msra.mxu0 0.0
      %869 = vmatprep.subr.mxu0 0.0
      %870 = vmatpush1.msra.mxu0 0.0
      %871 = vmatprep.subr.mxu0 0.0
      %872 = vmatpush1.msra.mxu0 0.0
      %873 = vmatprep.subr.mxu0 0.0
      %874 = vmatpush1.msra.mxu0 0.0
      %875 = vmatprep.subr.mxu0 0.0
      %876 = vmatpush1.msra.mxu0 0.0
      %877 = vmatprep.subr.mxu0 0.0
      %878 = vmatpush1.msra.mxu0 0.0
      %879 = vmatprep.subr.mxu0 0.0
      %880 = vmatpush1.msra.mxu0 0.0
      %881 = vmatprep.subr.mxu0 0.0
      %882 = vmatpush1.msra.mxu0 0.0
      %883 = vmatprep.subr.mxu0 0.0
      %884 = vmatpush1.msra.mxu0 0.0
      %885 = vmatprep.subr.mxu0 0.0
      %886 = vmatpush1.msra.mxu0 0.0
      %887 = vmatprep.subr.mxu0 0.0
      %888 = vmatpush1.msra.mxu0 0.0
      %889 = vmatprep.subr.mxu0 0.0
      %890 = vmatpush1.msra.mxu0 0.0
      %891 = vmatprep.subr.mxu0 0.0
      %892 = vmatpush1.msra.mxu0 0.0
      %893 = vmatprep.subr.mxu0 0.0
      %894 = vmatpush1.msra.mxu0 0.0
      %895 = vmatprep.subr.mxu0 0.0
      %896 = vmatpush1.msra.mxu0 0.0
      %897 = vmatprep.subr.mxu0 0.0
      %898 = vmatpush1.msra.mxu0 0.0
      %899 = vmatprep.subr.mxu0 0.0
      %900 = vmatpush1.msra.mxu0 0.0
      %901 = vmatprep.subr.mxu0 0.0
      %902 = vmatpush1.msra.mxu0 0.0
      %903 = vmatprep.subr.mxu0 0.0
      %904 = vmatpush1.msra.mxu0 0.0
      %905 = vmatprep.subr.mxu0 0.0
      %906 = vmatpush1.msra.mxu0 0.0
      %907 = vmatprep.subr.mxu0 0.0
      %908 = vmatpush1.msra.mxu0 0.0
      %909 = vmatprep.subr.mxu0 0.0
      %910 = vmatpush1.msra.mxu0 0.0
      %911 = vmatprep.subr.mxu0 0.0
      %912 = vmatpush1.msra.mxu0 0.0
      %913 = vmatprep.subr.mxu0 0.0
      %914 = vmatpush1.msra.mxu0 0.0
      %915 = vmatprep.subr.mxu0 0.0
      %916 = vmatpush1.msra.mxu0 0.0
      %917 = vmatprep.subr.mxu0 0.0
      %918 = vmatpush1.msra.mxu0 0.0
      %919 = vmatprep.subr.mxu0 0.0
      %920 = vmatpush1.msra.mxu0 0.0
      %921 = vmatprep.mubr.f32.mxu0 0.0
      %922 = vmatmul.mubr.f32.gmra.mrb[0].mxu0 %v849
      %v923 = vpop.f32.mrb[0].mxu0
      %v924 = vadd.f32 0.0, %v923
      %v925 = vpop.f32.mrb[0].mxu0
      %v926 = vadd.f32 0.0, %v925
      %927 = vdwg.mxu0
      %928 = vmatprep.subr.mxu0 0.0
      %929 = vmatpush1.msra.mxu0 %v855
      %930 = vmatprep.subr.mxu0 0.0
      %931 = vmatpush1.msra.mxu0 0.0
      %932 = vmatprep.subr.mxu0 0.0
      %933 = vmatpush1.msra.mxu0 0.0
      %934 = vmatprep.subr.mxu0 0.0
      %935 = vmatpush1.msra.mxu0 0.0
      %936 = vmatprep.subr.mxu0 0.0
      %937 = vmatpush1.msra.mxu0 0.0
      %938 = vmatprep.subr.mxu0 0.0
      %939 = vmatpush1.msra.mxu0 0.0
      %940 = vmatprep.subr.mxu0 0.0
      %941 = vmatpush1.msra.mxu0 0.0
      %942 = vmatprep.subr.mxu0 0.0
      %943 = vmatpush1.msra.mxu0 0.0
      %944 = vmatprep.subr.mxu0 0.0
      %945 = vmatpush1.msra.mxu0 0.0
      %946 = vmatprep.subr.mxu0 0.0
      %947 = vmatpush1.msra.mxu0 0.0
      %948 = vmatprep.subr.mxu0 0.0
      %949 = vmatpush1.msra.mxu0 0.0
      %950 = vmatprep.subr.mxu0 0.0
      %951 = vmatpush1.msra.mxu0 0.0
      %952 = vmatprep.subr.mxu0 0.0
      %953 = vmatpush1.msra.mxu0 0.0
      %954 = vmatprep.subr.mxu0 0.0
      %955 = vmatpush1.msra.mxu0 0.0
      %956 = vmatprep.subr.mxu0 0.0
      %957 = vmatpush1.msra.mxu0 0.0
      %958 = vmatprep.subr.mxu0 0.0
      %959 = vmatpush1.msra.mxu0 0.0
      %960 = vmatprep.subr.mxu0 0.0
      %961 = vmatpush1.msra.mxu0 0.0
      %962 = vmatprep.subr.mxu0 0.0
      %963 = vmatpush1.msra.mxu0 0.0
      %964 = vmatprep.subr.mxu0 0.0
      %965 = vmatpush1.msra.mxu0 0.0
      %966 = vmatprep.subr.mxu0 0.0
      %967 = vmatpush1.msra.mxu0 0.0
      %968 = vmatprep.subr.mxu0 0.0
      %969 = vmatpush1.msra.mxu0 0.0
      %970 = vmatprep.subr.mxu0 0.0
      %971 = vmatpush1.msra.mxu0 0.0
      %972 = vmatprep.subr.mxu0 0.0
      %973 = vmatpush1.msra.mxu0 0.0
      %974 = vmatprep.subr.mxu0 0.0
      %975 = vmatpush1.msra.mxu0 0.0
      %976 = vmatprep.subr.mxu0 0.0
      %977 = vmatpush1.msra.mxu0 0.0
      %978 = vmatprep.subr.mxu0 0.0
      %979 = vmatpush1.msra.mxu0 0.0
      %980 = vmatprep.subr.mxu0 0.0
      %981 = vmatpush1.msra.mxu0 0.0
      %982 = vmatprep.subr.mxu0 0.0
      %983 = vmatpush1.msra.mxu0 0.0
      %984 = vmatprep.subr.mxu0 0.0
      %985 = vmatpush1.msra.mxu0 0.0
      %986 = vmatprep.subr.mxu0 0.0
      %987 = vmatpush1.msra.mxu0 0.0
      %988 = vmatprep.subr.mxu0 0.0
      %989 = vmatpush1.msra.mxu0 0.0
      %990 = vmatprep.subr.mxu0 0.0
      %991 = vmatpush1.msra.mxu0 0.0
      %992 = vmatprep.mubr.f32.mxu0 0.0
      %993 = vmatmul.mubr.f32.gmra.mrb[0].mxu0 %v849
      %v994 = vpop.f32.mrb[0].mxu0
      %v995 = vadd.f32 0.0, %v994
      %v996 = vpop.f32.mrb[0].mxu0
      %997 = vdwg.mxu0
      %v998 = vadd.f32 %v829, %v924
      %v999 = vadd.f32 %v830, %v926
      %v1000 = vadd.f32 %v831, %v995
      %s1001 = scalar_lea.vmem %s1, 32
      %v1002 = vld [vmem:[%s1001] sm:$0xff]
      %v1003 = vld [vmem:[%s334] sm:$0xff]
      %v1004 = vld [vmem:[%s334 + $0x8] sm:$0xf]
      %v1007 = vcombine.high %v1003, %v1003
      %1008 = vrot.lane.b32.xlu0 %v1003, 109
      %v1009 = vpop.permute.xlu0 %1008
      %1010 = vrot.lane.b32.xlu0 %v1007, 109
      %v1011 = vpop.permute.xlu0 %1010
      %1012 = vrot.lane.b32.xlu0 %v1004, 109
      %v1013 = vpop.permute.xlu0 %1012
      %vm1014 = vcmask 891904
      %v1015 = vsel %vm1014, %v1009, %v1011
      %v1016 = vsel %vm1014, %v1011, %v1013
      %v1018 = vsel %vm361, %v1002, 0
      %v1020 = vsel %vm365, %v1015, 0
      %v1022 = vsel %vm365, %v1016, 0
      %v1024 = vsel %vm365, %v1013, 0
      %1026 = vmatprep.subr.mxu0 %v1022
      %1027 = vmatpush1.msra.mxu0 %v1020
      %1028 = vmatprep.subr.mxu0 0.0
      %1029 = vmatpush1.msra.mxu0 0.0
      %1030 = vmatprep.subr.mxu0 0.0
      %1031 = vmatpush1.msra.mxu0 0.0
      %1032 = vmatprep.subr.mxu0 0.0
      %1033 = vmatpush1.msra.mxu0 0.0
      %1034 = vmatprep.subr.mxu0 0.0
      %1035 = vmatpush1.msra.mxu0 0.0
      %1036 = vmatprep.subr.mxu0 0.0
      %1037 = vmatpush1.msra.mxu0 0.0
      %1038 = vmatprep.subr.mxu0 0.0
      %1039 = vmatpush1.msra.mxu0 0.0
      %1040 = vmatprep.subr.mxu0 0.0
      %1041 = vmatpush1.msra.mxu0 0.0
      %1042 = vmatprep.subr.mxu0 0.0
      %1043 = vmatpush1.msra.mxu0 0.0
      %1044 = vmatprep.subr.mxu0 0.0
      %1045 = vmatpush1.msra.mxu0 0.0
      %1046 = vmatprep.subr.mxu0 0.0
      %1047 = vmatpush1.msra.mxu0 0.0
      %1048 = vmatprep.subr.mxu0 0.0
      %1049 = vmatpush1.msra.mxu0 0.0
      %1050 = vmatprep.subr.mxu0 0.0
      %1051 = vmatpush1.msra.mxu0 0.0
      %1052 = vmatprep.subr.mxu0 0.0
      %1053 = vmatpush1.msra.mxu0 0.0
      %1054 = vmatprep.subr.mxu0 0.0
      %1055 = vmatpush1.msra.mxu0 0.0
      %1056 = vmatprep.subr.mxu0 0.0
      %1057 = vmatpush1.msra.mxu0 0.0
      %1058 = vmatprep.subr.mxu0 0.0
      %1059 = vmatpush1.msra.mxu0 0.0
      %1060 = vmatprep.subr.mxu0 0.0
      %1061 = vmatpush1.msra.mxu0 0.0
      %1062 = vmatprep.subr.mxu0 0.0
      %1063 = vmatpush1.msra.mxu0 0.0
      %1064 = vmatprep.subr.mxu0 0.0
      %1065 = vmatpush1.msra.mxu0 0.0
      %1066 = vmatprep.subr.mxu0 0.0
      %1067 = vmatpush1.msra.mxu0 0.0
      %1068 = vmatprep.subr.mxu0 0.0
      %1069 = vmatpush1.msra.mxu0 0.0
      %1070 = vmatprep.subr.mxu0 0.0
      %1071 = vmatpush1.msra.mxu0 0.0
      %1072 = vmatprep.subr.mxu0 0.0
      %1073 = vmatpush1.msra.mxu0 0.0
      %1074 = vmatprep.subr.mxu0 0.0
      %1075 = vmatpush1.msra.mxu0 0.0
      %1076 = vmatprep.subr.mxu0 0.0
      %1077 = vmatpush1.msra.mxu0 0.0
      %1078 = vmatprep.subr.mxu0 0.0
      %1079 = vmatpush1.msra.mxu0 0.0
      %1080 = vmatprep.subr.mxu0 0.0
      %1081 = vmatpush1.msra.mxu0 0.0
      %1082 = vmatprep.subr.mxu0 0.0
      %1083 = vmatpush1.msra.mxu0 0.0
      %1084 = vmatprep.subr.mxu0 0.0
      %1085 = vmatpush1.msra.mxu0 0.0
      %1086 = vmatprep.subr.mxu0 0.0
      %1087 = vmatpush1.msra.mxu0 0.0
      %1088 = vmatprep.subr.mxu0 0.0
      %1089 = vmatpush1.msra.mxu0 0.0
      %1090 = vmatprep.mubr.f32.mxu0 0.0
      %1091 = vmatmul.mubr.f32.gmra.mrb[0].mxu0 %v1018
      %v1092 = vpop.f32.mrb[0].mxu0
      %v1093 = vadd.f32 0.0, %v1092
      %v1094 = vpop.f32.mrb[0].mxu0
      %v1095 = vadd.f32 0.0, %v1094
      %1096 = vdwg.mxu0
      %1097 = vmatprep.subr.mxu0 0.0
      %1098 = vmatpush1.msra.mxu0 %v1024
      %1099 = vmatprep.subr.mxu0 0.0
      %1100 = vmatpush1.msra.mxu0 0.0
      %1101 = vmatprep.subr.mxu0 0.0
      %1102 = vmatpush1.msra.mxu0 0.0
      %1103 = vmatprep.subr.mxu0 0.0
      %1104 = vmatpush1.msra.mxu0 0.0
      %1105 = vmatprep.subr.mxu0 0.0
      %1106 = vmatpush1.msra.mxu0 0.0
      %1107 = vmatprep.subr.mxu0 0.0
      %1108 = vmatpush1.msra.mxu0 0.0
      %1109 = vmatprep.subr.mxu0 0.0
      %1110 = vmatpush1.msra.mxu0 0.0
      %1111 = vmatprep.subr.mxu0 0.0
      %1112 = vmatpush1.msra.mxu0 0.0
      %1113 = vmatprep.subr.mxu0 0.0
      %1114 = vmatpush1.msra.mxu0 0.0
      %1115 = vmatprep.subr.mxu0 0.0
      %1116 = vmatpush1.msra.mxu0 0.0
      %1117 = vmatprep.subr.mxu0 0.0
      %1118 = vmatpush1.msra.mxu0 0.0
      %1119 = vmatprep.subr.mxu0 0.0
      %1120 = vmatpush1.msra.mxu0 0.0
      %1121 = vmatprep.subr.mxu0 0.0
      %1122 = vmatpush1.msra.mxu0 0.0
      %1123 = vmatprep.subr.mxu0 0.0
      %1124 = vmatpush1.msra.mxu0 0.0
      %1125 = vmatprep.subr.mxu0 0.0
      %1126 = vmatpush1.msra.mxu0 0.0
      %1127 = vmatprep.subr.mxu0 0.0
      %1128 = vmatpush1.msra.mxu0 0.0
      %1129 = vmatprep.subr.mxu0 0.0
      %1130 = vmatpush1.msra.mxu0 0.0
      %1131 = vmatprep.subr.mxu0 0.0
      %1132 = vmatpush1.msra.mxu0 0.0
      %1133 = vmatprep.subr.mxu0 0.0
      %1134 = vmatpush1.msra.mxu0 0.0
      %1135 = vmatprep.subr.mxu0 0.0
      %1136 = vmatpush1.msra.mxu0 0.0
      %1137 = vmatprep.subr.mxu0 0.0
      %1138 = vmatpush1.msra.mxu0 0.0
      %1139 = vmatprep.subr.mxu0 0.0
      %1140 = vmatpush1.msra.mxu0 0.0
      %1141 = vmatprep.subr.mxu0 0.0
      %1142 = vmatpush1.msra.mxu0 0.0
      %1143 = vmatprep.subr.mxu0 0.0
      %1144 = vmatpush1.msra.mxu0 0.0
      %1145 = vmatprep.subr.mxu0 0.0
      %1146 = vmatpush1.msra.mxu0 0.0
      %1147 = vmatprep.subr.mxu0 0.0
      %1148 = vmatpush1.msra.mxu0 0.0
      %1149 = vmatprep.subr.mxu0 0.0
      %1150 = vmatpush1.msra.mxu0 0.0
      %1151 = vmatprep.subr.mxu0 0.0
      %1152 = vmatpush1.msra.mxu0 0.0
      %1153 = vmatprep.subr.mxu0 0.0
      %1154 = vmatpush1.msra.mxu0 0.0
      %1155 = vmatprep.subr.mxu0 0.0
      %1156 = vmatpush1.msra.mxu0 0.0
      %1157 = vmatprep.subr.mxu0 0.0
      %1158 = vmatpush1.msra.mxu0 0.0
      %1159 = vmatprep.subr.mxu0 0.0
      %1160 = vmatpush1.msra.mxu0 0.0
      %1161 = vmatprep.mubr.f32.mxu0 0.0
      %1162 = vmatmul.mubr.f32.gmra.mrb[0].mxu0 %v1018
      %v1163 = vpop.f32.mrb[0].mxu0
      %v1164 = vadd.f32 0.0, %v1163
      %v1165 = vpop.f32.mrb[0].mxu0
      %1166 = vdwg.mxu0
      %v1167 = vadd.f32 %v998, %v1093
      %v1168 = vadd.f32 %v999, %v1095
      %v1169 = vadd.f32 %v1000, %v1164
      %s1170 = scalar_lea.vmem %s1, 40
      %v1171 = vld [vmem:[%s1170] sm:$0xff]
      %v1172 = vld [vmem:[%s334] sm:$0xff]
      %v1173 = vld [vmem:[%s334 + $0x8] sm:$0xf]
      %v1176 = vcombine.high %v1172, %v1172
      %1177 = vrot.lane.b32.xlu0 %v1172, 108
      %v1178 = vpop.permute.xlu0 %1177
      %1179 = vrot.lane.b32.xlu0 %v1176, 108
      %v1180 = vpop.permute.xlu0 %1179
      %1181 = vrot.lane.b32.xlu0 %v1173, 108
      %v1182 = vpop.permute.xlu0 %1181
      %vm1183 = vcmask 883712
      %v1184 = vsel %vm1183, %v1178, %v1180
      %v1185 = vsel %vm1183, %v1180, %v1182
      %v1187 = vsel %vm361, %v1171, 0
      %v1189 = vsel %vm365, %v1184, 0
      %v1191 = vsel %vm365, %v1185, 0
      %v1193 = vsel %vm365, %v1182, 0
      %1195 = vmatprep.subr.mxu0 %v1191
      %1196 = vmatpush1.msra.mxu0 %v1189
      %1197 = vmatprep.subr.mxu0 0.0
      %1198 = vmatpush1.msra.mxu0 0.0
      %1199 = vmatprep.subr.mxu0 0.0
      %1200 = vmatpush1.msra.mxu0 0.0
      %1201 = vmatprep.subr.mxu0 0.0
      %1202 = vmatpush1.msra.mxu0 0.0
      %1203 = vmatprep.subr.mxu0 0.0
      %1204 = vmatpush1.msra.mxu0 0.0
      %1205 = vmatprep.subr.mxu0 0.0
      %1206 = vmatpush1.msra.mxu0 0.0
      %1207 = vmatprep.subr.mxu0 0.0
      %1208 = vmatpush1.msra.mxu0 0.0
      %1209 = vmatprep.subr.mxu0 0.0
      %1210 = vmatpush1.msra.mxu0 0.0
      %1211 = vmatprep.subr.mxu0 0.0
      %1212 = vmatpush1.msra.mxu0 0.0
      %1213 = vmatprep.subr.mxu0 0.0
      %1214 = vmatpush1.msra.mxu0 0.0
      %1215 = vmatprep.subr.mxu0 0.0
      %1216 = vmatpush1.msra.mxu0 0.0
      %1217 = vmatprep.subr.mxu0 0.0
      %1218 = vmatpush1.msra.mxu0 0.0
      %1219 = vmatprep.subr.mxu0 0.0
      %1220 = vmatpush1.msra.mxu0 0.0
      %1221 = vmatprep.subr.mxu0 0.0
      %1222 = vmatpush1.msra.mxu0 0.0
      %1223 = vmatprep.subr.mxu0 0.0
      %1224 = vmatpush1.msra.mxu0 0.0
      %1225 = vmatprep.subr.mxu0 0.0
      %1226 = vmatpush1.msra.mxu0 0.0
      %1227 = vmatprep.subr.mxu0 0.0
      %1228 = vmatpush1.msra.mxu0 0.0
      %1229 = vmatprep.subr.mxu0 0.0
      %1230 = vmatpush1.msra.mxu0 0.0
      %1231 = vmatprep.subr.mxu0 0.0
      %1232 = vmatpush1.msra.mxu0 0.0
      %1233 = vmatprep.subr.mxu0 0.0
      %1234 = vmatpush1.msra.mxu0 0.0
      %1235 = vmatprep.subr.mxu0 0.0
      %1236 = vmatpush1.msra.mxu0 0.0
      %1237 = vmatprep.subr.mxu0 0.0
      %1238 = vmatpush1.msra.mxu0 0.0
      %1239 = vmatprep.subr.mxu0 0.0
      %1240 = vmatpush1.msra.mxu0 0.0
      %1241 = vmatprep.subr.mxu0 0.0
      %1242 = vmatpush1.msra.mxu0 0.0
      %1243 = vmatprep.subr.mxu0 0.0
      %1244 = vmatpush1.msra.mxu0 0.0
      %1245 = vmatprep.subr.mxu0 0.0
      %1246 = vmatpush1.msra.mxu0 0.0
      %1247 = vmatprep.subr.mxu0 0.0
      %1248 = vmatpush1.msra.mxu0 0.0
      %1249 = vmatprep.subr.mxu0 0.0
      %1250 = vmatpush1.msra.mxu0 0.0
      %1251 = vmatprep.subr.mxu0 0.0
      %1252 = vmatpush1.msra.mxu0 0.0
      %1253 = vmatprep.subr.mxu0 0.0
      %1254 = vmatpush1.msra.mxu0 0.0
      %1255 = vmatprep.subr.mxu0 0.0
      %1256 = vmatpush1.msra.mxu0 0.0
      %1257 = vmatprep.subr.mxu0 0.0
      %1258 = vmatpush1.msra.mxu0 0.0
      %1259 = vmatprep.mubr.f32.mxu0 0.0
      %1260 = vmatmul.mubr.f32.gmra.mrb[0].mxu0 %v1187
      %v1261 = vpop.f32.mrb[0].mxu0
      %v1262 = vadd.f32 0.0, %v1261
      %v1263 = vpop.f32.mrb[0].mxu0
      %v1264 = vadd.f32 0.0, %v1263
      %1265 = vdwg.mxu0
      %1266 = vmatprep.subr.mxu0 0.0
      %1267 = vmatpush1.msra.mxu0 %v1193
      %1268 = vmatprep.subr.mxu0 0.0
      %1269 = vmatpush1.msra.mxu0 0.0
      %1270 = vmatprep.subr.mxu0 0.0
      %1271 = vmatpush1.msra.mxu0 0.0
      %1272 = vmatprep.subr.mxu0 0.0
      %1273 = vmatpush1.msra.mxu0 0.0
      %1274 = vmatprep.subr.mxu0 0.0
      %1275 = vmatpush1.msra.mxu0 0.0
      %1276 = vmatprep.subr.mxu0 0.0
      %1277 = vmatpush1.msra.mxu0 0.0
      %1278 = vmatprep.subr.mxu0 0.0
      %1279 = vmatpush1.msra.mxu0 0.0
      %1280 = vmatprep.subr.mxu0 0.0
      %1281 = vmatpush1.msra.mxu0 0.0
      %1282 = vmatprep.subr.mxu0 0.0
      %1283 = vmatpush1.msra.mxu0 0.0
      %1284 = vmatprep.subr.mxu0 0.0
      %1285 = vmatpush1.msra.mxu0 0.0
      %1286 = vmatprep.subr.mxu0 0.0
      %1287 = vmatpush1.msra.mxu0 0.0
      %1288 = vmatprep.subr.mxu0 0.0
      %1289 = vmatpush1.msra.mxu0 0.0
      %1290 = vmatprep.subr.mxu0 0.0
      %1291 = vmatpush1.msra.mxu0 0.0
      %1292 = vmatprep.subr.mxu0 0.0
      %1293 = vmatpush1.msra.mxu0 0.0
      %1294 = vmatprep.subr.mxu0 0.0
      %1295 = vmatpush1.msra.mxu0 0.0
      %1296 = vmatprep.subr.mxu0 0.0
      %1297 = vmatpush1.msra.mxu0 0.0
      %1298 = vmatprep.subr.mxu0 0.0
      %1299 = vmatpush1.msra.mxu0 0.0
      %1300 = vmatprep.subr.mxu0 0.0
      %1301 = vmatpush1.msra.mxu0 0.0
      %1302 = vmatprep.subr.mxu0 0.0
      %1303 = vmatpush1.msra.mxu0 0.0
      %1304 = vmatprep.subr.mxu0 0.0
      %1305 = vmatpush1.msra.mxu0 0.0
      %1306 = vmatprep.subr.mxu0 0.0
      %1307 = vmatpush1.msra.mxu0 0.0
      %1308 = vmatprep.subr.mxu0 0.0
      %1309 = vmatpush1.msra.mxu0 0.0
      %1310 = vmatprep.subr.mxu0 0.0
      %1311 = vmatpush1.msra.mxu0 0.0
      %1312 = vmatprep.subr.mxu0 0.0
      %1313 = vmatpush1.msra.mxu0 0.0
      %1314 = vmatprep.subr.mxu0 0.0
      %1315 = vmatpush1.msra.mxu0 0.0
      %1316 = vmatprep.subr.mxu0 0.0
      %1317 = vmatpush1.msra.mxu0 0.0
      %1318 = vmatprep.subr.mxu0 0.0
      %1319 = vmatpush1.msra.mxu0 0.0
      %1320 = vmatprep.subr.mxu0 0.0
      %1321 = vmatpush1.msra.mxu0 0.0
      %1322 = vmatprep.subr.mxu0 0.0
      %1323 = vmatpush1.msra.mxu0 0.0
      %1324 = vmatprep.subr.mxu0 0.0
      %1325 = vmatpush1.msra.mxu0 0.0
      %1326 = vmatprep.subr.mxu0 0.0
      %1327 = vmatpush1.msra.mxu0 0.0
      %1328 = vmatprep.subr.mxu0 0.0
      %1329 = vmatpush1.msra.mxu0 0.0
      %1330 = vmatprep.mubr.f32.mxu0 0.0
      %1331 = vmatmul.mubr.f32.gmra.mrb[0].mxu0 %v1187
      %v1332 = vpop.f32.mrb[0].mxu0
      %v1333 = vadd.f32 0.0, %v1332
      %v1334 = vpop.f32.mrb[0].mxu0
      %1335 = vdwg.mxu0
      %v1336 = vadd.f32 %v1167, %v1262
      %v1337 = vadd.f32 %v1168, %v1264
      %v1338 = vadd.f32 %v1169, %v1333
      %s1339 = scalar_lea.vmem %s1, 48
      %v1340 = vld [vmem:[%s1339] sm:$0xff]
      %v1341 = vld [vmem:[%s334] sm:$0xff]
      %v1342 = vld [vmem:[%s334 + $0x8] sm:$0xf]
      %v1345 = vcombine.high %v1341, %v1341
      %1346 = vrot.lane.b32.xlu0 %v1341, 92
      %v1347 = vpop.permute.xlu0 %1346
      %1348 = vrot.lane.b32.xlu0 %v1345, 92
      %v1349 = vpop.permute.xlu0 %1348
      %1350 = vrot.lane.b32.xlu0 %v1342, 92
      %v1351 = vpop.permute.xlu0 %1350
      %vm1352 = vcmask 752640
      %v1353 = vsel %vm1352, %v1347, %v1349
      %v1354 = vsel %vm1352, %v1349, %v1351
      %v1356 = vsel %vm361, %v1340, 0
      %v1358 = vsel %vm365, %v1353, 0
      %v1360 = vsel %vm365, %v1354, 0
      %v1362 = vsel %vm365, %v1351, 0
      %1364 = vmatprep.subr.mxu0 %v1360
      %1365 = vmatpush1.msra.mxu0 %v1358
      %1366 = vmatprep.subr.mxu0 0.0
      %1367 = vmatpush1.msra.mxu0 0.0
      %1368 = vmatprep.subr.mxu0 0.0
      %1369 = vmatpush1.msra.mxu0 0.0
      %1370 = vmatprep.subr.mxu0 0.0
      %1371 = vmatpush1.msra.mxu0 0.0
      %1372 = vmatprep.subr.mxu0 0.0
      %1373 = vmatpush1.msra.mxu0 0.0
      %1374 = vmatprep.subr.mxu0 0.0
      %1375 = vmatpush1.msra.mxu0 0.0
      %1376 = vmatprep.subr.mxu0 0.0
      %1377 = vmatpush1.msra.mxu0 0.0
      %1378 = vmatprep.subr.mxu0 0.0
      %1379 = vmatpush1.msra.mxu0 0.0
      %1380 = vmatprep.subr.mxu0 0.0
      %1381 = vmatpush1.msra.mxu0 0.0
      %1382 = vmatprep.subr.mxu0 0.0
      %1383 = vmatpush1.msra.mxu0 0.0
      %1384 = vmatprep.subr.mxu0 0.0
      %1385 = vmatpush1.msra.mxu0 0.0
      %1386 = vmatprep.subr.mxu0 0.0
      %1387 = vmatpush1.msra.mxu0 0.0
      %1388 = vmatprep.subr.mxu0 0.0
      %1389 = vmatpush1.msra.mxu0 0.0
      %1390 = vmatprep.subr.mxu0 0.0
      %1391 = vmatpush1.msra.mxu0 0.0
      %1392 = vmatprep.subr.mxu0 0.0
      %1393 = vmatpush1.msra.mxu0 0.0
      %1394 = vmatprep.subr.mxu0 0.0
      %1395 = vmatpush1.msra.mxu0 0.0
      %1396 = vmatprep.subr.mxu0 0.0
      %1397 = vmatpush1.msra.mxu0 0.0
      %1398 = vmatprep.subr.mxu0 0.0
      %1399 = vmatpush1.msra.mxu0 0.0
      %1400 = vmatprep.subr.mxu0 0.0
      %1401 = vmatpush1.msra.mxu0 0.0
      %1402 = vmatprep.subr.mxu0 0.0
      %1403 = vmatpush1.msra.mxu0 0.0
      %1404 = vmatprep.subr.mxu0 0.0
      %1405 = vmatpush1.msra.mxu0 0.0
      %1406 = vmatprep.subr.mxu0 0.0
      %1407 = vmatpush1.msra.mxu0 0.0
      %1408 = vmatprep.subr.mxu0 0.0
      %1409 = vmatpush1.msra.mxu0 0.0
      %1410 = vmatprep.subr.mxu0 0.0
      %1411 = vmatpush1.msra.mxu0 0.0
      %1412 = vmatprep.subr.mxu0 0.0
      %1413 = vmatpush1.msra.mxu0 0.0
      %1414 = vmatprep.subr.mxu0 0.0
      %1415 = vmatpush1.msra.mxu0 0.0
      %1416 = vmatprep.subr.mxu0 0.0
      %1417 = vmatpush1.msra.mxu0 0.0
      %1418 = vmatprep.subr.mxu0 0.0
      %1419 = vmatpush1.msra.mxu0 0.0
      %1420 = vmatprep.subr.mxu0 0.0
      %1421 = vmatpush1.msra.mxu0 0.0
      %1422 = vmatprep.subr.mxu0 0.0
      %1423 = vmatpush1.msra.mxu0 0.0
      %1424 = vmatprep.subr.mxu0 0.0
      %1425 = vmatpush1.msra.mxu0 0.0
      %1426 = vmatprep.subr.mxu0 0.0
      %1427 = vmatpush1.msra.mxu0 0.0
      %1428 = vmatprep.mubr.f32.mxu0 0.0
      %1429 = vmatmul.mubr.f32.gmra.mrb[0].mxu0 %v1356
      %v1430 = vpop.f32.mrb[0].mxu0
      %v1431 = vadd.f32 0.0, %v1430
      %v1432 = vpop.f32.mrb[0].mxu0
      %v1433 = vadd.f32 0.0, %v1432
      %1434 = vdwg.mxu0
      %1435 = vmatprep.subr.mxu0 0.0
      %1436 = vmatpush1.msra.mxu0 %v1362
      %1437 = vmatprep.subr.mxu0 0.0
      %1438 = vmatpush1.msra.mxu0 0.0
      %1439 = vmatprep.subr.mxu0 0.0
      %1440 = vmatpush1.msra.mxu0 0.0
      %1441 = vmatprep.subr.mxu0 0.0
      %1442 = vmatpush1.msra.mxu0 0.0
      %1443 = vmatprep.subr.mxu0 0.0
      %1444 = vmatpush1.msra.mxu0 0.0
      %1445 = vmatprep.subr.mxu0 0.0
      %1446 = vmatpush1.msra.mxu0 0.0
      %1447 = vmatprep.subr.mxu0 0.0
      %1448 = vmatpush1.msra.mxu0 0.0
      %1449 = vmatprep.subr.mxu0 0.0
      %1450 = vmatpush1.msra.mxu0 0.0
      %1451 = vmatprep.subr.mxu0 0.0
      %1452 = vmatpush1.msra.mxu0 0.0
      %1453 = vmatprep.subr.mxu0 0.0
      %1454 = vmatpush1.msra.mxu0 0.0
      %1455 = vmatprep.subr.mxu0 0.0
      %1456 = vmatpush1.msra.mxu0 0.0
      %1457 = vmatprep.subr.mxu0 0.0
      %1458 = vmatpush1.msra.mxu0 0.0
      %1459 = vmatprep.subr.mxu0 0.0
      %1460 = vmatpush1.msra.mxu0 0.0
      %1461 = vmatprep.subr.mxu0 0.0
      %1462 = vmatpush1.msra.mxu0 0.0
      %1463 = vmatprep.subr.mxu0 0.0
      %1464 = vmatpush1.msra.mxu0 0.0
      %1465 = vmatprep.subr.mxu0 0.0
      %1466 = vmatpush1.msra.mxu0 0.0
      %1467 = vmatprep.subr.mxu0 0.0
      %1468 = vmatpush1.msra.mxu0 0.0
      %1469 = vmatprep.subr.mxu0 0.0
      %1470 = vmatpush1.msra.mxu0 0.0
      %1471 = vmatprep.subr.mxu0 0.0
      %1472 = vmatpush1.msra.mxu0 0.0
      %1473 = vmatprep.subr.mxu0 0.0
      %1474 = vmatpush1.msra.mxu0 0.0
      %1475 = vmatprep.subr.mxu0 0.0
      %1476 = vmatpush1.msra.mxu0 0.0
      %1477 = vmatprep.subr.mxu0 0.0
      %1478 = vmatpush1.msra.mxu0 0.0
      %1479 = vmatprep.subr.mxu0 0.0
      %1480 = vmatpush1.msra.mxu0 0.0
      %1481 = vmatprep.subr.mxu0 0.0
      %1482 = vmatpush1.msra.mxu0 0.0
      %1483 = vmatprep.subr.mxu0 0.0
      %1484 = vmatpush1.msra.mxu0 0.0
      %1485 = vmatprep.subr.mxu0 0.0
      %1486 = vmatpush1.msra.mxu0 0.0
      %1487 = vmatprep.subr.mxu0 0.0
      %1488 = vmatpush1.msra.mxu0 0.0
      %1489 = vmatprep.subr.mxu0 0.0
      %1490 = vmatpush1.msra.mxu0 0.0
      %1491 = vmatprep.subr.mxu0 0.0
      %1492 = vmatpush1.msra.mxu0 0.0
      %1493 = vmatprep.subr.mxu0 0.0
      %1494 = vmatpush1.msra.mxu0 0.0
      %1495 = vmatprep.subr.mxu0 0.0
      %1496 = vmatpush1.msra.mxu0 0.0
      %1497 = vmatprep.subr.mxu0 0.0
      %1498 = vmatpush1.msra.mxu0 0.0
      %1499 = vmatprep.mubr.f32.mxu0 0.0
      %1500 = vmatmul.mubr.f32.gmra.mrb[0].mxu0 %v1356
      %v1501 = vpop.f32.mrb[0].mxu0
      %v1502 = vadd.f32 0.0, %v1501
      %v1503 = vpop.f32.mrb[0].mxu0
      %1504 = vdwg.mxu0
      %v1505 = vadd.f32 %v1336, %v1431
      %v1506 = vadd.f32 %v1337, %v1433
      %v1507 = vadd.f32 %v1338, %v1502
      %s1508 = scalar_lea.vmem %s1, 56
      %v1509 = vld [vmem:[%s1508] sm:$0xff]
      %v1510 = vld [vmem:[%s334] sm:$0xff]
      %v1511 = vld [vmem:[%s334 + $0x8] sm:$0xf]
      %v1514 = vcombine.high %v1510, %v1510
      %1515 = vrot.lane.b32.xlu0 %v1510, 91
      %v1516 = vpop.permute.xlu0 %1515
      %1517 = vrot.lane.b32.xlu0 %v1514, 91
      %v1518 = vpop.permute.xlu0 %1517
      %1519 = vrot.lane.b32.xlu0 %v1511, 91
      %v1520 = vpop.permute.xlu0 %1519
      %vm1521 = vcmask 744448
      %v1522 = vsel %vm1521, %v1516, %v1518
      %v1523 = vsel %vm1521, %v1518, %v1520
      %v1525 = vsel %vm361, %v1509, 0
      %v1527 = vsel %vm365, %v1522, 0
      %v1529 = vsel %vm365, %v1523, 0
      %v1531 = vsel %vm365, %v1520, 0
      %1533 = vmatprep.subr.mxu0 %v1529
      %1534 = vmatpush1.msra.mxu0 %v1527
      %1535 = vmatprep.subr.mxu0 0.0
      %1536 = vmatpush1.msra.mxu0 0.0
      %1537 = vmatprep.subr.mxu0 0.0
      %1538 = vmatpush1.msra.mxu0 0.0
      %1539 = vmatprep.subr.mxu0 0.0
      %1540 = vmatpush1.msra.mxu0 0.0
      %1541 = vmatprep.subr.mxu0 0.0
      %1542 = vmatpush1.msra.mxu0 0.0
      %1543 = vmatprep.subr.mxu0 0.0
      %1544 = vmatpush1.msra.mxu0 0.0
      %1545 = vmatprep.subr.mxu0 0.0
      %1546 = vmatpush1.msra.mxu0 0.0
      %1547 = vmatprep.subr.mxu0 0.0
      %1548 = vmatpush1.msra.mxu0 0.0
      %1549 = vmatprep.subr.mxu0 0.0
      %1550 = vmatpush1.msra.mxu0 0.0
      %1551 = vmatprep.subr.mxu0 0.0
      %1552 = vmatpush1.msra.mxu0 0.0
      %1553 = vmatprep.subr.mxu0 0.0
      %1554 = vmatpush1.msra.mxu0 0.0
      %1555 = vmatprep.subr.mxu0 0.0
      %1556 = vmatpush1.msra.mxu0 0.0
      %1557 = vmatprep.subr.mxu0 0.0
      %1558 = vmatpush1.msra.mxu0 0.0
      %1559 = vmatprep.subr.mxu0 0.0
      %1560 = vmatpush1.msra.mxu0 0.0
      %1561 = vmatprep.subr.mxu0 0.0
      %1562 = vmatpush1.msra.mxu0 0.0
      %1563 = vmatprep.subr.mxu0 0.0
      %1564 = vmatpush1.msra.mxu0 0.0
      %1565 = vmatprep.subr.mxu0 0.0
      %1566 = vmatpush1.msra.mxu0 0.0
      %1567 = vmatprep.subr.mxu0 0.0
      %1568 = vmatpush1.msra.mxu0 0.0
      %1569 = vmatprep.subr.mxu0 0.0
      %1570 = vmatpush1.msra.mxu0 0.0
      %1571 = vmatprep.subr.mxu0 0.0
      %1572 = vmatpush1.msra.mxu0 0.0
      %1573 = vmatprep.subr.mxu0 0.0
      %1574 = vmatpush1.msra.mxu0 0.0
      %1575 = vmatprep.subr.mxu0 0.0
      %1576 = vmatpush1.msra.mxu0 0.0
      %1577 = vmatprep.subr.mxu0 0.0
      %1578 = vmatpush1.msra.mxu0 0.0
      %1579 = vmatprep.subr.mxu0 0.0
      %1580 = vmatpush1.msra.mxu0 0.0
      %1581 = vmatprep.subr.mxu0 0.0
      %1582 = vmatpush1.msra.mxu0 0.0
      %1583 = vmatprep.subr.mxu0 0.0
      %1584 = vmatpush1.msra.mxu0 0.0
      %1585 = vmatprep.subr.mxu0 0.0
      %1586 = vmatpush1.msra.mxu0 0.0
      %1587 = vmatprep.subr.mxu0 0.0
      %1588 = vmatpush1.msra.mxu0 0.0
      %1589 = vmatprep.subr.mxu0 0.0
      %1590 = vmatpush1.msra.mxu0 0.0
      %1591 = vmatprep.subr.mxu0 0.0
      %1592 = vmatpush1.msra.mxu0 0.0
      %1593 = vmatprep.subr.mxu0 0.0
      %1594 = vmatpush1.msra.mxu0 0.0
      %1595 = vmatprep.subr.mxu0 0.0
      %1596 = vmatpush1.msra.mxu0 0.0
      %1597 = vmatprep.mubr.f32.mxu0 0.0
      %1598 = vmatmul.mubr.f32.gmra.mrb[0].mxu0 %v1525
      %v1599 = vpop.f32.mrb[0].mxu0
      %v1600 = vadd.f32 0.0, %v1599
      %v1601 = vpop.f32.mrb[0].mxu0
      %v1602 = vadd.f32 0.0, %v1601
      %1603 = vdwg.mxu0
      %1604 = vmatprep.subr.mxu0 0.0
      %1605 = vmatpush1.msra.mxu0 %v1531
      %1606 = vmatprep.subr.mxu0 0.0
      %1607 = vmatpush1.msra.mxu0 0.0
      %1608 = vmatprep.subr.mxu0 0.0
      %1609 = vmatpush1.msra.mxu0 0.0
      %1610 = vmatprep.subr.mxu0 0.0
      %1611 = vmatpush1.msra.mxu0 0.0
      %1612 = vmatprep.subr.mxu0 0.0
      %1613 = vmatpush1.msra.mxu0 0.0
      %1614 = vmatprep.subr.mxu0 0.0
      %1615 = vmatpush1.msra.mxu0 0.0
      %1616 = vmatprep.subr.mxu0 0.0
      %1617 = vmatpush1.msra.mxu0 0.0
      %1618 = vmatprep.subr.mxu0 0.0
      %1619 = vmatpush1.msra.mxu0 0.0
      %1620 = vmatprep.subr.mxu0 0.0
      %1621 = vmatpush1.msra.mxu0 0.0
      %1622 = vmatprep.subr.mxu0 0.0
      %1623 = vmatpush1.msra.mxu0 0.0
      %1624 = vmatprep.subr.mxu0 0.0
      %1625 = vmatpush1.msra.mxu0 0.0
      %1626 = vmatprep.subr.mxu0 0.0
      %1627 = vmatpush1.msra.mxu0 0.0
      %1628 = vmatprep.subr.mxu0 0.0
      %1629 = vmatpush1.msra.mxu0 0.0
      %1630 = vmatprep.subr.mxu0 0.0
      %1631 = vmatpush1.msra.mxu0 0.0
      %1632 = vmatprep.subr.mxu0 0.0
      %1633 = vmatpush1.msra.mxu0 0.0
      %1634 = vmatprep.subr.mxu0 0.0
      %1635 = vmatpush1.msra.mxu0 0.0
      %1636 = vmatprep.subr.mxu0 0.0
      %1637 = vmatpush1.msra.mxu0 0.0
      %1638 = vmatprep.subr.mxu0 0.0
      %1639 = vmatpush1.msra.mxu0 0.0
      %1640 = vmatprep.subr.mxu0 0.0
      %1641 = vmatpush1.msra.mxu0 0.0
      %1642 = vmatprep.subr.mxu0 0.0
      %1643 = vmatpush1.msra.mxu0 0.0
      %1644 = vmatprep.subr.mxu0 0.0
      %1645 = vmatpush1.msra.mxu0 0.0
      %1646 = vmatprep.subr.mxu0 0.0
      %1647 = vmatpush1.msra.mxu0 0.0
      %1648 = vmatprep.subr.mxu0 0.0
      %1649 = vmatpush1.msra.mxu0 0.0
      %1650 = vmatprep.subr.mxu0 0.0
      %1651 = vmatpush1.msra.mxu0 0.0
      %1652 = vmatprep.subr.mxu0 0.0
      %1653 = vmatpush1.msra.mxu0 0.0
      %1654 = vmatprep.subr.mxu0 0.0
      %1655 = vmatpush1.msra.mxu0 0.0
      %1656 = vmatprep.subr.mxu0 0.0
      %1657 = vmatpush1.msra.mxu0 0.0
      %1658 = vmatprep.subr.mxu0 0.0
      %1659 = vmatpush1.msra.mxu0 0.0
      %1660 = vmatprep.subr.mxu0 0.0
      %1661 = vmatpush1.msra.mxu0 0.0
      %1662 = vmatprep.subr.mxu0 0.0
      %1663 = vmatpush1.msra.mxu0 0.0
      %1664 = vmatprep.subr.mxu0 0.0
      %1665 = vmatpush1.msra.mxu0 0.0
      %1666 = vmatprep.subr.mxu0 0.0
      %1667 = vmatpush1.msra.mxu0 0.0
      %1668 = vmatprep.mubr.f32.mxu0 0.0
      %1669 = vmatmul.mubr.f32.gmra.mrb[0].mxu0 %v1525
      %v1670 = vpop.f32.mrb[0].mxu0
      %v1671 = vadd.f32 0.0, %v1670
      %v1672 = vpop.f32.mrb[0].mxu0
      %1673 = vdwg.mxu0
      %v1674 = vadd.f32 %v1505, %v1600
      %v1675 = vadd.f32 %v1506, %v1602
      %v1676 = vadd.f32 %v1507, %v1671
      %s1677 = scalar_lea.vmem %s1, 64
      %v1678 = vld [vmem:[%s1677] sm:$0xff]
      %v1679 = vld [vmem:[%s334] sm:$0xff]
      %v1680 = vld [vmem:[%s334 + $0x8] sm:$0xf]
      %v1683 = vcombine.high %v1679, %v1679
      %1684 = vrot.lane.b32.xlu0 %v1679, 90
      %v1685 = vpop.permute.xlu0 %1684
      %1686 = vrot.lane.b32.xlu0 %v1683, 90
      %v1687 = vpop.permute.xlu0 %1686
      %1688 = vrot.lane.b32.xlu0 %v1680, 90
      %v1689 = vpop.permute.xlu0 %1688
      %vm1690 = vcmask 736256
      %v1691 = vsel %vm1690, %v1685, %v1687
      %v1692 = vsel %vm1690, %v1687, %v1689
      %v1694 = vsel %vm361, %v1678, 0
      %v1696 = vsel %vm365, %v1691, 0
      %v1698 = vsel %vm365, %v1692, 0
      %v1700 = vsel %vm365, %v1689, 0
      %1702 = vmatprep.subr.mxu0 %v1698
      %1703 = vmatpush1.msra.mxu0 %v1696
      %1704 = vmatprep.subr.mxu0 0.0
      %1705 = vmatpush1.msra.mxu0 0.0
      %1706 = vmatprep.subr.mxu0 0.0
      %1707 = vmatpush1.msra.mxu0 0.0
      %1708 = vmatprep.subr.mxu0 0.0
      %1709 = vmatpush1.msra.mxu0 0.0
      %1710 = vmatprep.subr.mxu0 0.0
      %1711 = vmatpush1.msra.mxu0 0.0
      %1712 = vmatprep.subr.mxu0 0.0
      %1713 = vmatpush1.msra.mxu0 0.0
      %1714 = vmatprep.subr.mxu0 0.0
      %1715 = vmatpush1.msra.mxu0 0.0
      %1716 = vmatprep.subr.mxu0 0.0
      %1717 = vmatpush1.msra.mxu0 0.0
      %1718 = vmatprep.subr.mxu0 0.0
      %1719 = vmatpush1.msra.mxu0 0.0
      %1720 = vmatprep.subr.mxu0 0.0
      %1721 = vmatpush1.msra.mxu0 0.0
      %1722 = vmatprep.subr.mxu0 0.0
      %1723 = vmatpush1.msra.mxu0 0.0
      %1724 = vmatprep.subr.mxu0 0.0
      %1725 = vmatpush1.msra.mxu0 0.0
      %1726 = vmatprep.subr.mxu0 0.0
      %1727 = vmatpush1.msra.mxu0 0.0
      %1728 = vmatprep.subr.mxu0 0.0
      %1729 = vmatpush1.msra.mxu0 0.0
      %1730 = vmatprep.subr.mxu0 0.0
      %1731 = vmatpush1.msra.mxu0 0.0
      %1732 = vmatprep.subr.mxu0 0.0
      %1733 = vmatpush1.msra.mxu0 0.0
      %1734 = vmatprep.subr.mxu0 0.0
      %1735 = vmatpush1.msra.mxu0 0.0
      %1736 = vmatprep.subr.mxu0 0.0
      %1737 = vmatpush1.msra.mxu0 0.0
      %1738 = vmatprep.subr.mxu0 0.0
      %1739 = vmatpush1.msra.mxu0 0.0
      %1740 = vmatprep.subr.mxu0 0.0
      %1741 = vmatpush1.msra.mxu0 0.0
      %1742 = vmatprep.subr.mxu0 0.0
      %1743 = vmatpush1.msra.mxu0 0.0
      %1744 = vmatprep.subr.mxu0 0.0
      %1745 = vmatpush1.msra.mxu0 0.0
      %1746 = vmatprep.subr.mxu0 0.0
      %1747 = vmatpush1.msra.mxu0 0.0
      %1748 = vmatprep.subr.mxu0 0.0
      %1749 = vmatpush1.msra.mxu0 0.0
      %1750 = vmatprep.subr.mxu0 0.0
      %1751 = vmatpush1.msra.mxu0 0.0
      %1752 = vmatprep.subr.mxu0 0.0
      %1753 = vmatpush1.msra.mxu0 0.0
      %1754 = vmatprep.subr.mxu0 0.0
      %1755 = vmatpush1.msra.mxu0 0.0
      %1756 = vmatprep.subr.mxu0 0.0
      %1757 = vmatpush1.msra.mxu0 0.0
      %1758 = vmatprep.subr.mxu0 0.0
      %1759 = vmatpush1.msra.mxu0 0.0
      %1760 = vmatprep.subr.mxu0 0.0
      %1761 = vmatpush1.msra.mxu0 0.0
      %1762 = vmatprep.subr.mxu0 0.0
      %1763 = vmatpush1.msra.mxu0 0.0
      %1764 = vmatprep.subr.mxu0 0.0
      %1765 = vmatpush1.msra.mxu0 0.0
      %1766 = vmatprep.mubr.f32.mxu0 0.0
      %1767 = vmatmul.mubr.f32.gmra.mrb[0].mxu0 %v1694
      %v1768 = vpop.f32.mrb[0].mxu0
      %v1769 = vadd.f32 0.0, %v1768
      %v1770 = vpop.f32.mrb[0].mxu0
      %v1771 = vadd.f32 0.0, %v1770
      %1772 = vdwg.mxu0
      %1773 = vmatprep.subr.mxu0 0.0
      %1774 = vmatpush1.msra.mxu0 %v1700
      %1775 = vmatprep.subr.mxu0 0.0
      %1776 = vmatpush1.msra.mxu0 0.0
      %1777 = vmatprep.subr.mxu0 0.0
      %1778 = vmatpush1.msra.mxu0 0.0
      %1779 = vmatprep.subr.mxu0 0.0
      %1780 = vmatpush1.msra.mxu0 0.0
      %1781 = vmatprep.subr.mxu0 0.0
      %1782 = vmatpush1.msra.mxu0 0.0
      %1783 = vmatprep.subr.mxu0 0.0
      %1784 = vmatpush1.msra.mxu0 0.0
      %1785 = vmatprep.subr.mxu0 0.0
      %1786 = vmatpush1.msra.mxu0 0.0
      %1787 = vmatprep.subr.mxu0 0.0
      %1788 = vmatpush1.msra.mxu0 0.0
      %1789 = vmatprep.subr.mxu0 0.0
      %1790 = vmatpush1.msra.mxu0 0.0
      %1791 = vmatprep.subr.mxu0 0.0
      %1792 = vmatpush1.msra.mxu0 0.0
      %1793 = vmatprep.subr.mxu0 0.0
      %1794 = vmatpush1.msra.mxu0 0.0
      %1795 = vmatprep.subr.mxu0 0.0
      %1796 = vmatpush1.msra.mxu0 0.0
      %1797 = vmatprep.subr.mxu0 0.0
      %1798 = vmatpush1.msra.mxu0 0.0
      %1799 = vmatprep.subr.mxu0 0.0
      %1800 = vmatpush1.msra.mxu0 0.0
      %1801 = vmatprep.subr.mxu0 0.0
      %1802 = vmatpush1.msra.mxu0 0.0
      %1803 = vmatprep.subr.mxu0 0.0
      %1804 = vmatpush1.msra.mxu0 0.0
      %1805 = vmatprep.subr.mxu0 0.0
      %1806 = vmatpush1.msra.mxu0 0.0
      %1807 = vmatprep.subr.mxu0 0.0
      %1808 = vmatpush1.msra.mxu0 0.0
      %1809 = vmatprep.subr.mxu0 0.0
      %1810 = vmatpush1.msra.mxu0 0.0
      %1811 = vmatprep.subr.mxu0 0.0
      %1812 = vmatpush1.msra.mxu0 0.0
      %1813 = vmatprep.subr.mxu0 0.0
      %1814 = vmatpush1.msra.mxu0 0.0
      %1815 = vmatprep.subr.mxu0 0.0
      %1816 = vmatpush1.msra.mxu0 0.0
      %1817 = vmatprep.subr.mxu0 0.0
      %1818 = vmatpush1.msra.mxu0 0.0
      %1819 = vmatprep.subr.mxu0 0.0
      %1820 = vmatpush1.msra.mxu0 0.0
      %1821 = vmatprep.subr.mxu0 0.0
      %1822 = vmatpush1.msra.mxu0 0.0
      %1823 = vmatprep.subr.mxu0 0.0
      %1824 = vmatpush1.msra.mxu0 0.0
      %1825 = vmatprep.subr.mxu0 0.0
      %1826 = vmatpush1.msra.mxu0 0.0
      %1827 = vmatprep.subr.mxu0 0.0
      %1828 = vmatpush1.msra.mxu0 0.0
      %1829 = vmatprep.subr.mxu0 0.0
      %1830 = vmatpush1.msra.mxu0 0.0
      %1831 = vmatprep.subr.mxu0 0.0
      %1832 = vmatpush1.msra.mxu0 0.0
      %1833 = vmatprep.subr.mxu0 0.0
      %1834 = vmatpush1.msra.mxu0 0.0
      %1835 = vmatprep.subr.mxu0 0.0
      %1836 = vmatpush1.msra.mxu0 0.0
      %1837 = vmatprep.mubr.f32.mxu0 0.0
      %1838 = vmatmul.mubr.f32.gmra.mrb[0].mxu0 %v1694
      %v1839 = vpop.f32.mrb[0].mxu0
      %v1840 = vadd.f32 0.0, %v1839
      %v1841 = vpop.f32.mrb[0].mxu0
      %1842 = vdwg.mxu0
      %v1843 = vadd.f32 %v1674, %v1769
      %v1844 = vadd.f32 %v1675, %v1771
      %v1845 = vadd.f32 %v1676, %v1840
      %v1846 = vld [vmem:[%s2] sm:$0xff]
      %1848 = vset.pattern.permute.xlu0 0
      %1849 = vperm.xlu0 %1848, %v1846
      %v1850 = vpop.permute.xlu0 %1849
      %v1852 = vadd.f32 %v1843, %v1850
      %v1853 = vadd.f32 %v1844, %v1850
      %v1854 = vadd.f32 %v1845, %v1850
      %vm1855 = vcmp.ge.f32.partialorder %v1852, 0.0
      %vm1856 = vcmp.ge.f32.partialorder %v1853, 0.0
      %vm1857 = vcmp.ge.f32.partialorder %v1854, 0.0
      %v1858 = vmul.f32 %v1852, 0.01
      %v1859 = vmul.f32 %v1853, 0.01
      %v1860 = vmul.f32 %v1854, 0.01
      %v1861 = vsel %vm1855, %v1852, %v1858
      %v1862 = vsel %vm1856, %v1853, %v1859
      %v1863 = vsel %vm1857, %v1854, %v1860
      %v1864 = vld [vmem:[%s5] sm:$0x7]
      %v1866 = vlaneseq
      %v1867 = vshrl.u32 %v1866, 7
      %v1868 = vsub.s32 0, %v1867
      %v1869 = vrot.slane %v1864, %v1868
      %v1870 = vlaneseq
      %v1871 = vshrl.u32 %v1870, 7
      %v1872 = vsub.s32 1, %v1871
      %v1873 = vrot.slane %v1864, %v1872
      %v1874 = vlaneseq
      %v1875 = vshrl.u32 %v1874, 7
      %v1876 = vsub.s32 2, %v1875
      %v1877 = vrot.slane %v1864, %v1876
      %v1881 = vmul.f32 %v1861, %v1869
      %v1882 = vmul.f32 %v1862, %v1873
      %v1883 = vmul.f32 %v1863, %v1877
      %vm1884 = vcmask 154624
      %1885 = vst.msk [vmem:[#allocation2] sm:$0xff] %vm1884, 0.0
      %1889 = vrot.lane.b32.xlu0 %v1881, 19
      %v1890 = vpop.permute.xlu0 %1889
      %1891 = vrot.lane.b32.xlu0 %v1882, 19
      %v1892 = vpop.permute.xlu0 %1891
      %1893 = vrot.lane.b32.xlu0 %v1883, 19
      %v1894 = vpop.permute.xlu0 %1893
      %v1895 = vsel %vm1884, %v1890, %v1892
      %v1896 = vsel %vm1884, %v1892, %v1894
      %vm1900 = vcmask 1047704
      %1901 = vst.msk [vmem:[#allocation2] sm:$0xff] %vm1900, %v1890
      %1902 = vst [vmem:[#allocation2 + $0x8] sm:$0xff] %v1895
      %vm1903 = vcmask 416768
      %1904 = vst.msk [vmem:[#allocation2 + $0x10] sm:$0xff] %vm1903, %v1896
      %vm1905 = vcmask 589208
      %1906 = vst.msk [vmem:[#allocation2 + $0x10] sm:$0xff] %vm1905, 0.0
      %v1907 = vld [vmem:[%s3] sm:$0xff]
      %v1908 = vld [vmem:[#allocation2] sm:$0xff]
      %v1909 = vld [vmem:[#allocation2 + $0x8] sm:$0xff]
      %v1910 = vld [vmem:[#allocation2 + $0x10] sm:$0xff]
      %s1911 = scalar_lea.vmem %s3, 8
      %v1912 = vld [vmem:[%s1911] sm:$0xff]
      %1916 = vrot.lane.b32.xlu0 %v1908, 127
      %v1917 = vpop.permute.xlu0 %1916
      %1918 = vrot.lane.b32.xlu0 %v1909, 127
      %v1919 = vpop.permute.xlu0 %1918
      %1920 = vrot.lane.b32.xlu0 %v1910, 127
      %v1921 = vpop.permute.xlu0 %1920
      %v1922 = vsel %vm358, %v1917, %v1919
      %v1923 = vsel %vm358, %v1919, %v1921
      %vm1927 = vcmask 64512
      %v1929 = vsel %vm1927, %v1912, 0
      %1931 = vmatprep.subr.mxu0 %v1923
      %1932 = vmatpush1.msra.mxu0 %v1922
      %1933 = vmatprep.subr.mxu0 0.0
      %1934 = vmatpush1.msra.mxu0 0.0
      %1935 = vmatprep.subr.mxu0 0.0
      %1936 = vmatpush1.msra.mxu0 0.0
      %1937 = vmatprep.subr.mxu0 0.0
      %1938 = vmatpush1.msra.mxu0 0.0
      %1939 = vmatprep.subr.mxu0 0.0
      %1940 = vmatpush1.msra.mxu0 0.0
      %1941 = vmatprep.subr.mxu0 0.0
      %1942 = vmatpush1.msra.mxu0 0.0
      %1943 = vmatprep.subr.mxu0 0.0
      %1944 = vmatpush1.msra.mxu0 0.0
      %1945 = vmatprep.subr.mxu0 0.0
      %1946 = vmatpush1.msra.mxu0 0.0
      %1947 = vmatprep.subr.mxu0 0.0
      %1948 = vmatpush1.msra.mxu0 0.0
      %1949 = vmatprep.subr.mxu0 0.0
      %1950 = vmatpush1.msra.mxu0 0.0
      %1951 = vmatprep.subr.mxu0 0.0
      %1952 = vmatpush1.msra.mxu0 0.0
      %1953 = vmatprep.subr.mxu0 0.0
      %1954 = vmatpush1.msra.mxu0 0.0
      %1955 = vmatprep.subr.mxu0 0.0
      %1956 = vmatpush1.msra.mxu0 0.0
      %1957 = vmatprep.subr.mxu0 0.0
      %1958 = vmatpush1.msra.mxu0 0.0
      %1959 = vmatprep.subr.mxu0 0.0
      %1960 = vmatpush1.msra.mxu0 0.0
      %1961 = vmatprep.subr.mxu0 0.0
      %1962 = vmatpush1.msra.mxu0 0.0
      %1963 = vmatprep.subr.mxu0 0.0
      %1964 = vmatpush1.msra.mxu0 0.0
      %1965 = vmatprep.subr.mxu0 0.0
      %1966 = vmatpush1.msra.mxu0 0.0
      %1967 = vmatprep.subr.mxu0 0.0
      %1968 = vmatpush1.msra.mxu0 0.0
      %1969 = vmatprep.subr.mxu0 0.0
      %1970 = vmatpush1.msra.mxu0 0.0
      %1971 = vmatprep.subr.mxu0 0.0
      %1972 = vmatpush1.msra.mxu0 0.0
      %1973 = vmatprep.subr.mxu0 0.0
      %1974 = vmatpush1.msra.mxu0 0.0
      %1975 = vmatprep.subr.mxu0 0.0
      %1976 = vmatpush1.msra.mxu0 0.0
      %1977 = vmatprep.subr.mxu0 0.0
      %1978 = vmatpush1.msra.mxu0 0.0
      %1979 = vmatprep.subr.mxu0 0.0
      %1980 = vmatpush1.msra.mxu0 0.0
      %1981 = vmatprep.subr.mxu0 0.0
      %1982 = vmatpush1.msra.mxu0 0.0
      %1983 = vmatprep.subr.mxu0 0.0
      %1984 = vmatpush1.msra.mxu0 0.0
      %1985 = vmatprep.subr.mxu0 0.0
      %1986 = vmatpush1.msra.mxu0 0.0
      %1987 = vmatprep.subr.mxu0 0.0
      %1988 = vmatpush1.msra.mxu0 0.0
      %1989 = vmatprep.subr.mxu0 0.0
      %1990 = vmatpush1.msra.mxu0 0.0
      %1991 = vmatprep.subr.mxu0 0.0
      %1992 = vmatpush1.msra.mxu0 0.0
      %1993 = vmatprep.subr.mxu0 0.0
      %1994 = vmatpush1.msra.mxu0 0.0
      %1995 = vmatprep.mubr.f32.mxu0 0.0
      %1996 = vmatmul.mubr.f32.gmra.mrb[0].mxu0 %v1929
      %v1997 = vpop.f32.mrb[0].mxu0
      %v1998 = vadd.f32 0.0, %v1997
      %v1999 = vpop.f32.mrb[0].mxu0
      %v2000 = vadd.f32 0.0, %v1999
      %2001 = vdwg.mxu0
      %2002 = vmatprep.subr.mxu0 0.0
      %2003 = vmatpush1.msra.mxu0 %v1921
      %2004 = vmatprep.subr.mxu0 0.0
      %2005 = vmatpush1.msra.mxu0 0.0
      %2006 = vmatprep.subr.mxu0 0.0
      %2007 = vmatpush1.msra.mxu0 0.0
      %2008 = vmatprep.subr.mxu0 0.0
      %2009 = vmatpush1.msra.mxu0 0.0
      %2010 = vmatprep.subr.mxu0 0.0
      %2011 = vmatpush1.msra.mxu0 0.0
      %2012 = vmatprep.subr.mxu0 0.0
      %2013 = vmatpush1.msra.mxu0 0.0
      %2014 = vmatprep.subr.mxu0 0.0
      %2015 = vmatpush1.msra.mxu0 0.0
      %2016 = vmatprep.subr.mxu0 0.0
      %2017 = vmatpush1.msra.mxu0 0.0
      %2018 = vmatprep.subr.mxu0 0.0
      %2019 = vmatpush1.msra.mxu0 0.0
      %2020 = vmatprep.subr.mxu0 0.0
      %2021 = vmatpush1.msra.mxu0 0.0
      %2022 = vmatprep.subr.mxu0 0.0
      %2023 = vmatpush1.msra.mxu0 0.0
      %2024 = vmatprep.subr.mxu0 0.0
      %2025 = vmatpush1.msra.mxu0 0.0
      %2026 = vmatprep.subr.mxu0 0.0
      %2027 = vmatpush1.msra.mxu0 0.0
      %2028 = vmatprep.subr.mxu0 0.0
      %2029 = vmatpush1.msra.mxu0 0.0
      %2030 = vmatprep.subr.mxu0 0.0
      %2031 = vmatpush1.msra.mxu0 0.0
      %2032 = vmatprep.subr.mxu0 0.0
      %2033 = vmatpush1.msra.mxu0 0.0
      %2034 = vmatprep.subr.mxu0 0.0
      %2035 = vmatpush1.msra.mxu0 0.0
      %2036 = vmatprep.subr.mxu0 0.0
      %2037 = vmatpush1.msra.mxu0 0.0
      %2038 = vmatprep.subr.mxu0 0.0
      %2039 = vmatpush1.msra.mxu0 0.0
      %2040 = vmatprep.subr.mxu0 0.0
      %2041 = vmatpush1.msra.mxu0 0.0
      %2042 = vmatprep.subr.mxu0 0.0
      %2043 = vmatpush1.msra.mxu0 0.0
      %2044 = vmatprep.subr.mxu0 0.0
      %2045 = vmatpush1.msra.mxu0 0.0
      %2046 = vmatprep.subr.mxu0 0.0
      %2047 = vmatpush1.msra.mxu0 0.0
      %2048 = vmatprep.subr.mxu0 0.0
      %2049 = vmatpush1.msra.mxu0 0.0
      %2050 = vmatprep.subr.mxu0 0.0
      %2051 = vmatpush1.msra.mxu0 0.0
      %2052 = vmatprep.subr.mxu0 0.0
      %2053 = vmatpush1.msra.mxu0 0.0
      %2054 = vmatprep.subr.mxu0 0.0
      %2055 = vmatpush1.msra.mxu0 0.0
      %2056 = vmatprep.subr.mxu0 0.0
      %2057 = vmatpush1.msra.mxu0 0.0
      %2058 = vmatprep.subr.mxu0 0.0
      %2059 = vmatpush1.msra.mxu0 0.0
      %2060 = vmatprep.subr.mxu0 0.0
      %2061 = vmatpush1.msra.mxu0 0.0
      %2062 = vmatprep.subr.mxu0 0.0
      %2063 = vmatpush1.msra.mxu0 0.0
      %2064 = vmatprep.subr.mxu0 0.0
      %2065 = vmatpush1.msra.mxu0 0.0
      %2066 = vmatprep.mubr.f32.mxu0 0.0
      %2067 = vmatmul.mubr.f32.gmra.mrb[0].mxu0 %v1929
      %v2068 = vpop.f32.mrb[0].mxu0
      %v2069 = vadd.f32 0.0, %v2068
      %v2070 = vpop.f32.mrb[0].mxu0
      %2071 = vdwg.mxu0
      %v2073 = vsel %vm1927, %v1907, 0
      %2075 = vmatprep.subr.mxu0 %v1909
      %2076 = vmatpush1.msra.mxu0 %v1908
      %2077 = vmatprep.subr.mxu0 0.0
      %2078 = vmatpush1.msra.mxu0 0.0
      %2079 = vmatprep.subr.mxu0 0.0
      %2080 = vmatpush1.msra.mxu0 0.0
      %2081 = vmatprep.subr.mxu0 0.0
      %2082 = vmatpush1.msra.mxu0 0.0
      %2083 = vmatprep.subr.mxu0 0.0
      %2084 = vmatpush1.msra.mxu0 0.0
      %2085 = vmatprep.subr.mxu0 0.0
      %2086 = vmatpush1.msra.mxu0 0.0
      %2087 = vmatprep.subr.mxu0 0.0
      %2088 = vmatpush1.msra.mxu0 0.0
      %2089 = vmatprep.subr.mxu0 0.0
      %2090 = vmatpush1.msra.mxu0 0.0
      %2091 = vmatprep.subr.mxu0 0.0
      %2092 = vmatpush1.msra.mxu0 0.0
      %2093 = vmatprep.subr.mxu0 0.0
      %2094 = vmatpush1.msra.mxu0 0.0
      %2095 = vmatprep.subr.mxu0 0.0
      %2096 = vmatpush1.msra.mxu0 0.0
      %2097 = vmatprep.subr.mxu0 0.0
      %2098 = vmatpush1.msra.mxu0 0.0
      %2099 = vmatprep.subr.mxu0 0.0
      %2100 = vmatpush1.msra.mxu0 0.0
      %2101 = vmatprep.subr.mxu0 0.0
      %2102 = vmatpush1.msra.mxu0 0.0
      %2103 = vmatprep.subr.mxu0 0.0
      %2104 = vmatpush1.msra.mxu0 0.0
      %2105 = vmatprep.subr.mxu0 0.0
      %2106 = vmatpush1.msra.mxu0 0.0
      %2107 = vmatprep.subr.mxu0 0.0
      %2108 = vmatpush1.msra.mxu0 0.0
      %2109 = vmatprep.subr.mxu0 0.0
      %2110 = vmatpush1.msra.mxu0 0.0
      %2111 = vmatprep.subr.mxu0 0.0
      %2112 = vmatpush1.msra.mxu0 0.0
      %2113 = vmatprep.subr.mxu0 0.0
      %2114 = vmatpush1.msra.mxu0 0.0
      %2115 = vmatprep.subr.mxu0 0.0
      %2116 = vmatpush1.msra.mxu0 0.0
      %2117 = vmatprep.subr.mxu0 0.0
      %2118 = vmatpush1.msra.mxu0 0.0
      %2119 = vmatprep.subr.mxu0 0.0
      %2120 = vmatpush1.msra.mxu0 0.0
      %2121 = vmatprep.subr.mxu0 0.0
      %2122 = vmatpush1.msra.mxu0 0.0
      %2123 = vmatprep.subr.mxu0 0.0
      %2124 = vmatpush1.msra.mxu0 0.0
      %2125 = vmatprep.subr.mxu0 0.0
      %2126 = vmatpush1.msra.mxu0 0.0
      %2127 = vmatprep.subr.mxu0 0.0
      %2128 = vmatpush1.msra.mxu0 0.0
      %2129 = vmatprep.subr.mxu0 0.0
      %2130 = vmatpush1.msra.mxu0 0.0
      %2131 = vmatprep.subr.mxu0 0.0
      %2132 = vmatpush1.msra.mxu0 0.0
      %2133 = vmatprep.subr.mxu0 0.0
      %2134 = vmatpush1.msra.mxu0 0.0
      %2135 = vmatprep.subr.mxu0 0.0
      %2136 = vmatpush1.msra.mxu0 0.0
      %2137 = vmatprep.subr.mxu0 0.0
      %2138 = vmatpush1.msra.mxu0 0.0
      %2139 = vmatprep.mubr.f32.mxu0 0.0
      %2140 = vmatmul.mubr.f32.gmra.mrb[0].mxu0 %v2073
      %v2141 = vpop.f32.mrb[0].mxu0
      %v2142 = vadd.f32 %v1998, %v2141
      %v2143 = vpop.f32.mrb[0].mxu0
      %v2144 = vadd.f32 %v2000, %v2143
      %2145 = vdwg.mxu0
      %2146 = vmatprep.subr.mxu0 0.0
      %2147 = vmatpush1.msra.mxu0 %v1910
      %2148 = vmatprep.subr.mxu0 0.0
      %2149 = vmatpush1.msra.mxu0 0.0
      %2150 = vmatprep.subr.mxu0 0.0
      %2151 = vmatpush1.msra.mxu0 0.0
      %2152 = vmatprep.subr.mxu0 0.0
      %2153 = vmatpush1.msra.mxu0 0.0
      %2154 = vmatprep.subr.mxu0 0.0
      %2155 = vmatpush1.msra.mxu0 0.0
      %2156 = vmatprep.subr.mxu0 0.0
      %2157 = vmatpush1.msra.mxu0 0.0
      %2158 = vmatprep.subr.mxu0 0.0
      %2159 = vmatpush1.msra.mxu0 0.0
      %2160 = vmatprep.subr.mxu0 0.0
      %2161 = vmatpush1.msra.mxu0 0.0
      %2162 = vmatprep.subr.mxu0 0.0
      %2163 = vmatpush1.msra.mxu0 0.0
      %2164 = vmatprep.subr.mxu0 0.0
      %2165 = vmatpush1.msra.mxu0 0.0
      %2166 = vmatprep.subr.mxu0 0.0
      %2167 = vmatpush1.msra.mxu0 0.0
      %2168 = vmatprep.subr.mxu0 0.0
      %2169 = vmatpush1.msra.mxu0 0.0
      %2170 = vmatprep.subr.mxu0 0.0
      %2171 = vmatpush1.msra.mxu0 0.0
      %2172 = vmatprep.subr.mxu0 0.0
      %2173 = vmatpush1.msra.mxu0 0.0
      %2174 = vmatprep.subr.mxu0 0.0
      %2175 = vmatpush1.msra.mxu0 0.0
      %2176 = vmatprep.subr.mxu0 0.0
      %2177 = vmatpush1.msra.mxu0 0.0
      %2178 = vmatprep.subr.mxu0 0.0
      %2179 = vmatpush1.msra.mxu0 0.0
      %2180 = vmatprep.subr.mxu0 0.0
      %2181 = vmatpush1.msra.mxu0 0.0
      %2182 = vmatprep.subr.mxu0 0.0
      %2183 = vmatpush1.msra.mxu0 0.0
      %2184 = vmatprep.subr.mxu0 0.0
      %2185 = vmatpush1.msra.mxu0 0.0
      %2186 = vmatprep.subr.mxu0 0.0
      %2187 = vmatpush1.msra.mxu0 0.0
      %2188 = vmatprep.subr.mxu0 0.0
      %2189 = vmatpush1.msra.mxu0 0.0
      %2190 = vmatprep.subr.mxu0 0.0
      %2191 = vmatpush1.msra.mxu0 0.0
      %2192 = vmatprep.subr.mxu0 0.0
      %2193 = vmatpush1.msra.mxu0 0.0
      %2194 = vmatprep.subr.mxu0 0.0
      %2195 = vmatpush1.msra.mxu0 0.0
      %2196 = vmatprep.subr.mxu0 0.0
      %2197 = vmatpush1.msra.mxu0 0.0
      %2198 = vmatprep.subr.mxu0 0.0
      %2199 = vmatpush1.msra.mxu0 0.0
      %2200 = vmatprep.subr.mxu0 0.0
      %2201 = vmatpush1.msra.mxu0 0.0
      %2202 = vmatprep.subr.mxu0 0.0
      %2203 = vmatpush1.msra.mxu0 0.0
      %2204 = vmatprep.subr.mxu0 0.0
      %2205 = vmatpush1.msra.mxu0 0.0
      %2206 = vmatprep.subr.mxu0 0.0
      %2207 = vmatpush1.msra.mxu0 0.0
      %2208 = vmatprep.subr.mxu0 0.0
      %2209 = vmatpush1.msra.mxu0 0.0
      %2210 = vmatprep.mubr.f32.mxu0 0.0
      %2211 = vmatmul.mubr.f32.gmra.mrb[0].mxu0 %v2073
      %v2212 = vpop.f32.mrb[0].mxu0
      %v2213 = vadd.f32 %v2069, %v2212
      %v2214 = vpop.f32.mrb[0].mxu0
      %2215 = vdwg.mxu0
      %s2216 = scalar_lea.vmem %s3, 16
      %v2217 = vld [vmem:[%s2216] sm:$0xff]
      %2218 = vrot.lane.b32.xlu0 %v1908, 126
      %v2219 = vpop.permute.xlu0 %2218
      %2220 = vrot.lane.b32.xlu0 %v1909, 126
      %v2221 = vpop.permute.xlu0 %2220
      %2222 = vrot.lane.b32.xlu0 %v1910, 126
      %v2223 = vpop.permute.xlu0 %2222
      %v2224 = vsel %vm676, %v2219, %v2221
      %v2225 = vsel %vm676, %v2221, %v2223
      %v2230 = vsel %vm1927, %v2217, 0
      %2232 = vmatprep.subr.mxu0 %v2225
      %2233 = vmatpush1.msra.mxu0 %v2224
      %2234 = vmatprep.subr.mxu0 0.0
      %2235 = vmatpush1.msra.mxu0 0.0
      %2236 = vmatprep.subr.mxu0 0.0
      %2237 = vmatpush1.msra.mxu0 0.0
      %2238 = vmatprep.subr.mxu0 0.0
      %2239 = vmatpush1.msra.mxu0 0.0
      %2240 = vmatprep.subr.mxu0 0.0
      %2241 = vmatpush1.msra.mxu0 0.0
      %2242 = vmatprep.subr.mxu0 0.0
      %2243 = vmatpush1.msra.mxu0 0.0
      %2244 = vmatprep.subr.mxu0 0.0
      %2245 = vmatpush1.msra.mxu0 0.0
      %2246 = vmatprep.subr.mxu0 0.0
      %2247 = vmatpush1.msra.mxu0 0.0
      %2248 = vmatprep.subr.mxu0 0.0
      %2249 = vmatpush1.msra.mxu0 0.0
      %2250 = vmatprep.subr.mxu0 0.0
      %2251 = vmatpush1.msra.mxu0 0.0
      %2252 = vmatprep.subr.mxu0 0.0
      %2253 = vmatpush1.msra.mxu0 0.0
      %2254 = vmatprep.subr.mxu0 0.0
      %2255 = vmatpush1.msra.mxu0 0.0
      %2256 = vmatprep.subr.mxu0 0.0
      %2257 = vmatpush1.msra.mxu0 0.0
      %2258 = vmatprep.subr.mxu0 0.0
      %2259 = vmatpush1.msra.mxu0 0.0
      %2260 = vmatprep.subr.mxu0 0.0
      %2261 = vmatpush1.msra.mxu0 0.0
      %2262 = vmatprep.subr.mxu0 0.0
      %2263 = vmatpush1.msra.mxu0 0.0
      %2264 = vmatprep.subr.mxu0 0.0
      %2265 = vmatpush1.msra.mxu0 0.0
      %2266 = vmatprep.subr.mxu0 0.0
      %2267 = vmatpush1.msra.mxu0 0.0
      %2268 = vmatprep.subr.mxu0 0.0
      %2269 = vmatpush1.msra.mxu0 0.0
      %2270 = vmatprep.subr.mxu0 0.0
      %2271 = vmatpush1.msra.mxu0 0.0
      %2272 = vmatprep.subr.mxu0 0.0
      %2273 = vmatpush1.msra.mxu0 0.0
      %2274 = vmatprep.subr.mxu0 0.0
      %2275 = vmatpush1.msra.mxu0 0.0
      %2276 = vmatprep.subr.mxu0 0.0
      %2277 = vmatpush1.msra.mxu0 0.0
      %2278 = vmatprep.subr.mxu0 0.0
      %2279 = vmatpush1.msra.mxu0 0.0
      %2280 = vmatprep.subr.mxu0 0.0
      %2281 = vmatpush1.msra.mxu0 0.0
      %2282 = vmatprep.subr.mxu0 0.0
      %2283 = vmatpush1.msra.mxu0 0.0
      %2284 = vmatprep.subr.mxu0 0.0
      %2285 = vmatpush1.msra.mxu0 0.0
      %2286 = vmatprep.subr.mxu0 0.0
      %2287 = vmatpush1.msra.mxu0 0.0
      %2288 = vmatprep.subr.mxu0 0.0
      %2289 = vmatpush1.msra.mxu0 0.0
      %2290 = vmatprep.subr.mxu0 0.0
      %2291 = vmatpush1.msra.mxu0 0.0
      %2292 = vmatprep.subr.mxu0 0.0
      %2293 = vmatpush1.msra.mxu0 0.0
      %2294 = vmatprep.subr.mxu0 0.0
      %2295 = vmatpush1.msra.mxu0 0.0
      %2296 = vmatprep.mubr.f32.mxu0 0.0
      %2297 = vmatmul.mubr.f32.gmra.mrb[0].mxu0 %v2230
      %v2298 = vpop.f32.mrb[0].mxu0
      %v2299 = vadd.f32 0.0, %v2298
      %v2300 = vpop.f32.mrb[0].mxu0
      %v2301 = vadd.f32 0.0, %v2300
      %2302 = vdwg.mxu0
      %2303 = vmatprep.subr.mxu0 0.0
      %2304 = vmatpush1.msra.mxu0 %v2223
      %2305 = vmatprep.subr.mxu0 0.0
      %2306 = vmatpush1.msra.mxu0 0.0
      %2307 = vmatprep.subr.mxu0 0.0
      %2308 = vmatpush1.msra.mxu0 0.0
      %2309 = vmatprep.subr.mxu0 0.0
      %2310 = vmatpush1.msra.mxu0 0.0
      %2311 = vmatprep.subr.mxu0 0.0
      %2312 = vmatpush1.msra.mxu0 0.0
      %2313 = vmatprep.subr.mxu0 0.0
      %2314 = vmatpush1.msra.mxu0 0.0
      %2315 = vmatprep.subr.mxu0 0.0
      %2316 = vmatpush1.msra.mxu0 0.0
      %2317 = vmatprep.subr.mxu0 0.0
      %2318 = vmatpush1.msra.mxu0 0.0
      %2319 = vmatprep.subr.mxu0 0.0
      %2320 = vmatpush1.msra.mxu0 0.0
      %2321 = vmatprep.subr.mxu0 0.0
      %2322 = vmatpush1.msra.mxu0 0.0
      %2323 = vmatprep.subr.mxu0 0.0
      %2324 = vmatpush1.msra.mxu0 0.0
      %2325 = vmatprep.subr.mxu0 0.0
      %2326 = vmatpush1.msra.mxu0 0.0
      %2327 = vmatprep.subr.mxu0 0.0
      %2328 = vmatpush1.msra.mxu0 0.0
      %2329 = vmatprep.subr.mxu0 0.0
      %2330 = vmatpush1.msra.mxu0 0.0
      %2331 = vmatprep.subr.mxu0 0.0
      %2332 = vmatpush1.msra.mxu0 0.0
      %2333 = vmatprep.subr.mxu0 0.0
      %2334 = vmatpush1.msra.mxu0 0.0
      %2335 = vmatprep.subr.mxu0 0.0
      %2336 = vmatpush1.msra.mxu0 0.0
      %2337 = vmatprep.subr.mxu0 0.0
      %2338 = vmatpush1.msra.mxu0 0.0
      %2339 = vmatprep.subr.mxu0 0.0
      %2340 = vmatpush1.msra.mxu0 0.0
      %2341 = vmatprep.subr.mxu0 0.0
      %2342 = vmatpush1.msra.mxu0 0.0
      %2343 = vmatprep.subr.mxu0 0.0
      %2344 = vmatpush1.msra.mxu0 0.0
      %2345 = vmatprep.subr.mxu0 0.0
      %2346 = vmatpush1.msra.mxu0 0.0
      %2347 = vmatprep.subr.mxu0 0.0
      %2348 = vmatpush1.msra.mxu0 0.0
      %2349 = vmatprep.subr.mxu0 0.0
      %2350 = vmatpush1.msra.mxu0 0.0
      %2351 = vmatprep.subr.mxu0 0.0
      %2352 = vmatpush1.msra.mxu0 0.0
      %2353 = vmatprep.subr.mxu0 0.0
      %2354 = vmatpush1.msra.mxu0 0.0
      %2355 = vmatprep.subr.mxu0 0.0
      %2356 = vmatpush1.msra.mxu0 0.0
      %2357 = vmatprep.subr.mxu0 0.0
      %2358 = vmatpush1.msra.mxu0 0.0
      %2359 = vmatprep.subr.mxu0 0.0
      %2360 = vmatpush1.msra.mxu0 0.0
      %2361 = vmatprep.subr.mxu0 0.0
      %2362 = vmatpush1.msra.mxu0 0.0
      %2363 = vmatprep.subr.mxu0 0.0
      %2364 = vmatpush1.msra.mxu0 0.0
      %2365 = vmatprep.subr.mxu0 0.0
      %2366 = vmatpush1.msra.mxu0 0.0
      %2367 = vmatprep.mubr.f32.mxu0 0.0
      %2368 = vmatmul.mubr.f32.gmra.mrb[0].mxu0 %v2230
      %v2369 = vpop.f32.mrb[0].mxu0
      %v2370 = vadd.f32 0.0, %v2369
      %v2371 = vpop.f32.mrb[0].mxu0
      %2372 = vdwg.mxu0
      %v2373 = vadd.f32 %v2142, %v2299
      %v2374 = vadd.f32 %v2144, %v2301
      %v2375 = vadd.f32 %v2213, %v2370
      %s2376 = scalar_lea.vmem %s3, 24
      %v2377 = vld [vmem:[%s2376] sm:$0xff]
      %2378 = vrot.lane.b32.xlu0 %v1908, 110
      %v2379 = vpop.permute.xlu0 %2378
      %2380 = vrot.lane.b32.xlu0 %v1909, 110
      %v2381 = vpop.permute.xlu0 %2380
      %2382 = vrot.lane.b32.xlu0 %v1910, 110
      %v2383 = vpop.permute.xlu0 %2382
      %v2384 = vsel %vm845, %v2379, %v2381
      %v2385 = vsel %vm845, %v2381, %v2383
      %v2390 = vsel %vm1927, %v2377, 0
      %2392 = vmatprep.subr.mxu0 %v2385
      %2393 = vmatpush1.msra.mxu0 %v2384
      %2394 = vmatprep.subr.mxu0 0.0
      %2395 = vmatpush1.msra.mxu0 0.0
      %2396 = vmatprep.subr.mxu0 0.0
      %2397 = vmatpush1.msra.mxu0 0.0
      %2398 = vmatprep.subr.mxu0 0.0
      %2399 = vmatpush1.msra.mxu0 0.0
      %2400 = vmatprep.subr.mxu0 0.0
      %2401 = vmatpush1.msra.mxu0 0.0
      %2402 = vmatprep.subr.mxu0 0.0
      %2403 = vmatpush1.msra.mxu0 0.0
      %2404 = vmatprep.subr.mxu0 0.0
      %2405 = vmatpush1.msra.mxu0 0.0
      %2406 = vmatprep.subr.mxu0 0.0
      %2407 = vmatpush1.msra.mxu0 0.0
      %2408 = vmatprep.subr.mxu0 0.0
      %2409 = vmatpush1.msra.mxu0 0.0
      %2410 = vmatprep.subr.mxu0 0.0
      %2411 = vmatpush1.msra.mxu0 0.0
      %2412 = vmatprep.subr.mxu0 0.0
      %2413 = vmatpush1.msra.mxu0 0.0
      %2414 = vmatprep.subr.mxu0 0.0
      %2415 = vmatpush1.msra.mxu0 0.0
      %2416 = vmatprep.subr.mxu0 0.0
      %2417 = vmatpush1.msra.mxu0 0.0
      %2418 = vmatprep.subr.mxu0 0.0
      %2419 = vmatpush1.msra.mxu0 0.0
      %2420 = vmatprep.subr.mxu0 0.0
      %2421 = vmatpush1.msra.mxu0 0.0
      %2422 = vmatprep.subr.mxu0 0.0
      %2423 = vmatpush1.msra.mxu0 0.0
      %2424 = vmatprep.subr.mxu0 0.0
      %2425 = vmatpush1.msra.mxu0 0.0
      %2426 = vmatprep.subr.mxu0 0.0
      %2427 = vmatpush1.msra.mxu0 0.0
      %2428 = vmatprep.subr.mxu0 0.0
      %2429 = vmatpush1.msra.mxu0 0.0
      %2430 = vmatprep.subr.mxu0 0.0
      %2431 = vmatpush1.msra.mxu0 0.0
      %2432 = vmatprep.subr.mxu0 0.0
      %2433 = vmatpush1.msra.mxu0 0.0
      %2434 = vmatprep.subr.mxu0 0.0
      %2435 = vmatpush1.msra.mxu0 0.0
      %2436 = vmatprep.subr.mxu0 0.0
      %2437 = vmatpush1.msra.mxu0 0.0
      %2438 = vmatprep.subr.mxu0 0.0
      %2439 = vmatpush1.msra.mxu0 0.0
      %2440 = vmatprep.subr.mxu0 0.0
      %2441 = vmatpush1.msra.mxu0 0.0
      %2442 = vmatprep.subr.mxu0 0.0
      %2443 = vmatpush1.msra.mxu0 0.0
      %2444 = vmatprep.subr.mxu0 0.0
      %2445 = vmatpush1.msra.mxu0 0.0
      %2446 = vmatprep.subr.mxu0 0.0
      %2447 = vmatpush1.msra.mxu0 0.0
      %2448 = vmatprep.subr.mxu0 0.0
      %2449 = vmatpush1.msra.mxu0 0.0
      %2450 = vmatprep.subr.mxu0 0.0
      %2451 = vmatpush1.msra.mxu0 0.0
      %2452 = vmatprep.subr.mxu0 0.0
      %2453 = vmatpush1.msra.mxu0 0.0
      %2454 = vmatprep.subr.mxu0 0.0
      %2455 = vmatpush1.msra.mxu0 0.0
      %2456 = vmatprep.mubr.f32.mxu0 0.0
      %2457 = vmatmul.mubr.f32.gmra.mrb[0].mxu0 %v2390
      %v2458 = vpop.f32.mrb[0].mxu0
      %v2459 = vadd.f32 0.0, %v2458
      %v2460 = vpop.f32.mrb[0].mxu0
      %v2461 = vadd.f32 0.0, %v2460
      %2462 = vdwg.mxu0
      %2463 = vmatprep.subr.mxu0 0.0
      %2464 = vmatpush1.msra.mxu0 %v2383
      %2465 = vmatprep.subr.mxu0 0.0
      %2466 = vmatpush1.msra.mxu0 0.0
      %2467 = vmatprep.subr.mxu0 0.0
      %2468 = vmatpush1.msra.mxu0 0.0
      %2469 = vmatprep.subr.mxu0 0.0
      %2470 = vmatpush1.msra.mxu0 0.0
      %2471 = vmatprep.subr.mxu0 0.0
      %2472 = vmatpush1.msra.mxu0 0.0
      %2473 = vmatprep.subr.mxu0 0.0
      %2474 = vmatpush1.msra.mxu0 0.0
      %2475 = vmatprep.subr.mxu0 0.0
      %2476 = vmatpush1.msra.mxu0 0.0
      %2477 = vmatprep.subr.mxu0 0.0
      %2478 = vmatpush1.msra.mxu0 0.0
      %2479 = vmatprep.subr.mxu0 0.0
      %2480 = vmatpush1.msra.mxu0 0.0
      %2481 = vmatprep.subr.mxu0 0.0
      %2482 = vmatpush1.msra.mxu0 0.0
      %2483 = vmatprep.subr.mxu0 0.0
      %2484 = vmatpush1.msra.mxu0 0.0
      %2485 = vmatprep.subr.mxu0 0.0
      %2486 = vmatpush1.msra.mxu0 0.0
      %2487 = vmatprep.subr.mxu0 0.0
      %2488 = vmatpush1.msra.mxu0 0.0
      %2489 = vmatprep.subr.mxu0 0.0
      %2490 = vmatpush1.msra.mxu0 0.0
      %2491 = vmatprep.subr.mxu0 0.0
      %2492 = vmatpush1.msra.mxu0 0.0
      %2493 = vmatprep.subr.mxu0 0.0
      %2494 = vmatpush1.msra.mxu0 0.0
      %2495 = vmatprep.subr.mxu0 0.0
      %2496 = vmatpush1.msra.mxu0 0.0
      %2497 = vmatprep.subr.mxu0 0.0
      %2498 = vmatpush1.msra.mxu0 0.0
      %2499 = vmatprep.subr.mxu0 0.0
      %2500 = vmatpush1.msra.mxu0 0.0
      %2501 = vmatprep.subr.mxu0 0.0
      %2502 = vmatpush1.msra.mxu0 0.0
      %2503 = vmatprep.subr.mxu0 0.0
      %2504 = vmatpush1.msra.mxu0 0.0
      %2505 = vmatprep.subr.mxu0 0.0
      %2506 = vmatpush1.msra.mxu0 0.0
      %2507 = vmatprep.subr.mxu0 0.0
      %2508 = vmatpush1.msra.mxu0 0.0
      %2509 = vmatprep.subr.mxu0 0.0
      %2510 = vmatpush1.msra.mxu0 0.0
      %2511 = vmatprep.subr.mxu0 0.0
      %2512 = vmatpush1.msra.mxu0 0.0
      %2513 = vmatprep.subr.mxu0 0.0
      %2514 = vmatpush1.msra.mxu0 0.0
      %2515 = vmatprep.subr.mxu0 0.0
      %2516 = vmatpush1.msra.mxu0 0.0
      %2517 = vmatprep.subr.mxu0 0.0
      %2518 = vmatpush1.msra.mxu0 0.0
      %2519 = vmatprep.subr.mxu0 0.0
      %2520 = vmatpush1.msra.mxu0 0.0
      %2521 = vmatprep.subr.mxu0 0.0
      %2522 = vmatpush1.msra.mxu0 0.0
      %2523 = vmatprep.subr.mxu0 0.0
      %2524 = vmatpush1.msra.mxu0 0.0
      %2525 = vmatprep.subr.mxu0 0.0
      %2526 = vmatpush1.msra.mxu0 0.0
      %2527 = vmatprep.mubr.f32.mxu0 0.0
      %2528 = vmatmul.mubr.f32.gmra.mrb[0].mxu0 %v2390
      %v2529 = vpop.f32.mrb[0].mxu0
      %v2530 = vadd.f32 0.0, %v2529
      %v2531 = vpop.f32.mrb[0].mxu0
      %2532 = vdwg.mxu0
      %v2533 = vadd.f32 %v2373, %v2459
      %v2534 = vadd.f32 %v2374, %v2461
      %v2535 = vadd.f32 %v2375, %v2530
      %s2536 = scalar_lea.vmem %s3, 32
      %v2537 = vld [vmem:[%s2536] sm:$0xff]
      %2538 = vrot.lane.b32.xlu0 %v1908, 109
      %v2539 = vpop.permute.xlu0 %2538
      %2540 = vrot.lane.b32.xlu0 %v1909, 109
      %v2541 = vpop.permute.xlu0 %2540
      %2542 = vrot.lane.b32.xlu0 %v1910, 109
      %v2543 = vpop.permute.xlu0 %2542
      %v2544 = vsel %vm1014, %v2539, %v2541
      %v2545 = vsel %vm1014, %v2541, %v2543
      %v2550 = vsel %vm1927, %v2537, 0
      %2552 = vmatprep.subr.mxu0 %v2545
      %2553 = vmatpush1.msra.mxu0 %v2544
      %2554 = vmatprep.subr.mxu0 0.0
      %2555 = vmatpush1.msra.mxu0 0.0
      %2556 = vmatprep.subr.mxu0 0.0
      %2557 = vmatpush1.msra.mxu0 0.0
      %2558 = vmatprep.subr.mxu0 0.0
      %2559 = vmatpush1.msra.mxu0 0.0
      %2560 = vmatprep.subr.mxu0 0.0
      %2561 = vmatpush1.msra.mxu0 0.0
      %2562 = vmatprep.subr.mxu0 0.0
      %2563 = vmatpush1.msra.mxu0 0.0
      %2564 = vmatprep.subr.mxu0 0.0
      %2565 = vmatpush1.msra.mxu0 0.0
      %2566 = vmatprep.subr.mxu0 0.0
      %2567 = vmatpush1.msra.mxu0 0.0
      %2568 = vmatprep.subr.mxu0 0.0
      %2569 = vmatpush1.msra.mxu0 0.0
      %2570 = vmatprep.subr.mxu0 0.0
      %2571 = vmatpush1.msra.mxu0 0.0
      %2572 = vmatprep.subr.mxu0 0.0
      %2573 = vmatpush1.msra.mxu0 0.0
      %2574 = vmatprep.subr.mxu0 0.0
      %2575 = vmatpush1.msra.mxu0 0.0
      %2576 = vmatprep.subr.mxu0 0.0
      %2577 = vmatpush1.msra.mxu0 0.0
      %2578 = vmatprep.subr.mxu0 0.0
      %2579 = vmatpush1.msra.mxu0 0.0
      %2580 = vmatprep.subr.mxu0 0.0
      %2581 = vmatpush1.msra.mxu0 0.0
      %2582 = vmatprep.subr.mxu0 0.0
      %2583 = vmatpush1.msra.mxu0 0.0
      %2584 = vmatprep.subr.mxu0 0.0
      %2585 = vmatpush1.msra.mxu0 0.0
      %2586 = vmatprep.subr.mxu0 0.0
      %2587 = vmatpush1.msra.mxu0 0.0
      %2588 = vmatprep.subr.mxu0 0.0
      %2589 = vmatpush1.msra.mxu0 0.0
      %2590 = vmatprep.subr.mxu0 0.0
      %2591 = vmatpush1.msra.mxu0 0.0
      %2592 = vmatprep.subr.mxu0 0.0
      %2593 = vmatpush1.msra.mxu0 0.0
      %2594 = vmatprep.subr.mxu0 0.0
      %2595 = vmatpush1.msra.mxu0 0.0
      %2596 = vmatprep.subr.mxu0 0.0
      %2597 = vmatpush1.msra.mxu0 0.0
      %2598 = vmatprep.subr.mxu0 0.0
      %2599 = vmatpush1.msra.mxu0 0.0
      %2600 = vmatprep.subr.mxu0 0.0
      %2601 = vmatpush1.msra.mxu0 0.0
      %2602 = vmatprep.subr.mxu0 0.0
      %2603 = vmatpush1.msra.mxu0 0.0
      %2604 = vmatprep.subr.mxu0 0.0
      %2605 = vmatpush1.msra.mxu0 0.0
      %2606 = vmatprep.subr.mxu0 0.0
      %2607 = vmatpush1.msra.mxu0 0.0
      %2608 = vmatprep.subr.mxu0 0.0
      %2609 = vmatpush1.msra.mxu0 0.0
      %2610 = vmatprep.subr.mxu0 0.0
      %2611 = vmatpush1.msra.mxu0 0.0
      %2612 = vmatprep.subr.mxu0 0.0
      %2613 = vmatpush1.msra.mxu0 0.0
      %2614 = vmatprep.subr.mxu0 0.0
      %2615 = vmatpush1.msra.mxu0 0.0
      %2616 = vmatprep.mubr.f32.mxu0 0.0
      %2617 = vmatmul.mubr.f32.gmra.mrb[0].mxu0 %v2550
      %v2618 = vpop.f32.mrb[0].mxu0
      %v2619 = vadd.f32 0.0, %v2618
      %v2620 = vpop.f32.mrb[0].mxu0
      %v2621 = vadd.f32 0.0, %v2620
      %2622 = vdwg.mxu0
      %2623 = vmatprep.subr.mxu0 0.0
      %2624 = vmatpush1.msra.mxu0 %v2543
      %2625 = vmatprep.subr.mxu0 0.0
      %2626 = vmatpush1.msra.mxu0 0.0
      %2627 = vmatprep.subr.mxu0 0.0
      %2628 = vmatpush1.msra.mxu0 0.0
      %2629 = vmatprep.subr.mxu0 0.0
      %2630 = vmatpush1.msra.mxu0 0.0
      %2631 = vmatprep.subr.mxu0 0.0
      %2632 = vmatpush1.msra.mxu0 0.0
      %2633 = vmatprep.subr.mxu0 0.0
      %2634 = vmatpush1.msra.mxu0 0.0
      %2635 = vmatprep.subr.mxu0 0.0
      %2636 = vmatpush1.msra.mxu0 0.0
      %2637 = vmatprep.subr.mxu0 0.0
      %2638 = vmatpush1.msra.mxu0 0.0
      %2639 = vmatprep.subr.mxu0 0.0
      %2640 = vmatpush1.msra.mxu0 0.0
      %2641 = vmatprep.subr.mxu0 0.0
      %2642 = vmatpush1.msra.mxu0 0.0
      %2643 = vmatprep.subr.mxu0 0.0
      %2644 = vmatpush1.msra.mxu0 0.0
      %2645 = vmatprep.subr.mxu0 0.0
      %2646 = vmatpush1.msra.mxu0 0.0
      %2647 = vmatprep.subr.mxu0 0.0
      %2648 = vmatpush1.msra.mxu0 0.0
      %2649 = vmatprep.subr.mxu0 0.0
      %2650 = vmatpush1.msra.mxu0 0.0
      %2651 = vmatprep.subr.mxu0 0.0
      %2652 = vmatpush1.msra.mxu0 0.0
      %2653 = vmatprep.subr.mxu0 0.0
      %2654 = vmatpush1.msra.mxu0 0.0
      %2655 = vmatprep.subr.mxu0 0.0
      %2656 = vmatpush1.msra.mxu0 0.0
      %2657 = vmatprep.subr.mxu0 0.0
      %2658 = vmatpush1.msra.mxu0 0.0
      %2659 = vmatprep.subr.mxu0 0.0
      %2660 = vmatpush1.msra.mxu0 0.0
      %2661 = vmatprep.subr.mxu0 0.0
      %2662 = vmatpush1.msra.mxu0 0.0
      %2663 = vmatprep.subr.mxu0 0.0
      %2664 = vmatpush1.msra.mxu0 0.0
      %2665 = vmatprep.subr.mxu0 0.0
      %2666 = vmatpush1.msra.mxu0 0.0
      %2667 = vmatprep.subr.mxu0 0.0
      %2668 = vmatpush1.msra.mxu0 0.0
      %2669 = vmatprep.subr.mxu0 0.0
      %2670 = vmatpush1.msra.mxu0 0.0
      %2671 = vmatprep.subr.mxu0 0.0
      %2672 = vmatpush1.msra.mxu0 0.0
      %2673 = vmatprep.subr.mxu0 0.0
      %2674 = vmatpush1.msra.mxu0 0.0
      %2675 = vmatprep.subr.mxu0 0.0
      %2676 = vmatpush1.msra.mxu0 0.0
      %2677 = vmatprep.subr.mxu0 0.0
      %2678 = vmatpush1.msra.mxu0 0.0
      %2679 = vmatprep.subr.mxu0 0.0
      %2680 = vmatpush1.msra.mxu0 0.0
      %2681 = vmatprep.subr.mxu0 0.0
      %2682 = vmatpush1.msra.mxu0 0.0
      %2683 = vmatprep.subr.mxu0 0.0
      %2684 = vmatpush1.msra.mxu0 0.0
      %2685 = vmatprep.subr.mxu0 0.0
      %2686 = vmatpush1.msra.mxu0 0.0
      %2687 = vmatprep.mubr.f32.mxu0 0.0
      %2688 = vmatmul.mubr.f32.gmra.mrb[0].mxu0 %v2550
      %v2689 = vpop.f32.mrb[0].mxu0
      %v2690 = vadd.f32 0.0, %v2689
      %v2691 = vpop.f32.mrb[0].mxu0
      %2692 = vdwg.mxu0
      %v2693 = vadd.f32 %v2533, %v2619
      %v2694 = vadd.f32 %v2534, %v2621
      %v2695 = vadd.f32 %v2535, %v2690
      %s2696 = scalar_lea.vmem %s3, 40
      %v2697 = vld [vmem:[%s2696] sm:$0xff]
      %2698 = vrot.lane.b32.xlu0 %v1908, 108
      %v2699 = vpop.permute.xlu0 %2698
      %2700 = vrot.lane.b32.xlu0 %v1909, 108
      %v2701 = vpop.permute.xlu0 %2700
      %2702 = vrot.lane.b32.xlu0 %v1910, 108
      %v2703 = vpop.permute.xlu0 %2702
      %v2704 = vsel %vm1183, %v2699, %v2701
      %v2705 = vsel %vm1183, %v2701, %v2703
      %v2710 = vsel %vm1927, %v2697, 0
      %2712 = vmatprep.subr.mxu0 %v2705
      %2713 = vmatpush1.msra.mxu0 %v2704
      %2714 = vmatprep.subr.mxu0 0.0
      %2715 = vmatpush1.msra.mxu0 0.0
      %2716 = vmatprep.subr.mxu0 0.0
      %2717 = vmatpush1.msra.mxu0 0.0
      %2718 = vmatprep.subr.mxu0 0.0
      %2719 = vmatpush1.msra.mxu0 0.0
      %2720 = vmatprep.subr.mxu0 0.0
      %2721 = vmatpush1.msra.mxu0 0.0
      %2722 = vmatprep.subr.mxu0 0.0
      %2723 = vmatpush1.msra.mxu0 0.0
      %2724 = vmatprep.subr.mxu0 0.0
      %2725 = vmatpush1.msra.mxu0 0.0
      %2726 = vmatprep.subr.mxu0 0.0
      %2727 = vmatpush1.msra.mxu0 0.0
      %2728 = vmatprep.subr.mxu0 0.0
      %2729 = vmatpush1.msra.mxu0 0.0
      %2730 = vmatprep.subr.mxu0 0.0
      %2731 = vmatpush1.msra.mxu0 0.0
      %2732 = vmatprep.subr.mxu0 0.0
      %2733 = vmatpush1.msra.mxu0 0.0
      %2734 = vmatprep.subr.mxu0 0.0
      %2735 = vmatpush1.msra.mxu0 0.0
      %2736 = vmatprep.subr.mxu0 0.0
      %2737 = vmatpush1.msra.mxu0 0.0
      %2738 = vmatprep.subr.mxu0 0.0
      %2739 = vmatpush1.msra.mxu0 0.0
      %2740 = vmatprep.subr.mxu0 0.0
      %2741 = vmatpush1.msra.mxu0 0.0
      %2742 = vmatprep.subr.mxu0 0.0
      %2743 = vmatpush1.msra.mxu0 0.0
      %2744 = vmatprep.subr.mxu0 0.0
      %2745 = vmatpush1.msra.mxu0 0.0
      %2746 = vmatprep.subr.mxu0 0.0
      %2747 = vmatpush1.msra.mxu0 0.0
      %2748 = vmatprep.subr.mxu0 0.0
      %2749 = vmatpush1.msra.mxu0 0.0
      %2750 = vmatprep.subr.mxu0 0.0
      %2751 = vmatpush1.msra.mxu0 0.0
      %2752 = vmatprep.subr.mxu0 0.0
      %2753 = vmatpush1.msra.mxu0 0.0
      %2754 = vmatprep.subr.mxu0 0.0
      %2755 = vmatpush1.msra.mxu0 0.0
      %2756 = vmatprep.subr.mxu0 0.0
      %2757 = vmatpush1.msra.mxu0 0.0
      %2758 = vmatprep.subr.mxu0 0.0
      %2759 = vmatpush1.msra.mxu0 0.0
      %2760 = vmatprep.subr.mxu0 0.0
      %2761 = vmatpush1.msra.mxu0 0.0
      %2762 = vmatprep.subr.mxu0 0.0
      %2763 = vmatpush1.msra.mxu0 0.0
      %2764 = vmatprep.subr.mxu0 0.0
      %2765 = vmatpush1.msra.mxu0 0.0
      %2766 = vmatprep.subr.mxu0 0.0
      %2767 = vmatpush1.msra.mxu0 0.0
      %2768 = vmatprep.subr.mxu0 0.0
      %2769 = vmatpush1.msra.mxu0 0.0
      %2770 = vmatprep.subr.mxu0 0.0
      %2771 = vmatpush1.msra.mxu0 0.0
      %2772 = vmatprep.subr.mxu0 0.0
      %2773 = vmatpush1.msra.mxu0 0.0
      %2774 = vmatprep.subr.mxu0 0.0
      %2775 = vmatpush1.msra.mxu0 0.0
      %2776 = vmatprep.mubr.f32.mxu0 0.0
      %2777 = vmatmul.mubr.f32.gmra.mrb[0].mxu0 %v2710
      %v2778 = vpop.f32.mrb[0].mxu0
      %v2779 = vadd.f32 0.0, %v2778
      %v2780 = vpop.f32.mrb[0].mxu0
      %v2781 = vadd.f32 0.0, %v2780
      %2782 = vdwg.mxu0
      %2783 = vmatprep.subr.mxu0 0.0
      %2784 = vmatpush1.msra.mxu0 %v2703
      %2785 = vmatprep.subr.mxu0 0.0
      %2786 = vmatpush1.msra.mxu0 0.0
      %2787 = vmatprep.subr.mxu0 0.0
      %2788 = vmatpush1.msra.mxu0 0.0
      %2789 = vmatprep.subr.mxu0 0.0
      %2790 = vmatpush1.msra.mxu0 0.0
      %2791 = vmatprep.subr.mxu0 0.0
      %2792 = vmatpush1.msra.mxu0 0.0
      %2793 = vmatprep.subr.mxu0 0.0
      %2794 = vmatpush1.msra.mxu0 0.0
      %2795 = vmatprep.subr.mxu0 0.0
      %2796 = vmatpush1.msra.mxu0 0.0
      %2797 = vmatprep.subr.mxu0 0.0
      %2798 = vmatpush1.msra.mxu0 0.0
      %2799 = vmatprep.subr.mxu0 0.0
      %2800 = vmatpush1.msra.mxu0 0.0
      %2801 = vmatprep.subr.mxu0 0.0
      %2802 = vmatpush1.msra.mxu0 0.0
      %2803 = vmatprep.subr.mxu0 0.0
      %2804 = vmatpush1.msra.mxu0 0.0
      %2805 = vmatprep.subr.mxu0 0.0
      %2806 = vmatpush1.msra.mxu0 0.0
      %2807 = vmatprep.subr.mxu0 0.0
      %2808 = vmatpush1.msra.mxu0 0.0
      %2809 = vmatprep.subr.mxu0 0.0
      %2810 = vmatpush1.msra.mxu0 0.0
      %2811 = vmatprep.subr.mxu0 0.0
      %2812 = vmatpush1.msra.mxu0 0.0
      %2813 = vmatprep.subr.mxu0 0.0
      %2814 = vmatpush1.msra.mxu0 0.0
      %2815 = vmatprep.subr.mxu0 0.0
      %2816 = vmatpush1.msra.mxu0 0.0
      %2817 = vmatprep.subr.mxu0 0.0
      %2818 = vmatpush1.msra.mxu0 0.0
      %2819 = vmatprep.subr.mxu0 0.0
      %2820 = vmatpush1.msra.mxu0 0.0
      %2821 = vmatprep.subr.mxu0 0.0
      %2822 = vmatpush1.msra.mxu0 0.0
      %2823 = vmatprep.subr.mxu0 0.0
      %2824 = vmatpush1.msra.mxu0 0.0
      %2825 = vmatprep.subr.mxu0 0.0
      %2826 = vmatpush1.msra.mxu0 0.0
      %2827 = vmatprep.subr.mxu0 0.0
      %2828 = vmatpush1.msra.mxu0 0.0
      %2829 = vmatprep.subr.mxu0 0.0
      %2830 = vmatpush1.msra.mxu0 0.0
      %2831 = vmatprep.subr.mxu0 0.0
      %2832 = vmatpush1.msra.mxu0 0.0
      %2833 = vmatprep.subr.mxu0 0.0
      %2834 = vmatpush1.msra.mxu0 0.0
      %2835 = vmatprep.subr.mxu0 0.0
      %2836 = vmatpush1.msra.mxu0 0.0
      %2837 = vmatprep.subr.mxu0 0.0
      %2838 = vmatpush1.msra.mxu0 0.0
      %2839 = vmatprep.subr.mxu0 0.0
      %2840 = vmatpush1.msra.mxu0 0.0
      %2841 = vmatprep.subr.mxu0 0.0
      %2842 = vmatpush1.msra.mxu0 0.0
      %2843 = vmatprep.subr.mxu0 0.0
      %2844 = vmatpush1.msra.mxu0 0.0
      %2845 = vmatprep.subr.mxu0 0.0
      %2846 = vmatpush1.msra.mxu0 0.0
      %2847 = vmatprep.mubr.f32.mxu0 0.0
      %2848 = vmatmul.mubr.f32.gmra.mrb[0].mxu0 %v2710
      %v2849 = vpop.f32.mrb[0].mxu0
      %v2850 = vadd.f32 0.0, %v2849
      %v2851 = vpop.f32.mrb[0].mxu0
      %2852 = vdwg.mxu0
      %v2853 = vadd.f32 %v2693, %v2779
      %v2854 = vadd.f32 %v2694, %v2781
      %v2855 = vadd.f32 %v2695, %v2850
      %s2856 = scalar_lea.vmem %s3, 48
      %v2857 = vld [vmem:[%s2856] sm:$0xff]
      %2858 = vrot.lane.b32.xlu0 %v1908, 92
      %v2859 = vpop.permute.xlu0 %2858
      %2860 = vrot.lane.b32.xlu0 %v1909, 92
      %v2861 = vpop.permute.xlu0 %2860
      %2862 = vrot.lane.b32.xlu0 %v1910, 92
      %v2863 = vpop.permute.xlu0 %2862
      %v2864 = vsel %vm1352, %v2859, %v2861
      %v2865 = vsel %vm1352, %v2861, %v2863
      %v2870 = vsel %vm1927, %v2857, 0
      %2872 = vmatprep.subr.mxu0 %v2865
      %2873 = vmatpush1.msra.mxu0 %v2864
      %2874 = vmatprep.subr.mxu0 0.0
      %2875 = vmatpush1.msra.mxu0 0.0
      %2876 = vmatprep.subr.mxu0 0.0
      %2877 = vmatpush1.msra.mxu0 0.0
      %2878 = vmatprep.subr.mxu0 0.0
      %2879 = vmatpush1.msra.mxu0 0.0
      %2880 = vmatprep.subr.mxu0 0.0
      %2881 = vmatpush1.msra.mxu0 0.0
      %2882 = vmatprep.subr.mxu0 0.0
      %2883 = vmatpush1.msra.mxu0 0.0
      %2884 = vmatprep.subr.mxu0 0.0
      %2885 = vmatpush1.msra.mxu0 0.0
      %2886 = vmatprep.subr.mxu0 0.0
      %2887 = vmatpush1.msra.mxu0 0.0
      %2888 = vmatprep.subr.mxu0 0.0
      %2889 = vmatpush1.msra.mxu0 0.0
      %2890 = vmatprep.subr.mxu0 0.0
      %2891 = vmatpush1.msra.mxu0 0.0
      %2892 = vmatprep.subr.mxu0 0.0
      %2893 = vmatpush1.msra.mxu0 0.0
      %2894 = vmatprep.subr.mxu0 0.0
      %2895 = vmatpush1.msra.mxu0 0.0
      %2896 = vmatprep.subr.mxu0 0.0
      %2897 = vmatpush1.msra.mxu0 0.0
      %2898 = vmatprep.subr.mxu0 0.0
      %2899 = vmatpush1.msra.mxu0 0.0
      %2900 = vmatprep.subr.mxu0 0.0
      %2901 = vmatpush1.msra.mxu0 0.0
      %2902 = vmatprep.subr.mxu0 0.0
      %2903 = vmatpush1.msra.mxu0 0.0
      %2904 = vmatprep.subr.mxu0 0.0
      %2905 = vmatpush1.msra.mxu0 0.0
      %2906 = vmatprep.subr.mxu0 0.0
      %2907 = vmatpush1.msra.mxu0 0.0
      %2908 = vmatprep.subr.mxu0 0.0
      %2909 = vmatpush1.msra.mxu0 0.0
      %2910 = vmatprep.subr.mxu0 0.0
      %2911 = vmatpush1.msra.mxu0 0.0
      %2912 = vmatprep.subr.mxu0 0.0
      %2913 = vmatpush1.msra.mxu0 0.0
      %2914 = vmatprep.subr.mxu0 0.0
      %2915 = vmatpush1.msra.mxu0 0.0
      %2916 = vmatprep.subr.mxu0 0.0
      %2917 = vmatpush1.msra.mxu0 0.0
      %2918 = vmatprep.subr.mxu0 0.0
      %2919 = vmatpush1.msra.mxu0 0.0
      %2920 = vmatprep.subr.mxu0 0.0
      %2921 = vmatpush1.msra.mxu0 0.0
      %2922 = vmatprep.subr.mxu0 0.0
      %2923 = vmatpush1.msra.mxu0 0.0
      %2924 = vmatprep.subr.mxu0 0.0
      %2925 = vmatpush1.msra.mxu0 0.0
      %2926 = vmatprep.subr.mxu0 0.0
      %2927 = vmatpush1.msra.mxu0 0.0
      %2928 = vmatprep.subr.mxu0 0.0
      %2929 = vmatpush1.msra.mxu0 0.0
      %2930 = vmatprep.subr.mxu0 0.0
      %2931 = vmatpush1.msra.mxu0 0.0
      %2932 = vmatprep.subr.mxu0 0.0
      %2933 = vmatpush1.msra.mxu0 0.0
      %2934 = vmatprep.subr.mxu0 0.0
      %2935 = vmatpush1.msra.mxu0 0.0
      %2936 = vmatprep.mubr.f32.mxu0 0.0
      %2937 = vmatmul.mubr.f32.gmra.mrb[0].mxu0 %v2870
      %v2938 = vpop.f32.mrb[0].mxu0
      %v2939 = vadd.f32 0.0, %v2938
      %v2940 = vpop.f32.mrb[0].mxu0
      %v2941 = vadd.f32 0.0, %v2940
      %2942 = vdwg.mxu0
      %2943 = vmatprep.subr.mxu0 0.0
      %2944 = vmatpush1.msra.mxu0 %v2863
      %2945 = vmatprep.subr.mxu0 0.0
      %2946 = vmatpush1.msra.mxu0 0.0
      %2947 = vmatprep.subr.mxu0 0.0
      %2948 = vmatpush1.msra.mxu0 0.0
      %2949 = vmatprep.subr.mxu0 0.0
      %2950 = vmatpush1.msra.mxu0 0.0
      %2951 = vmatprep.subr.mxu0 0.0
      %2952 = vmatpush1.msra.mxu0 0.0
      %2953 = vmatprep.subr.mxu0 0.0
      %2954 = vmatpush1.msra.mxu0 0.0
      %2955 = vmatprep.subr.mxu0 0.0
      %2956 = vmatpush1.msra.mxu0 0.0
      %2957 = vmatprep.subr.mxu0 0.0
      %2958 = vmatpush1.msra.mxu0 0.0
      %2959 = vmatprep.subr.mxu0 0.0
      %2960 = vmatpush1.msra.mxu0 0.0
      %2961 = vmatprep.subr.mxu0 0.0
      %2962 = vmatpush1.msra.mxu0 0.0
      %2963 = vmatprep.subr.mxu0 0.0
      %2964 = vmatpush1.msra.mxu0 0.0
      %2965 = vmatprep.subr.mxu0 0.0
      %2966 = vmatpush1.msra.mxu0 0.0
      %2967 = vmatprep.subr.mxu0 0.0
      %2968 = vmatpush1.msra.mxu0 0.0
      %2969 = vmatprep.subr.mxu0 0.0
      %2970 = vmatpush1.msra.mxu0 0.0
      %2971 = vmatprep.subr.mxu0 0.0
      %2972 = vmatpush1.msra.mxu0 0.0
      %2973 = vmatprep.subr.mxu0 0.0
      %2974 = vmatpush1.msra.mxu0 0.0
      %2975 = vmatprep.subr.mxu0 0.0
      %2976 = vmatpush1.msra.mxu0 0.0
      %2977 = vmatprep.subr.mxu0 0.0
      %2978 = vmatpush1.msra.mxu0 0.0
      %2979 = vmatprep.subr.mxu0 0.0
      %2980 = vmatpush1.msra.mxu0 0.0
      %2981 = vmatprep.subr.mxu0 0.0
      %2982 = vmatpush1.msra.mxu0 0.0
      %2983 = vmatprep.subr.mxu0 0.0
      %2984 = vmatpush1.msra.mxu0 0.0
      %2985 = vmatprep.subr.mxu0 0.0
      %2986 = vmatpush1.msra.mxu0 0.0
      %2987 = vmatprep.subr.mxu0 0.0
      %2988 = vmatpush1.msra.mxu0 0.0
      %2989 = vmatprep.subr.mxu0 0.0
      %2990 = vmatpush1.msra.mxu0 0.0
      %2991 = vmatprep.subr.mxu0 0.0
      %2992 = vmatpush1.msra.mxu0 0.0
      %2993 = vmatprep.subr.mxu0 0.0
      %2994 = vmatpush1.msra.mxu0 0.0
      %2995 = vmatprep.subr.mxu0 0.0
      %2996 = vmatpush1.msra.mxu0 0.0
      %2997 = vmatprep.subr.mxu0 0.0
      %2998 = vmatpush1.msra.mxu0 0.0
      %2999 = vmatprep.subr.mxu0 0.0
      %3000 = vmatpush1.msra.mxu0 0.0
      %3001 = vmatprep.subr.mxu0 0.0
      %3002 = vmatpush1.msra.mxu0 0.0
      %3003 = vmatprep.subr.mxu0 0.0
      %3004 = vmatpush1.msra.mxu0 0.0
      %3005 = vmatprep.subr.mxu0 0.0
      %3006 = vmatpush1.msra.mxu0 0.0
      %3007 = vmatprep.mubr.f32.mxu0 0.0
      %3008 = vmatmul.mubr.f32.gmra.mrb[0].mxu0 %v2870
      %v3009 = vpop.f32.mrb[0].mxu0
      %v3010 = vadd.f32 0.0, %v3009
      %v3011 = vpop.f32.mrb[0].mxu0
      %3012 = vdwg.mxu0
      %v3013 = vadd.f32 %v2853, %v2939
      %v3014 = vadd.f32 %v2854, %v2941
      %v3015 = vadd.f32 %v2855, %v3010
      %s3016 = scalar_lea.vmem %s3, 56
      %v3017 = vld [vmem:[%s3016] sm:$0xff]
      %3018 = vrot.lane.b32.xlu0 %v1908, 91
      %v3019 = vpop.permute.xlu0 %3018
      %3020 = vrot.lane.b32.xlu0 %v1909, 91
      %v3021 = vpop.permute.xlu0 %3020
      %3022 = vrot.lane.b32.xlu0 %v1910, 91
      %v3023 = vpop.permute.xlu0 %3022
      %v3024 = vsel %vm1521, %v3019, %v3021
      %v3025 = vsel %vm1521, %v3021, %v3023
      %v3030 = vsel %vm1927, %v3017, 0
      %3032 = vmatprep.subr.mxu0 %v3025
      %3033 = vmatpush1.msra.mxu0 %v3024
      %3034 = vmatprep.subr.mxu0 0.0
      %3035 = vmatpush1.msra.mxu0 0.0
      %3036 = vmatprep.subr.mxu0 0.0
      %3037 = vmatpush1.msra.mxu0 0.0
      %3038 = vmatprep.subr.mxu0 0.0
      %3039 = vmatpush1.msra.mxu0 0.0
      %3040 = vmatprep.subr.mxu0 0.0
      %3041 = vmatpush1.msra.mxu0 0.0
      %3042 = vmatprep.subr.mxu0 0.0
      %3043 = vmatpush1.msra.mxu0 0.0
      %3044 = vmatprep.subr.mxu0 0.0
      %3045 = vmatpush1.msra.mxu0 0.0
      %3046 = vmatprep.subr.mxu0 0.0
      %3047 = vmatpush1.msra.mxu0 0.0
      %3048 = vmatprep.subr.mxu0 0.0
      %3049 = vmatpush1.msra.mxu0 0.0
      %3050 = vmatprep.subr.mxu0 0.0
      %3051 = vmatpush1.msra.mxu0 0.0
      %3052 = vmatprep.subr.mxu0 0.0
      %3053 = vmatpush1.msra.mxu0 0.0
      %3054 = vmatprep.subr.mxu0 0.0
      %3055 = vmatpush1.msra.mxu0 0.0
      %3056 = vmatprep.subr.mxu0 0.0
      %3057 = vmatpush1.msra.mxu0 0.0
      %3058 = vmatprep.subr.mxu0 0.0
      %3059 = vmatpush1.msra.mxu0 0.0
      %3060 = vmatprep.subr.mxu0 0.0
      %3061 = vmatpush1.msra.mxu0 0.0
      %3062 = vmatprep.subr.mxu0 0.0
      %3063 = vmatpush1.msra.mxu0 0.0
      %3064 = vmatprep.subr.mxu0 0.0
      %3065 = vmatpush1.msra.mxu0 0.0
      %3066 = vmatprep.subr.mxu0 0.0
      %3067 = vmatpush1.msra.mxu0 0.0
      %3068 = vmatprep.subr.mxu0 0.0
      %3069 = vmatpush1.msra.mxu0 0.0
      %3070 = vmatprep.subr.mxu0 0.0
      %3071 = vmatpush1.msra.mxu0 0.0
      %3072 = vmatprep.subr.mxu0 0.0
      %3073 = vmatpush1.msra.mxu0 0.0
      %3074 = vmatprep.subr.mxu0 0.0
      %3075 = vmatpush1.msra.mxu0 0.0
      %3076 = vmatprep.subr.mxu0 0.0
      %3077 = vmatpush1.msra.mxu0 0.0
      %3078 = vmatprep.subr.mxu0 0.0
      %3079 = vmatpush1.msra.mxu0 0.0
      %3080 = vmatprep.subr.mxu0 0.0
      %3081 = vmatpush1.msra.mxu0 0.0
      %3082 = vmatprep.subr.mxu0 0.0
      %3083 = vmatpush1.msra.mxu0 0.0
      %3084 = vmatprep.subr.mxu0 0.0
      %3085 = vmatpush1.msra.mxu0 0.0
      %3086 = vmatprep.subr.mxu0 0.0
      %3087 = vmatpush1.msra.mxu0 0.0
      %3088 = vmatprep.subr.mxu0 0.0
      %3089 = vmatpush1.msra.mxu0 0.0
      %3090 = vmatprep.subr.mxu0 0.0
      %3091 = vmatpush1.msra.mxu0 0.0
      %3092 = vmatprep.subr.mxu0 0.0
      %3093 = vmatpush1.msra.mxu0 0.0
      %3094 = vmatprep.subr.mxu0 0.0
      %3095 = vmatpush1.msra.mxu0 0.0
      %3096 = vmatprep.mubr.f32.mxu0 0.0
      %3097 = vmatmul.mubr.f32.gmra.mrb[0].mxu0 %v3030
      %v3098 = vpop.f32.mrb[0].mxu0
      %v3099 = vadd.f32 0.0, %v3098
      %v3100 = vpop.f32.mrb[0].mxu0
      %v3101 = vadd.f32 0.0, %v3100
      %3102 = vdwg.mxu0
      %3103 = vmatprep.subr.mxu0 0.0
      %3104 = vmatpush1.msra.mxu0 %v3023
      %3105 = vmatprep.subr.mxu0 0.0
      %3106 = vmatpush1.msra.mxu0 0.0
      %3107 = vmatprep.subr.mxu0 0.0
      %3108 = vmatpush1.msra.mxu0 0.0
      %3109 = vmatprep.subr.mxu0 0.0
      %3110 = vmatpush1.msra.mxu0 0.0
      %3111 = vmatprep.subr.mxu0 0.0
      %3112 = vmatpush1.msra.mxu0 0.0
      %3113 = vmatprep.subr.mxu0 0.0
      %3114 = vmatpush1.msra.mxu0 0.0
      %3115 = vmatprep.subr.mxu0 0.0
      %3116 = vmatpush1.msra.mxu0 0.0
      %3117 = vmatprep.subr.mxu0 0.0
      %3118 = vmatpush1.msra.mxu0 0.0
      %3119 = vmatprep.subr.mxu0 0.0
      %3120 = vmatpush1.msra.mxu0 0.0
      %3121 = vmatprep.subr.mxu0 0.0
      %3122 = vmatpush1.msra.mxu0 0.0
      %3123 = vmatprep.subr.mxu0 0.0
      %3124 = vmatpush1.msra.mxu0 0.0
      %3125 = vmatprep.subr.mxu0 0.0
      %3126 = vmatpush1.msra.mxu0 0.0
      %3127 = vmatprep.subr.mxu0 0.0
      %3128 = vmatpush1.msra.mxu0 0.0
      %3129 = vmatprep.subr.mxu0 0.0
      %3130 = vmatpush1.msra.mxu0 0.0
      %3131 = vmatprep.subr.mxu0 0.0
      %3132 = vmatpush1.msra.mxu0 0.0
      %3133 = vmatprep.subr.mxu0 0.0
      %3134 = vmatpush1.msra.mxu0 0.0
      %3135 = vmatprep.subr.mxu0 0.0
      %3136 = vmatpush1.msra.mxu0 0.0
      %3137 = vmatprep.subr.mxu0 0.0
      %3138 = vmatpush1.msra.mxu0 0.0
      %3139 = vmatprep.subr.mxu0 0.0
      %3140 = vmatpush1.msra.mxu0 0.0
      %3141 = vmatprep.subr.mxu0 0.0
      %3142 = vmatpush1.msra.mxu0 0.0
      %3143 = vmatprep.subr.mxu0 0.0
      %3144 = vmatpush1.msra.mxu0 0.0
      %3145 = vmatprep.subr.mxu0 0.0
      %3146 = vmatpush1.msra.mxu0 0.0
      %3147 = vmatprep.subr.mxu0 0.0
      %3148 = vmatpush1.msra.mxu0 0.0
      %3149 = vmatprep.subr.mxu0 0.0
      %3150 = vmatpush1.msra.mxu0 0.0
      %3151 = vmatprep.subr.mxu0 0.0
      %3152 = vmatpush1.msra.mxu0 0.0
      %3153 = vmatprep.subr.mxu0 0.0
      %3154 = vmatpush1.msra.mxu0 0.0
      %3155 = vmatprep.subr.mxu0 0.0
      %3156 = vmatpush1.msra.mxu0 0.0
      %3157 = vmatprep.subr.mxu0 0.0
      %3158 = vmatpush1.msra.mxu0 0.0
      %3159 = vmatprep.subr.mxu0 0.0
      %3160 = vmatpush1.msra.mxu0 0.0
      %3161 = vmatprep.subr.mxu0 0.0
      %3162 = vmatpush1.msra.mxu0 0.0
      %3163 = vmatprep.subr.mxu0 0.0
      %3164 = vmatpush1.msra.mxu0 0.0
      %3165 = vmatprep.subr.mxu0 0.0
      %3166 = vmatpush1.msra.mxu0 0.0
      %3167 = vmatprep.mubr.f32.mxu0 0.0
      %3168 = vmatmul.mubr.f32.gmra.mrb[0].mxu0 %v3030
      %v3169 = vpop.f32.mrb[0].mxu0
      %v3170 = vadd.f32 0.0, %v3169
      %v3171 = vpop.f32.mrb[0].mxu0
      %3172 = vdwg.mxu0
      %v3173 = vadd.f32 %v3013, %v3099
      %v3174 = vadd.f32 %v3014, %v3101
      %v3175 = vadd.f32 %v3015, %v3170
      %s3176 = scalar_lea.vmem %s3, 64
      %v3177 = vld [vmem:[%s3176] sm:$0xff]
      %3178 = vrot.lane.b32.xlu0 %v1908, 90
      %v3179 = vpop.permute.xlu0 %3178
      %3180 = vrot.lane.b32.xlu0 %v1909, 90
      %v3181 = vpop.permute.xlu0 %3180
      %3182 = vrot.lane.b32.xlu0 %v1910, 90
      %v3183 = vpop.permute.xlu0 %3182
      %v3184 = vsel %vm1690, %v3179, %v3181
      %v3185 = vsel %vm1690, %v3181, %v3183
      %v3190 = vsel %vm1927, %v3177, 0
      %3192 = vmatprep.subr.mxu0 %v3185
      %3193 = vmatpush1.msra.mxu0 %v3184
      %3194 = vmatprep.subr.mxu0 0.0
      %3195 = vmatpush1.msra.mxu0 0.0
      %3196 = vmatprep.subr.mxu0 0.0
      %3197 = vmatpush1.msra.mxu0 0.0
      %3198 = vmatprep.subr.mxu0 0.0
      %3199 = vmatpush1.msra.mxu0 0.0
      %3200 = vmatprep.subr.mxu0 0.0
      %3201 = vmatpush1.msra.mxu0 0.0
      %3202 = vmatprep.subr.mxu0 0.0
      %3203 = vmatpush1.msra.mxu0 0.0
      %3204 = vmatprep.subr.mxu0 0.0
      %3205 = vmatpush1.msra.mxu0 0.0
      %3206 = vmatprep.subr.mxu0 0.0
      %3207 = vmatpush1.msra.mxu0 0.0
      %3208 = vmatprep.subr.mxu0 0.0
      %3209 = vmatpush1.msra.mxu0 0.0
      %3210 = vmatprep.subr.mxu0 0.0
      %3211 = vmatpush1.msra.mxu0 0.0
      %3212 = vmatprep.subr.mxu0 0.0
      %3213 = vmatpush1.msra.mxu0 0.0
      %3214 = vmatprep.subr.mxu0 0.0
      %3215 = vmatpush1.msra.mxu0 0.0
      %3216 = vmatprep.subr.mxu0 0.0
      %3217 = vmatpush1.msra.mxu0 0.0
      %3218 = vmatprep.subr.mxu0 0.0
      %3219 = vmatpush1.msra.mxu0 0.0
      %3220 = vmatprep.subr.mxu0 0.0
      %3221 = vmatpush1.msra.mxu0 0.0
      %3222 = vmatprep.subr.mxu0 0.0
      %3223 = vmatpush1.msra.mxu0 0.0
      %3224 = vmatprep.subr.mxu0 0.0
      %3225 = vmatpush1.msra.mxu0 0.0
      %3226 = vmatprep.subr.mxu0 0.0
      %3227 = vmatpush1.msra.mxu0 0.0
      %3228 = vmatprep.subr.mxu0 0.0
      %3229 = vmatpush1.msra.mxu0 0.0
      %3230 = vmatprep.subr.mxu0 0.0
      %3231 = vmatpush1.msra.mxu0 0.0
      %3232 = vmatprep.subr.mxu0 0.0
      %3233 = vmatpush1.msra.mxu0 0.0
      %3234 = vmatprep.subr.mxu0 0.0
      %3235 = vmatpush1.msra.mxu0 0.0
      %3236 = vmatprep.subr.mxu0 0.0
      %3237 = vmatpush1.msra.mxu0 0.0
      %3238 = vmatprep.subr.mxu0 0.0
      %3239 = vmatpush1.msra.mxu0 0.0
      %3240 = vmatprep.subr.mxu0 0.0
      %3241 = vmatpush1.msra.mxu0 0.0
      %3242 = vmatprep.subr.mxu0 0.0
      %3243 = vmatpush1.msra.mxu0 0.0
      %3244 = vmatprep.subr.mxu0 0.0
      %3245 = vmatpush1.msra.mxu0 0.0
      %3246 = vmatprep.subr.mxu0 0.0
      %3247 = vmatpush1.msra.mxu0 0.0
      %3248 = vmatprep.subr.mxu0 0.0
      %3249 = vmatpush1.msra.mxu0 0.0
      %3250 = vmatprep.subr.mxu0 0.0
      %3251 = vmatpush1.msra.mxu0 0.0
      %3252 = vmatprep.subr.mxu0 0.0
      %3253 = vmatpush1.msra.mxu0 0.0
      %3254 = vmatprep.subr.mxu0 0.0
      %3255 = vmatpush1.msra.mxu0 0.0
      %3256 = vmatprep.mubr.f32.mxu0 0.0
      %3257 = vmatmul.mubr.f32.gmra.mrb[0].mxu0 %v3190
      %v3258 = vpop.f32.mrb[0].mxu0
      %v3259 = vadd.f32 0.0, %v3258
      %v3260 = vpop.f32.mrb[0].mxu0
      %v3261 = vadd.f32 0.0, %v3260
      %3262 = vdwg.mxu0
      %3263 = vmatprep.subr.mxu0 0.0
      %3264 = vmatpush1.msra.mxu0 %v3183
      %3265 = vmatprep.subr.mxu0 0.0
      %3266 = vmatpush1.msra.mxu0 0.0
      %3267 = vmatprep.subr.mxu0 0.0
      %3268 = vmatpush1.msra.mxu0 0.0
      %3269 = vmatprep.subr.mxu0 0.0
      %3270 = vmatpush1.msra.mxu0 0.0
      %3271 = vmatprep.subr.mxu0 0.0
      %3272 = vmatpush1.msra.mxu0 0.0
      %3273 = vmatprep.subr.mxu0 0.0
      %3274 = vmatpush1.msra.mxu0 0.0
      %3275 = vmatprep.subr.mxu0 0.0
      %3276 = vmatpush1.msra.mxu0 0.0
      %3277 = vmatprep.subr.mxu0 0.0
      %3278 = vmatpush1.msra.mxu0 0.0
      %3279 = vmatprep.subr.mxu0 0.0
      %3280 = vmatpush1.msra.mxu0 0.0
      %3281 = vmatprep.subr.mxu0 0.0
      %3282 = vmatpush1.msra.mxu0 0.0
      %3283 = vmatprep.subr.mxu0 0.0
      %3284 = vmatpush1.msra.mxu0 0.0
      %3285 = vmatprep.subr.mxu0 0.0
      %3286 = vmatpush1.msra.mxu0 0.0
      %3287 = vmatprep.subr.mxu0 0.0
      %3288 = vmatpush1.msra.mxu0 0.0
      %3289 = vmatprep.subr.mxu0 0.0
      %3290 = vmatpush1.msra.mxu0 0.0
      %3291 = vmatprep.subr.mxu0 0.0
      %3292 = vmatpush1.msra.mxu0 0.0
      %3293 = vmatprep.subr.mxu0 0.0
      %3294 = vmatpush1.msra.mxu0 0.0
      %3295 = vmatprep.subr.mxu0 0.0
      %3296 = vmatpush1.msra.mxu0 0.0
      %3297 = vmatprep.subr.mxu0 0.0
      %3298 = vmatpush1.msra.mxu0 0.0
      %3299 = vmatprep.subr.mxu0 0.0
      %3300 = vmatpush1.msra.mxu0 0.0
      %3301 = vmatprep.subr.mxu0 0.0
      %3302 = vmatpush1.msra.mxu0 0.0
      %3303 = vmatprep.subr.mxu0 0.0
      %3304 = vmatpush1.msra.mxu0 0.0
      %3305 = vmatprep.subr.mxu0 0.0
      %3306 = vmatpush1.msra.mxu0 0.0
      %3307 = vmatprep.subr.mxu0 0.0
      %3308 = vmatpush1.msra.mxu0 0.0
      %3309 = vmatprep.subr.mxu0 0.0
      %3310 = vmatpush1.msra.mxu0 0.0
      %3311 = vmatprep.subr.mxu0 0.0
      %3312 = vmatpush1.msra.mxu0 0.0
      %3313 = vmatprep.subr.mxu0 0.0
      %3314 = vmatpush1.msra.mxu0 0.0
      %3315 = vmatprep.subr.mxu0 0.0
      %3316 = vmatpush1.msra.mxu0 0.0
      %3317 = vmatprep.subr.mxu0 0.0
      %3318 = vmatpush1.msra.mxu0 0.0
      %3319 = vmatprep.subr.mxu0 0.0
      %3320 = vmatpush1.msra.mxu0 0.0
      %3321 = vmatprep.subr.mxu0 0.0
      %3322 = vmatpush1.msra.mxu0 0.0
      %3323 = vmatprep.subr.mxu0 0.0
      %3324 = vmatpush1.msra.mxu0 0.0
      %3325 = vmatprep.subr.mxu0 0.0
      %3326 = vmatpush1.msra.mxu0 0.0
      %3327 = vmatprep.mubr.f32.mxu0 0.0
      %3328 = vmatmul.mubr.f32.gmra.mrb[0].mxu0 %v3190
      %v3329 = vpop.f32.mrb[0].mxu0
      %v3330 = vadd.f32 0.0, %v3329
      %v3331 = vpop.f32.mrb[0].mxu0
      %3332 = vdwg.mxu0
      %v3333 = vadd.f32 %v3173, %v3259
      %v3334 = vadd.f32 %v3174, %v3261
      %v3335 = vadd.f32 %v3175, %v3330
      %v3336 = vld [vmem:[%s4] sm:$0xff]
      %3338 = vset.pattern.permute.xlu0 0
      %3339 = vperm.xlu0 %3338, %v3336
      %v3340 = vpop.permute.xlu0 %3339
      %v3342 = vadd.f32 %v3333, %v3340
      %v3343 = vadd.f32 %v3334, %v3340
      %v3344 = vadd.f32 %v3335, %v3340
      %vm3345 = vcmp.ge.f32.partialorder %v3342, 0.0
      %vm3346 = vcmp.ge.f32.partialorder %v3343, 0.0
      %vm3347 = vcmp.ge.f32.partialorder %v3344, 0.0
      %v3348 = vmul.f32 %v3342, 0.01
      %v3349 = vmul.f32 %v3343, 0.01
      %v3350 = vmul.f32 %v3344, 0.01
      %v3351 = vsel %vm3345, %v3342, %v3348
      %v3352 = vsel %vm3346, %v3343, %v3349
      %v3353 = vsel %vm3347, %v3344, %v3350
      %vm3354 = vcmask 130048
      %3355 = vst.msk [vmem:[%s339] sm:$0xff] %vm3354, %v3351
      %3357 = vrot.lane.b32.xlu0 %v3351, 126
      %v3358 = vpop.permute.xlu0 %3357
      %vm3360 = vcmask 261248
      %3361 = vst.msk [vmem:[%s339] sm:$0xff] %vm3360, %v3358
      %3362 = vrot.lane.b32.xlu0 %v3351, 124
      %v3363 = vpop.permute.xlu0 %3362
      %vm3365 = vcmask 392448
      %3366 = vst.msk [vmem:[%s339] sm:$0xff] %vm3365, %v3363
      %3367 = vrot.lane.b32.xlu0 %v3351, 122
      %v3368 = vpop.permute.xlu0 %3367
      %vm3370 = vcmask 523648
      %3371 = vst.msk [vmem:[%s339] sm:$0xff] %vm3370, %v3368
      %3372 = vrot.lane.b32.xlu0 %v3351, 120
      %v3373 = vpop.permute.xlu0 %3372
      %vm3375 = vcmask 654848
      %3376 = vst.msk [vmem:[%s339] sm:$0xff] %vm3375, %v3373
      %3377 = vrot.lane.b32.xlu0 %v3351, 118
      %v3378 = vpop.permute.xlu0 %3377
      %vm3380 = vcmask 786048
      %3381 = vst.msk [vmem:[%s339] sm:$0xff] %vm3380, %v3378
      %3382 = vrot.lane.b32.xlu0 %v3351, 116
      %v3383 = vpop.permute.xlu0 %3382
      %vm3385 = vcmask 917248
      %3386 = vst.msk [vmem:[%s339] sm:$0xff] %vm3385, %v3383
      %3388 = vrot.lane.b32.xlu0 %v3351, 114
      %v3389 = vpop.permute.xlu0 %3388
      %3390 = vrot.lane.b32.xlu0 %v3352, 114
      %v3391 = vpop.permute.xlu0 %3390
      %vm3392 = vcmask 932864
      %v3393 = vsel %vm3392, %v3389, %v3391
      %vm3395 = vcmask 1048448
      %3396 = vst.msk [vmem:[%s339] sm:$0xff] %vm3395, %v3393
      %3397 = vrot.lane.b32.xlu0 %v3352, 112
      %v3398 = vpop.permute.xlu0 %3397
      %3400 = vst.msk [vmem:[%s339 + $0x8] sm:$0xff] %vm3354, %v3398
      %3401 = vrot.lane.b32.xlu0 %v3352, 110
      %v3402 = vpop.permute.xlu0 %3401
      %3404 = vst.msk [vmem:[%s339 + $0x8] sm:$0xff] %vm3360, %v3402
      %3405 = vrot.lane.b32.xlu0 %v3352, 108
      %v3406 = vpop.permute.xlu0 %3405
      %3408 = vst.msk [vmem:[%s339 + $0x8] sm:$0xff] %vm3365, %v3406
      %3409 = vrot.lane.b32.xlu0 %v3352, 106
      %v3410 = vpop.permute.xlu0 %3409
      %3412 = vst.msk [vmem:[%s339 + $0x8] sm:$0xff] %vm3370, %v3410
      %3413 = vrot.lane.b32.xlu0 %v3352, 104
      %v3414 = vpop.permute.xlu0 %3413
      %3416 = vst.msk [vmem:[%s339 + $0x8] sm:$0xff] %vm3375, %v3414
      %3417 = vrot.lane.b32.xlu0 %v3352, 102
      %v3418 = vpop.permute.xlu0 %3417
      %3420 = vst.msk [vmem:[%s339 + $0x8] sm:$0xff] %vm3380, %v3418
      %3422 = vrot.lane.b32.xlu0 %v3352, 100
      %v3423 = vpop.permute.xlu0 %3422
      %3424 = vrot.lane.b32.xlu0 %v3353, 100
      %v3425 = vpop.permute.xlu0 %3424
      %vm3426 = vcmask 818176
      %v3427 = vsel %vm3426, %v3423, %v3425
      %3429 = vst.msk [vmem:[%s339 + $0x8] sm:$0xff] %vm3385, %v3427
      %3430 = vrot.lane.b32.xlu0 %v3353, 98
      %v3431 = vpop.permute.xlu0 %3430
      %3433 = vst.msk [vmem:[%s339 + $0x8] sm:$0xff] %vm3395, %v3431
      %v3434 = vld [vmem:[%s6] sm:$0xff]
      %v3435 = vld [vmem:[%s6 + $0x8] sm:$0xff]
      %v3436 = vld [vmem:[%s7] sm:$0xff]
      %v3437 = vld [vmem:[%s7 + $0x8] sm:$0xff]
      %3438 = vrot.lane.b32.xlu0 %v3351, 110
      %v3439 = vpop.permute.xlu0 %3438
      %v3441 = vmax.f32 %v3351, %v3439
      %v3443 = vsel %vm3354, %v3441, 0
      %3445 = vmatprep.subr.mxu0 0.0
      %3446 = vmatpush1.msra.mxu0 %v3434
      %3447 = vmatprep.subr.mxu0 0.0
      %3448 = vmatpush1.msra.mxu0 %v3435
      %3449 = vmatprep.subr.mxu0 0.0
      %3450 = vmatpush1.msra.mxu0 0.0
      %3451 = vmatprep.subr.mxu0 0.0
      %3452 = vmatpush1.msra.mxu0 0.0
      %3453 = vmatprep.subr.mxu0 0.0
      %3454 = vmatpush1.msra.mxu0 0.0
      %3455 = vmatprep.subr.mxu0 0.0
      %3456 = vmatpush1.msra.mxu0 0.0
      %3457 = vmatprep.subr.mxu0 0.0
      %3458 = vmatpush1.msra.mxu0 0.0
      %3459 = vmatprep.subr.mxu0 0.0
      %3460 = vmatpush1.msra.mxu0 0.0
      %3461 = vmatprep.subr.mxu0 0.0
      %3462 = vmatpush1.msra.mxu0 0.0
      %3463 = vmatprep.subr.mxu0 0.0
      %3464 = vmatpush1.msra.mxu0 0.0
      %3465 = vmatprep.subr.mxu0 0.0
      %3466 = vmatpush1.msra.mxu0 0.0
      %3467 = vmatprep.subr.mxu0 0.0
      %3468 = vmatpush1.msra.mxu0 0.0
      %3469 = vmatprep.subr.mxu0 0.0
      %3470 = vmatpush1.msra.mxu0 0.0
      %3471 = vmatprep.subr.mxu0 0.0
      %3472 = vmatpush1.msra.mxu0 0.0
      %3473 = vmatprep.subr.mxu0 0.0
      %3474 = vmatpush1.msra.mxu0 0.0
      %3475 = vmatprep.subr.mxu0 0.0
      %3476 = vmatpush1.msra.mxu0 0.0
      %3477 = vmatprep.subr.mxu0 0.0
      %3478 = vmatpush1.msra.mxu0 0.0
      %3479 = vmatprep.subr.mxu0 0.0
      %3480 = vmatpush1.msra.mxu0 0.0
      %3481 = vmatprep.subr.mxu0 0.0
      %3482 = vmatpush1.msra.mxu0 0.0
      %3483 = vmatprep.subr.mxu0 0.0
      %3484 = vmatpush1.msra.mxu0 0.0
      %3485 = vmatprep.subr.mxu0 0.0
      %3486 = vmatpush1.msra.mxu0 0.0
      %3487 = vmatprep.subr.mxu0 0.0
      %3488 = vmatpush1.msra.mxu0 0.0
      %3489 = vmatprep.subr.mxu0 0.0
      %3490 = vmatpush1.msra.mxu0 0.0
      %3491 = vmatprep.subr.mxu0 0.0
      %3492 = vmatpush1.msra.mxu0 0.0
      %3493 = vmatprep.subr.mxu0 0.0
      %3494 = vmatpush1.msra.mxu0 0.0
      %3495 = vmatprep.subr.mxu0 0.0
      %3496 = vmatpush1.msra.mxu0 0.0
      %3497 = vmatprep.subr.mxu0 0.0
      %3498 = vmatpush1.msra.mxu0 0.0
      %3499 = vmatprep.subr.mxu0 0.0
      %3500 = vmatpush1.msra.mxu0 0.0
      %3501 = vmatprep.subr.mxu0 0.0
      %3502 = vmatpush1.msra.mxu0 0.0
      %3503 = vmatprep.subr.mxu0 0.0
      %3504 = vmatpush1.msra.mxu0 0.0
      %3505 = vmatprep.subr.mxu0 0.0
      %3506 = vmatpush1.msra.mxu0 0.0
      %3507 = vmatprep.subr.mxu0 0.0
      %3508 = vmatpush1.msra.mxu0 0.0
      %3509 = vmatprep.mubr.f32.mxu0 0.0
      %3510 = vmatmul.mubr.f32.gmra.mrb[0].mxu0 %v3443
      %v3511 = vpop.f32.mrb[0].mxu0
      %v3512 = vadd.f32 0.0, %v3511
      %v3513 = vpop.f32.mrb[0].mxu0
      %3514 = vdwg.mxu0
      %3515 = vmatprep.subr.mxu0 0.0
      %3516 = vmatpush1.msra.mxu0 %v3436
      %3517 = vmatprep.subr.mxu0 0.0
      %3518 = vmatpush1.msra.mxu0 %v3437
      %3519 = vmatprep.subr.mxu0 0.0
      %3520 = vmatpush1.msra.mxu0 0.0
      %3521 = vmatprep.subr.mxu0 0.0
      %3522 = vmatpush1.msra.mxu0 0.0
      %3523 = vmatprep.subr.mxu0 0.0
      %3524 = vmatpush1.msra.mxu0 0.0
      %3525 = vmatprep.subr.mxu0 0.0
      %3526 = vmatpush1.msra.mxu0 0.0
      %3527 = vmatprep.subr.mxu0 0.0
      %3528 = vmatpush1.msra.mxu0 0.0
      %3529 = vmatprep.subr.mxu0 0.0
      %3530 = vmatpush1.msra.mxu0 0.0
      %3531 = vmatprep.subr.mxu0 0.0
      %3532 = vmatpush1.msra.mxu0 0.0
      %3533 = vmatprep.subr.mxu0 0.0
      %3534 = vmatpush1.msra.mxu0 0.0
      %3535 = vmatprep.subr.mxu0 0.0
      %3536 = vmatpush1.msra.mxu0 0.0
      %3537 = vmatprep.subr.mxu0 0.0
      %3538 = vmatpush1.msra.mxu0 0.0
      %3539 = vmatprep.subr.mxu0 0.0
      %3540 = vmatpush1.msra.mxu0 0.0
      %3541 = vmatprep.subr.mxu0 0.0
      %3542 = vmatpush1.msra.mxu0 0.0
      %3543 = vmatprep.subr.mxu0 0.0
      %3544 = vmatpush1.msra.mxu0 0.0
      %3545 = vmatprep.subr.mxu0 0.0
      %3546 = vmatpush1.msra.mxu0 0.0
      %3547 = vmatprep.subr.mxu0 0.0
      %3548 = vmatpush1.msra.mxu0 0.0
      %3549 = vmatprep.subr.mxu0 0.0
      %3550 = vmatpush1.msra.mxu0 0.0
      %3551 = vmatprep.subr.mxu0 0.0
      %3552 = vmatpush1.msra.mxu0 0.0
      %3553 = vmatprep.subr.mxu0 0.0
      %3554 = vmatpush1.msra.mxu0 0.0
      %3555 = vmatprep.subr.mxu0 0.0
      %3556 = vmatpush1.msra.mxu0 0.0
      %3557 = vmatprep.subr.mxu0 0.0
      %3558 = vmatpush1.msra.mxu0 0.0
      %3559 = vmatprep.subr.mxu0 0.0
      %3560 = vmatpush1.msra.mxu0 0.0
      %3561 = vmatprep.subr.mxu0 0.0
      %3562 = vmatpush1.msra.mxu0 0.0
      %3563 = vmatprep.subr.mxu0 0.0
      %3564 = vmatpush1.msra.mxu0 0.0
      %3565 = vmatprep.subr.mxu0 0.0
      %3566 = vmatpush1.msra.mxu0 0.0
      %3567 = vmatprep.subr.mxu0 0.0
      %3568 = vmatpush1.msra.mxu0 0.0
      %3569 = vmatprep.subr.mxu0 0.0
      %3570 = vmatpush1.msra.mxu0 0.0
      %3571 = vmatprep.subr.mxu0 0.0
      %3572 = vmatpush1.msra.mxu0 0.0
      %3573 = vmatprep.subr.mxu0 0.0
      %3574 = vmatpush1.msra.mxu0 0.0
      %3575 = vmatprep.subr.mxu0 0.0
      %3576 = vmatpush1.msra.mxu0 0.0
      %3577 = vmatprep.subr.mxu0 0.0
      %3578 = vmatpush1.msra.mxu0 0.0
      %3579 = vmatprep.mubr.f32.mxu0 0.0
      %3580 = vmatmul.mubr.f32.gmra.mrb[0].mxu0 %v3443
      %v3581 = vpop.f32.mrb[0].mxu0
      %v3582 = vadd.f32 0.0, %v3581
      %v3583 = vpop.f32.mrb[0].mxu0
      %3584 = vdwg.mxu0
      %v3585 = vmax.f32 %v3512, %v3582
      %3586 = vst.msk [vmem:[%s343] sm:$0xff] %vm1927, %v3585
      %3587 = vrot.lane.b32.xlu0 %v3441, 92
      %v3588 = vpop.permute.xlu0 %3587
      %v3589 = vsel %vm3354, %v3588, 0
      %3591 = vmatprep.subr.mxu0 0.0
      %3592 = vmatpush1.msra.mxu0 %v3434
      %3593 = vmatprep.subr.mxu0 0.0
      %3594 = vmatpush1.msra.mxu0 %v3435
      %3595 = vmatprep.subr.mxu0 0.0
      %3596 = vmatpush1.msra.mxu0 0.0
      %3597 = vmatprep.subr.mxu0 0.0
      %3598 = vmatpush1.msra.mxu0 0.0
      %3599 = vmatprep.subr.mxu0 0.0
      %3600 = vmatpush1.msra.mxu0 0.0
      %3601 = vmatprep.subr.mxu0 0.0
      %3602 = vmatpush1.msra.mxu0 0.0
      %3603 = vmatprep.subr.mxu0 0.0
      %3604 = vmatpush1.msra.mxu0 0.0
      %3605 = vmatprep.subr.mxu0 0.0
      %3606 = vmatpush1.msra.mxu0 0.0
      %3607 = vmatprep.subr.mxu0 0.0
      %3608 = vmatpush1.msra.mxu0 0.0
      %3609 = vmatprep.subr.mxu0 0.0
      %3610 = vmatpush1.msra.mxu0 0.0
      %3611 = vmatprep.subr.mxu0 0.0
      %3612 = vmatpush1.msra.mxu0 0.0
      %3613 = vmatprep.subr.mxu0 0.0
      %3614 = vmatpush1.msra.mxu0 0.0
      %3615 = vmatprep.subr.mxu0 0.0
      %3616 = vmatpush1.msra.mxu0 0.0
      %3617 = vmatprep.subr.mxu0 0.0
      %3618 = vmatpush1.msra.mxu0 0.0
      %3619 = vmatprep.subr.mxu0 0.0
      %3620 = vmatpush1.msra.mxu0 0.0
      %3621 = vmatprep.subr.mxu0 0.0
      %3622 = vmatpush1.msra.mxu0 0.0
      %3623 = vmatprep.subr.mxu0 0.0
      %3624 = vmatpush1.msra.mxu0 0.0
      %3625 = vmatprep.subr.mxu0 0.0
      %3626 = vmatpush1.msra.mxu0 0.0
      %3627 = vmatprep.subr.mxu0 0.0
      %3628 = vmatpush1.msra.mxu0 0.0
      %3629 = vmatprep.subr.mxu0 0.0
      %3630 = vmatpush1.msra.mxu0 0.0
      %3631 = vmatprep.subr.mxu0 0.0
      %3632 = vmatpush1.msra.mxu0 0.0
      %3633 = vmatprep.subr.mxu0 0.0
      %3634 = vmatpush1.msra.mxu0 0.0
      %3635 = vmatprep.subr.mxu0 0.0
      %3636 = vmatpush1.msra.mxu0 0.0
      %3637 = vmatprep.subr.mxu0 0.0
      %3638 = vmatpush1.msra.mxu0 0.0
      %3639 = vmatprep.subr.mxu0 0.0
      %3640 = vmatpush1.msra.mxu0 0.0
      %3641 = vmatprep.subr.mxu0 0.0
      %3642 = vmatpush1.msra.mxu0 0.0
      %3643 = vmatprep.subr.mxu0 0.0
      %3644 = vmatpush1.msra.mxu0 0.0
      %3645 = vmatprep.subr.mxu0 0.0
      %3646 = vmatpush1.msra.mxu0 0.0
      %3647 = vmatprep.subr.mxu0 0.0
      %3648 = vmatpush1.msra.mxu0 0.0
      %3649 = vmatprep.subr.mxu0 0.0
      %3650 = vmatpush1.msra.mxu0 0.0
      %3651 = vmatprep.subr.mxu0 0.0
      %3652 = vmatpush1.msra.mxu0 0.0
      %3653 = vmatprep.subr.mxu0 0.0
      %3654 = vmatpush1.msra.mxu0 0.0
      %3655 = vmatprep.mubr.f32.mxu0 0.0
      %3656 = vmatmul.mubr.f32.gmra.mrb[0].mxu0 %v3589
      %v3657 = vpop.f32.mrb[0].mxu0
      %v3658 = vadd.f32 0.0, %v3657
      %v3659 = vpop.f32.mrb[0].mxu0
      %3660 = vdwg.mxu0
      %3661 = vmatprep.subr.mxu0 0.0
      %3662 = vmatpush1.msra.mxu0 %v3436
      %3663 = vmatprep.subr.mxu0 0.0
      %3664 = vmatpush1.msra.mxu0 %v3437
      %3665 = vmatprep.subr.mxu0 0.0
      %3666 = vmatpush1.msra.mxu0 0.0
      %3667 = vmatprep.subr.mxu0 0.0
      %3668 = vmatpush1.msra.mxu0 0.0
      %3669 = vmatprep.subr.mxu0 0.0
      %3670 = vmatpush1.msra.mxu0 0.0
      %3671 = vmatprep.subr.mxu0 0.0
      %3672 = vmatpush1.msra.mxu0 0.0
      %3673 = vmatprep.subr.mxu0 0.0
      %3674 = vmatpush1.msra.mxu0 0.0
      %3675 = vmatprep.subr.mxu0 0.0
      %3676 = vmatpush1.msra.mxu0 0.0
      %3677 = vmatprep.subr.mxu0 0.0
      %3678 = vmatpush1.msra.mxu0 0.0
      %3679 = vmatprep.subr.mxu0 0.0
      %3680 = vmatpush1.msra.mxu0 0.0
      %3681 = vmatprep.subr.mxu0 0.0
      %3682 = vmatpush1.msra.mxu0 0.0
      %3683 = vmatprep.subr.mxu0 0.0
      %3684 = vmatpush1.msra.mxu0 0.0
      %3685 = vmatprep.subr.mxu0 0.0
      %3686 = vmatpush1.msra.mxu0 0.0
      %3687 = vmatprep.subr.mxu0 0.0
      %3688 = vmatpush1.msra.mxu0 0.0
      %3689 = vmatprep.subr.mxu0 0.0
      %3690 = vmatpush1.msra.mxu0 0.0
      %3691 = vmatprep.subr.mxu0 0.0
      %3692 = vmatpush1.msra.mxu0 0.0
      %3693 = vmatprep.subr.mxu0 0.0
      %3694 = vmatpush1.msra.mxu0 0.0
      %3695 = vmatprep.subr.mxu0 0.0
      %3696 = vmatpush1.msra.mxu0 0.0
      %3697 = vmatprep.subr.mxu0 0.0
      %3698 = vmatpush1.msra.mxu0 0.0
      %3699 = vmatprep.subr.mxu0 0.0
      %3700 = vmatpush1.msra.mxu0 0.0
      %3701 = vmatprep.subr.mxu0 0.0
      %3702 = vmatpush1.msra.mxu0 0.0
      %3703 = vmatprep.subr.mxu0 0.0
      %3704 = vmatpush1.msra.mxu0 0.0
      %3705 = vmatprep.subr.mxu0 0.0
      %3706 = vmatpush1.msra.mxu0 0.0
      %3707 = vmatprep.subr.mxu0 0.0
      %3708 = vmatpush1.msra.mxu0 0.0
      %3709 = vmatprep.subr.mxu0 0.0
      %3710 = vmatpush1.msra.mxu0 0.0
      %3711 = vmatprep.subr.mxu0 0.0
      %3712 = vmatpush1.msra.mxu0 0.0
      %3713 = vmatprep.subr.mxu0 0.0
      %3714 = vmatpush1.msra.mxu0 0.0
      %3715 = vmatprep.subr.mxu0 0.0
      %3716 = vmatpush1.msra.mxu0 0.0
      %3717 = vmatprep.subr.mxu0 0.0
      %3718 = vmatpush1.msra.mxu0 0.0
      %3719 = vmatprep.subr.mxu0 0.0
      %3720 = vmatpush1.msra.mxu0 0.0
      %3721 = vmatprep.subr.mxu0 0.0
      %3722 = vmatpush1.msra.mxu0 0.0
      %3723 = vmatprep.subr.mxu0 0.0
      %3724 = vmatpush1.msra.mxu0 0.0
      %3725 = vmatprep.mubr.f32.mxu0 0.0
      %3726 = vmatmul.mubr.f32.gmra.mrb[0].mxu0 %v3589
      %v3727 = vpop.f32.mrb[0].mxu0
      %v3728 = vadd.f32 0.0, %v3727
      %v3729 = vpop.f32.mrb[0].mxu0
      %3730 = vdwg.mxu0
      %v3731 = vmax.f32 %v3658, %v3728
      %3733 = vrot.lane.b32.xlu0 %v3731, 8
      %v3734 = vpop.permute.xlu0 %3733
      %vm3736 = vcmask 130112
      %3737 = vst.msk [vmem:[%s343] sm:$0xff] %vm3736, %v3734
      %3738 = vrot.lane.b32.xlu0 %v3441, 56
      %v3739 = vpop.permute.xlu0 %3738
      %v3740 = vsel %vm3354, %v3739, 0
      %3742 = vmatprep.subr.mxu0 0.0
      %3743 = vmatpush1.msra.mxu0 %v3434
      %3744 = vmatprep.subr.mxu0 0.0
      %3745 = vmatpush1.msra.mxu0 %v3435
      %3746 = vmatprep.subr.mxu0 0.0
      %3747 = vmatpush1.msra.mxu0 0.0
      %3748 = vmatprep.subr.mxu0 0.0
      %3749 = vmatpush1.msra.mxu0 0.0
      %3750 = vmatprep.subr.mxu0 0.0
      %3751 = vmatpush1.msra.mxu0 0.0
      %3752 = vmatprep.subr.mxu0 0.0
      %3753 = vmatpush1.msra.mxu0 0.0
      %3754 = vmatprep.subr.mxu0 0.0
      %3755 = vmatpush1.msra.mxu0 0.0
      %3756 = vmatprep.subr.mxu0 0.0
      %3757 = vmatpush1.msra.mxu0 0.0
      %3758 = vmatprep.subr.mxu0 0.0
      %3759 = vmatpush1.msra.mxu0 0.0
      %3760 = vmatprep.subr.mxu0 0.0
      %3761 = vmatpush1.msra.mxu0 0.0
      %3762 = vmatprep.subr.mxu0 0.0
      %3763 = vmatpush1.msra.mxu0 0.0
      %3764 = vmatprep.subr.mxu0 0.0
      %3765 = vmatpush1.msra.mxu0 0.0
      %3766 = vmatprep.subr.mxu0 0.0
      %3767 = vmatpush1.msra.mxu0 0.0
      %3768 = vmatprep.subr.mxu0 0.0
      %3769 = vmatpush1.msra.mxu0 0.0
      %3770 = vmatprep.subr.mxu0 0.0
      %3771 = vmatpush1.msra.mxu0 0.0
      %3772 = vmatprep.subr.mxu0 0.0
      %3773 = vmatpush1.msra.mxu0 0.0
      %3774 = vmatprep.subr.mxu0 0.0
      %3775 = vmatpush1.msra.mxu0 0.0
      %3776 = vmatprep.subr.mxu0 0.0
      %3777 = vmatpush1.msra.mxu0 0.0
      %3778 = vmatprep.subr.mxu0 0.0
      %3779 = vmatpush1.msra.mxu0 0.0
      %3780 = vmatprep.subr.mxu0 0.0
      %3781 = vmatpush1.msra.mxu0 0.0
      %3782 = vmatprep.subr.mxu0 0.0
      %3783 = vmatpush1.msra.mxu0 0.0
      %3784 = vmatprep.subr.mxu0 0.0
      %3785 = vmatpush1.msra.mxu0 0.0
      %3786 = vmatprep.subr.mxu0 0.0
      %3787 = vmatpush1.msra.mxu0 0.0
      %3788 = vmatprep.subr.mxu0 0.0
      %3789 = vmatpush1.msra.mxu0 0.0
      %3790 = vmatprep.subr.mxu0 0.0
      %3791 = vmatpush1.msra.mxu0 0.0
      %3792 = vmatprep.subr.mxu0 0.0
      %3793 = vmatpush1.msra.mxu0 0.0
      %3794 = vmatprep.subr.mxu0 0.0
      %3795 = vmatpush1.msra.mxu0 0.0
      %3796 = vmatprep.subr.mxu0 0.0
      %3797 = vmatpush1.msra.mxu0 0.0
      %3798 = vmatprep.subr.mxu0 0.0
      %3799 = vmatpush1.msra.mxu0 0.0
      %3800 = vmatprep.subr.mxu0 0.0
      %3801 = vmatpush1.msra.mxu0 0.0
      %3802 = vmatprep.subr.mxu0 0.0
      %3803 = vmatpush1.msra.mxu0 0.0
      %3804 = vmatprep.subr.mxu0 0.0
      %3805 = vmatpush1.msra.mxu0 0.0
      %3806 = vmatprep.mubr.f32.mxu0 0.0
      %3807 = vmatmul.mubr.f32.gmra.mrb[0].mxu0 %v3740
      %v3808 = vpop.f32.mrb[0].mxu0
      %v3809 = vadd.f32 0.0, %v3808
      %v3810 = vpop.f32.mrb[0].mxu0
      %3811 = vdwg.mxu0
      %3812 = vmatprep.subr.mxu0 0.0
      %3813 = vmatpush1.msra.mxu0 %v3436
      %3814 = vmatprep.subr.mxu0 0.0
      %3815 = vmatpush1.msra.mxu0 %v3437
      %3816 = vmatprep.subr.mxu0 0.0
      %3817 = vmatpush1.msra.mxu0 0.0
      %3818 = vmatprep.subr.mxu0 0.0
      %3819 = vmatpush1.msra.mxu0 0.0
      %3820 = vmatprep.subr.mxu0 0.0
      %3821 = vmatpush1.msra.mxu0 0.0
      %3822 = vmatprep.subr.mxu0 0.0
      %3823 = vmatpush1.msra.mxu0 0.0
      %3824 = vmatprep.subr.mxu0 0.0
      %3825 = vmatpush1.msra.mxu0 0.0
      %3826 = vmatprep.subr.mxu0 0.0
      %3827 = vmatpush1.msra.mxu0 0.0
      %3828 = vmatprep.subr.mxu0 0.0
      %3829 = vmatpush1.msra.mxu0 0.0
      %3830 = vmatprep.subr.mxu0 0.0
      %3831 = vmatpush1.msra.mxu0 0.0
      %3832 = vmatprep.subr.mxu0 0.0
      %3833 = vmatpush1.msra.mxu0 0.0
      %3834 = vmatprep.subr.mxu0 0.0
      %3835 = vmatpush1.msra.mxu0 0.0
      %3836 = vmatprep.subr.mxu0 0.0
      %3837 = vmatpush1.msra.mxu0 0.0
      %3838 = vmatprep.subr.mxu0 0.0
      %3839 = vmatpush1.msra.mxu0 0.0
      %3840 = vmatprep.subr.mxu0 0.0
      %3841 = vmatpush1.msra.mxu0 0.0
      %3842 = vmatprep.subr.mxu0 0.0
      %3843 = vmatpush1.msra.mxu0 0.0
      %3844 = vmatprep.subr.mxu0 0.0
      %3845 = vmatpush1.msra.mxu0 0.0
      %3846 = vmatprep.subr.mxu0 0.0
      %3847 = vmatpush1.msra.mxu0 0.0
      %3848 = vmatprep.subr.mxu0 0.0
      %3849 = vmatpush1.msra.mxu0 0.0
      %3850 = vmatprep.subr.mxu0 0.0
      %3851 = vmatpush1.msra.mxu0 0.0
      %3852 = vmatprep.subr.mxu0 0.0
      %3853 = vmatpush1.msra.mxu0 0.0
      %3854 = vmatprep.subr.mxu0 0.0
      %3855 = vmatpush1.msra.mxu0 0.0
      %3856 = vmatprep.subr.mxu0 0.0
      %3857 = vmatpush1.msra.mxu0 0.0
      %3858 = vmatprep.subr.mxu0 0.0
      %3859 = vmatpush1.msra.mxu0 0.0
      %3860 = vmatprep.subr.mxu0 0.0
      %3861 = vmatpush1.msra.mxu0 0.0
      %3862 = vmatprep.subr.mxu0 0.0
      %3863 = vmatpush1.msra.mxu0 0.0
      %3864 = vmatprep.subr.mxu0 0.0
      %3865 = vmatpush1.msra.mxu0 0.0
      %3866 = vmatprep.subr.mxu0 0.0
      %3867 = vmatpush1.msra.mxu0 0.0
      %3868 = vmatprep.subr.mxu0 0.0
      %3869 = vmatpush1.msra.mxu0 0.0
      %3870 = vmatprep.subr.mxu0 0.0
      %3871 = vmatpush1.msra.mxu0 0.0
      %3872 = vmatprep.subr.mxu0 0.0
      %3873 = vmatpush1.msra.mxu0 0.0
      %3874 = vmatprep.subr.mxu0 0.0
      %3875 = vmatpush1.msra.mxu0 0.0
      %3876 = vmatprep.mubr.f32.mxu0 0.0
      %3877 = vmatmul.mubr.f32.gmra.mrb[0].mxu0 %v3740
      %v3878 = vpop.f32.mrb[0].mxu0
      %v3879 = vadd.f32 0.0, %v3878
      %v3880 = vpop.f32.mrb[0].mxu0
      %3881 = vdwg.mxu0
      %v3882 = vmax.f32 %v3809, %v3879
      %3884 = vrot.lane.b32.xlu0 %v3882, 16
      %v3885 = vpop.permute.xlu0 %3884
      %vm3887 = vcmask 195712
      %3888 = vst.msk [vmem:[%s343] sm:$0xff] %vm3887, %v3885
      %v3889 = vsel %vm845, %v3439, %v3402
      %v3891 = vmax.f32 %v3351, %v3889
      %3893 = vrot.lane.b32.xlu0 %v3891, 20
      %v3894 = vpop.permute.xlu0 %3893
      %v3895 = vsel %vm3354, %v3894, 0
      %3897 = vmatprep.subr.mxu0 0.0
      %3898 = vmatpush1.msra.mxu0 %v3434
      %3899 = vmatprep.subr.mxu0 0.0
      %3900 = vmatpush1.msra.mxu0 %v3435
      %3901 = vmatprep.subr.mxu0 0.0
      %3902 = vmatpush1.msra.mxu0 0.0
      %3903 = vmatprep.subr.mxu0 0.0
      %3904 = vmatpush1.msra.mxu0 0.0
      %3905 = vmatprep.subr.mxu0 0.0
      %3906 = vmatpush1.msra.mxu0 0.0
      %3907 = vmatprep.subr.mxu0 0.0
      %3908 = vmatpush1.msra.mxu0 0.0
      %3909 = vmatprep.subr.mxu0 0.0
      %3910 = vmatpush1.msra.mxu0 0.0
      %3911 = vmatprep.subr.mxu0 0.0
      %3912 = vmatpush1.msra.mxu0 0.0
      %3913 = vmatprep.subr.mxu0 0.0
      %3914 = vmatpush1.msra.mxu0 0.0
      %3915 = vmatprep.subr.mxu0 0.0
      %3916 = vmatpush1.msra.mxu0 0.0
      %3917 = vmatprep.subr.mxu0 0.0
      %3918 = vmatpush1.msra.mxu0 0.0
      %3919 = vmatprep.subr.mxu0 0.0
      %3920 = vmatpush1.msra.mxu0 0.0
      %3921 = vmatprep.subr.mxu0 0.0
      %3922 = vmatpush1.msra.mxu0 0.0
      %3923 = vmatprep.subr.mxu0 0.0
      %3924 = vmatpush1.msra.mxu0 0.0
      %3925 = vmatprep.subr.mxu0 0.0
      %3926 = vmatpush1.msra.mxu0 0.0
      %3927 = vmatprep.subr.mxu0 0.0
      %3928 = vmatpush1.msra.mxu0 0.0
      %3929 = vmatprep.subr.mxu0 0.0
      %3930 = vmatpush1.msra.mxu0 0.0
      %3931 = vmatprep.subr.mxu0 0.0
      %3932 = vmatpush1.msra.mxu0 0.0
      %3933 = vmatprep.subr.mxu0 0.0
      %3934 = vmatpush1.msra.mxu0 0.0
      %3935 = vmatprep.subr.mxu0 0.0
      %3936 = vmatpush1.msra.mxu0 0.0
      %3937 = vmatprep.subr.mxu0 0.0
      %3938 = vmatpush1.msra.mxu0 0.0
      %3939 = vmatprep.subr.mxu0 0.0
      %3940 = vmatpush1.msra.mxu0 0.0
      %3941 = vmatprep.subr.mxu0 0.0
      %3942 = vmatpush1.msra.mxu0 0.0
      %3943 = vmatprep.subr.mxu0 0.0
      %3944 = vmatpush1.msra.mxu0 0.0
      %3945 = vmatprep.subr.mxu0 0.0
      %3946 = vmatpush1.msra.mxu0 0.0
      %3947 = vmatprep.subr.mxu0 0.0
      %3948 = vmatpush1.msra.mxu0 0.0
      %3949 = vmatprep.subr.mxu0 0.0
      %3950 = vmatpush1.msra.mxu0 0.0
      %3951 = vmatprep.subr.mxu0 0.0
      %3952 = vmatpush1.msra.mxu0 0.0
      %3953 = vmatprep.subr.mxu0 0.0
      %3954 = vmatpush1.msra.mxu0 0.0
      %3955 = vmatprep.subr.mxu0 0.0
      %3956 = vmatpush1.msra.mxu0 0.0
      %3957 = vmatprep.subr.mxu0 0.0
      %3958 = vmatpush1.msra.mxu0 0.0
      %3959 = vmatprep.subr.mxu0 0.0
      %3960 = vmatpush1.msra.mxu0 0.0
      %3961 = vmatprep.mubr.f32.mxu0 0.0
      %3962 = vmatmul.mubr.f32.gmra.mrb[0].mxu0 %v3895
      %v3963 = vpop.f32.mrb[0].mxu0
      %v3964 = vadd.f32 0.0, %v3963
      %v3965 = vpop.f32.mrb[0].mxu0
      %3966 = vdwg.mxu0
      %3967 = vmatprep.subr.mxu0 0.0
      %3968 = vmatpush1.msra.mxu0 %v3436
      %3969 = vmatprep.subr.mxu0 0.0
      %3970 = vmatpush1.msra.mxu0 %v3437
      %3971 = vmatprep.subr.mxu0 0.0
      %3972 = vmatpush1.msra.mxu0 0.0
      %3973 = vmatprep.subr.mxu0 0.0
      %3974 = vmatpush1.msra.mxu0 0.0
      %3975 = vmatprep.subr.mxu0 0.0
      %3976 = vmatpush1.msra.mxu0 0.0
      %3977 = vmatprep.subr.mxu0 0.0
      %3978 = vmatpush1.msra.mxu0 0.0
      %3979 = vmatprep.subr.mxu0 0.0
      %3980 = vmatpush1.msra.mxu0 0.0
      %3981 = vmatprep.subr.mxu0 0.0
      %3982 = vmatpush1.msra.mxu0 0.0
      %3983 = vmatprep.subr.mxu0 0.0
      %3984 = vmatpush1.msra.mxu0 0.0
      %3985 = vmatprep.subr.mxu0 0.0
      %3986 = vmatpush1.msra.mxu0 0.0
      %3987 = vmatprep.subr.mxu0 0.0
      %3988 = vmatpush1.msra.mxu0 0.0
      %3989 = vmatprep.subr.mxu0 0.0
      %3990 = vmatpush1.msra.mxu0 0.0
      %3991 = vmatprep.subr.mxu0 0.0
      %3992 = vmatpush1.msra.mxu0 0.0
      %3993 = vmatprep.subr.mxu0 0.0
      %3994 = vmatpush1.msra.mxu0 0.0
      %3995 = vmatprep.subr.mxu0 0.0
      %3996 = vmatpush1.msra.mxu0 0.0
      %3997 = vmatprep.subr.mxu0 0.0
      %3998 = vmatpush1.msra.mxu0 0.0
      %3999 = vmatprep.subr.mxu0 0.0
      %4000 = vmatpush1.msra.mxu0 0.0
      %4001 = vmatprep.subr.mxu0 0.0
      %4002 = vmatpush1.msra.mxu0 0.0
      %4003 = vmatprep.subr.mxu0 0.0
      %4004 = vmatpush1.msra.mxu0 0.0
      %4005 = vmatprep.subr.mxu0 0.0
      %4006 = vmatpush1.msra.mxu0 0.0
      %4007 = vmatprep.subr.mxu0 0.0
      %4008 = vmatpush1.msra.mxu0 0.0
      %4009 = vmatprep.subr.mxu0 0.0
      %4010 = vmatpush1.msra.mxu0 0.0
      %4011 = vmatprep.subr.mxu0 0.0
      %4012 = vmatpush1.msra.mxu0 0.0
      %4013 = vmatprep.subr.mxu0 0.0
      %4014 = vmatpush1.msra.mxu0 0.0
      %4015 = vmatprep.subr.mxu0 0.0
      %4016 = vmatpush1.msra.mxu0 0.0
      %4017 = vmatprep.subr.mxu0 0.0
      %4018 = vmatpush1.msra.mxu0 0.0
      %4019 = vmatprep.subr.mxu0 0.0
      %4020 = vmatpush1.msra.mxu0 0.0
      %4021 = vmatprep.subr.mxu0 0.0
      %4022 = vmatpush1.msra.mxu0 0.0
      %4023 = vmatprep.subr.mxu0 0.0
      %4024 = vmatpush1.msra.mxu0 0.0
      %4025 = vmatprep.subr.mxu0 0.0
      %4026 = vmatpush1.msra.mxu0 0.0
      %4027 = vmatprep.subr.mxu0 0.0
      %4028 = vmatpush1.msra.mxu0 0.0
      %4029 = vmatprep.subr.mxu0 0.0
      %4030 = vmatpush1.msra.mxu0 0.0
      %4031 = vmatprep.mubr.f32.mxu0 0.0
      %4032 = vmatmul.mubr.f32.gmra.mrb[0].mxu0 %v3895
      %v4033 = vpop.f32.mrb[0].mxu0
      %v4034 = vadd.f32 0.0, %v4033
      %v4035 = vpop.f32.mrb[0].mxu0
      %4036 = vdwg.mxu0
      %v4037 = vmax.f32 %v3964, %v4034
      %4039 = vrot.lane.b32.xlu0 %v4037, 24
      %v4040 = vpop.permute.xlu0 %4039
      %vm4042 = vcmask 261312
      %4043 = vst.msk [vmem:[%s343] sm:$0xff] %vm4042, %v4040
      %v4044 = vmax.f32 %v3352, %v3402
      %4046 = vrot.lane.b32.xlu0 %v4044, 112
      %v4047 = vpop.permute.xlu0 %4046
      %v4048 = vsel %vm3354, %v4047, 0
      %4050 = vmatprep.subr.mxu0 0.0
      %4051 = vmatpush1.msra.mxu0 %v3434
      %4052 = vmatprep.subr.mxu0 0.0
      %4053 = vmatpush1.msra.mxu0 %v3435
      %4054 = vmatprep.subr.mxu0 0.0
      %4055 = vmatpush1.msra.mxu0 0.0
      %4056 = vmatprep.subr.mxu0 0.0
      %4057 = vmatpush1.msra.mxu0 0.0
      %4058 = vmatprep.subr.mxu0 0.0
      %4059 = vmatpush1.msra.mxu0 0.0
      %4060 = vmatprep.subr.mxu0 0.0
      %4061 = vmatpush1.msra.mxu0 0.0
      %4062 = vmatprep.subr.mxu0 0.0
      %4063 = vmatpush1.msra.mxu0 0.0
      %4064 = vmatprep.subr.mxu0 0.0
      %4065 = vmatpush1.msra.mxu0 0.0
      %4066 = vmatprep.subr.mxu0 0.0
      %4067 = vmatpush1.msra.mxu0 0.0
      %4068 = vmatprep.subr.mxu0 0.0
      %4069 = vmatpush1.msra.mxu0 0.0
      %4070 = vmatprep.subr.mxu0 0.0
      %4071 = vmatpush1.msra.mxu0 0.0
      %4072 = vmatprep.subr.mxu0 0.0
      %4073 = vmatpush1.msra.mxu0 0.0
      %4074 = vmatprep.subr.mxu0 0.0
      %4075 = vmatpush1.msra.mxu0 0.0
      %4076 = vmatprep.subr.mxu0 0.0
      %4077 = vmatpush1.msra.mxu0 0.0
      %4078 = vmatprep.subr.mxu0 0.0
      %4079 = vmatpush1.msra.mxu0 0.0
      %4080 = vmatprep.subr.mxu0 0.0
      %4081 = vmatpush1.msra.mxu0 0.0
      %4082 = vmatprep.subr.mxu0 0.0
      %4083 = vmatpush1.msra.mxu0 0.0
      %4084 = vmatprep.subr.mxu0 0.0
      %4085 = vmatpush1.msra.mxu0 0.0
      %4086 = vmatprep.subr.mxu0 0.0
      %4087 = vmatpush1.msra.mxu0 0.0
      %4088 = vmatprep.subr.mxu0 0.0
      %4089 = vmatpush1.msra.mxu0 0.0
      %4090 = vmatprep.subr.mxu0 0.0
      %4091 = vmatpush1.msra.mxu0 0.0
      %4092 = vmatprep.subr.mxu0 0.0
      %4093 = vmatpush1.msra.mxu0 0.0
      %4094 = vmatprep.subr.mxu0 0.0
      %4095 = vmatpush1.msra.mxu0 0.0
      %4096 = vmatprep.subr.mxu0 0.0
      %4097 = vmatpush1.msra.mxu0 0.0
      %4098 = vmatprep.subr.mxu0 0.0
      %4099 = vmatpush1.msra.mxu0 0.0
      %4100 = vmatprep.subr.mxu0 0.0
      %4101 = vmatpush1.msra.mxu0 0.0
      %4102 = vmatprep.subr.mxu0 0.0
      %4103 = vmatpush1.msra.mxu0 0.0
      %4104 = vmatprep.subr.mxu0 0.0
      %4105 = vmatpush1.msra.mxu0 0.0
      %4106 = vmatprep.subr.mxu0 0.0
      %4107 = vmatpush1.msra.mxu0 0.0
      %4108 = vmatprep.subr.mxu0 0.0
      %4109 = vmatpush1.msra.mxu0 0.0
      %4110 = vmatprep.subr.mxu0 0.0
      %4111 = vmatpush1.msra.mxu0 0.0
      %4112 = vmatprep.subr.mxu0 0.0
      %4113 = vmatpush1.msra.mxu0 0.0
      %4114 = vmatprep.mubr.f32.mxu0 0.0
      %4115 = vmatmul.mubr.f32.gmra.mrb[0].mxu0 %v4048
      %v4116 = vpop.f32.mrb[0].mxu0
      %v4117 = vadd.f32 0.0, %v4116
      %v4118 = vpop.f32.mrb[0].mxu0
      %4119 = vdwg.mxu0
      %4120 = vmatprep.subr.mxu0 0.0
      %4121 = vmatpush1.msra.mxu0 %v3436
      %4122 = vmatprep.subr.mxu0 0.0
      %4123 = vmatpush1.msra.mxu0 %v3437
      %4124 = vmatprep.subr.mxu0 0.0
      %4125 = vmatpush1.msra.mxu0 0.0
      %4126 = vmatprep.subr.mxu0 0.0
      %4127 = vmatpush1.msra.mxu0 0.0
      %4128 = vmatprep.subr.mxu0 0.0
      %4129 = vmatpush1.msra.mxu0 0.0
      %4130 = vmatprep.subr.mxu0 0.0
      %4131 = vmatpush1.msra.mxu0 0.0
      %4132 = vmatprep.subr.mxu0 0.0
      %4133 = vmatpush1.msra.mxu0 0.0
      %4134 = vmatprep.subr.mxu0 0.0
      %4135 = vmatpush1.msra.mxu0 0.0
      %4136 = vmatprep.subr.mxu0 0.0
      %4137 = vmatpush1.msra.mxu0 0.0
      %4138 = vmatprep.subr.mxu0 0.0
      %4139 = vmatpush1.msra.mxu0 0.0
      %4140 = vmatprep.subr.mxu0 0.0
      %4141 = vmatpush1.msra.mxu0 0.0
      %4142 = vmatprep.subr.mxu0 0.0
      %4143 = vmatpush1.msra.mxu0 0.0
      %4144 = vmatprep.subr.mxu0 0.0
      %4145 = vmatpush1.msra.mxu0 0.0
      %4146 = vmatprep.subr.mxu0 0.0
      %4147 = vmatpush1.msra.mxu0 0.0
      %4148 = vmatprep.subr.mxu0 0.0
      %4149 = vmatpush1.msra.mxu0 0.0
      %4150 = vmatprep.subr.mxu0 0.0
      %4151 = vmatpush1.msra.mxu0 0.0
      %4152 = vmatprep.subr.mxu0 0.0
      %4153 = vmatpush1.msra.mxu0 0.0
      %4154 = vmatprep.subr.mxu0 0.0
      %4155 = vmatpush1.msra.mxu0 0.0
      %4156 = vmatprep.subr.mxu0 0.0
      %4157 = vmatpush1.msra.mxu0 0.0
      %4158 = vmatprep.subr.mxu0 0.0
      %4159 = vmatpush1.msra.mxu0 0.0
      %4160 = vmatprep.subr.mxu0 0.0
      %4161 = vmatpush1.msra.mxu0 0.0
      %4162 = vmatprep.subr.mxu0 0.0
      %4163 = vmatpush1.msra.mxu0 0.0
      %4164 = vmatprep.subr.mxu0 0.0
      %4165 = vmatpush1.msra.mxu0 0.0
      %4166 = vmatprep.subr.mxu0 0.0
      %4167 = vmatpush1.msra.mxu0 0.0
      %4168 = vmatprep.subr.mxu0 0.0
      %4169 = vmatpush1.msra.mxu0 0.0
      %4170 = vmatprep.subr.mxu0 0.0
      %4171 = vmatpush1.msra.mxu0 0.0
      %4172 = vmatprep.subr.mxu0 0.0
      %4173 = vmatpush1.msra.mxu0 0.0
      %4174 = vmatprep.subr.mxu0 0.0
      %4175 = vmatpush1.msra.mxu0 0.0
      %4176 = vmatprep.subr.mxu0 0.0
      %4177 = vmatpush1.msra.mxu0 0.0
      %4178 = vmatprep.subr.mxu0 0.0
      %4179 = vmatpush1.msra.mxu0 0.0
      %4180 = vmatprep.subr.mxu0 0.0
      %4181 = vmatpush1.msra.mxu0 0.0
      %4182 = vmatprep.subr.mxu0 0.0
      %4183 = vmatpush1.msra.mxu0 0.0
      %4184 = vmatprep.mubr.f32.mxu0 0.0
      %4185 = vmatmul.mubr.f32.gmra.mrb[0].mxu0 %v4048
      %v4186 = vpop.f32.mrb[0].mxu0
      %v4187 = vadd.f32 0.0, %v4186
      %v4188 = vpop.f32.mrb[0].mxu0
      %4189 = vdwg.mxu0
      %v4190 = vmax.f32 %v4117, %v4187
      %4192 = vrot.lane.b32.xlu0 %v4190, 32
      %v4193 = vpop.permute.xlu0 %4192
      %vm4195 = vcmask 326912
      %4196 = vst.msk [vmem:[%s343] sm:$0xff] %vm4195, %v4193
      %4197 = vrot.lane.b32.xlu0 %v4044, 76
      %v4198 = vpop.permute.xlu0 %4197
      %v4199 = vsel %vm3354, %v4198, 0
      %4201 = vmatprep.subr.mxu0 0.0
      %4202 = vmatpush1.msra.mxu0 %v3434
      %4203 = vmatprep.subr.mxu0 0.0
      %4204 = vmatpush1.msra.mxu0 %v3435
      %4205 = vmatprep.subr.mxu0 0.0
      %4206 = vmatpush1.msra.mxu0 0.0
      %4207 = vmatprep.subr.mxu0 0.0
      %4208 = vmatpush1.msra.mxu0 0.0
      %4209 = vmatprep.subr.mxu0 0.0
      %4210 = vmatpush1.msra.mxu0 0.0
      %4211 = vmatprep.subr.mxu0 0.0
      %4212 = vmatpush1.msra.mxu0 0.0
      %4213 = vmatprep.subr.mxu0 0.0
      %4214 = vmatpush1.msra.mxu0 0.0
      %4215 = vmatprep.subr.mxu0 0.0
      %4216 = vmatpush1.msra.mxu0 0.0
      %4217 = vmatprep.subr.mxu0 0.0
      %4218 = vmatpush1.msra.mxu0 0.0
      %4219 = vmatprep.subr.mxu0 0.0
      %4220 = vmatpush1.msra.mxu0 0.0
      %4221 = vmatprep.subr.mxu0 0.0
      %4222 = vmatpush1.msra.mxu0 0.0
      %4223 = vmatprep.subr.mxu0 0.0
      %4224 = vmatpush1.msra.mxu0 0.0
      %4225 = vmatprep.subr.mxu0 0.0
      %4226 = vmatpush1.msra.mxu0 0.0
      %4227 = vmatprep.subr.mxu0 0.0
      %4228 = vmatpush1.msra.mxu0 0.0
      %4229 = vmatprep.subr.mxu0 0.0
      %4230 = vmatpush1.msra.mxu0 0.0
      %4231 = vmatprep.subr.mxu0 0.0
      %4232 = vmatpush1.msra.mxu0 0.0
      %4233 = vmatprep.subr.mxu0 0.0
      %4234 = vmatpush1.msra.mxu0 0.0
      %4235 = vmatprep.subr.mxu0 0.0
      %4236 = vmatpush1.msra.mxu0 0.0
      %4237 = vmatprep.subr.mxu0 0.0
      %4238 = vmatpush1.msra.mxu0 0.0
      %4239 = vmatprep.subr.mxu0 0.0
      %4240 = vmatpush1.msra.mxu0 0.0
      %4241 = vmatprep.subr.mxu0 0.0
      %4242 = vmatpush1.msra.mxu0 0.0
      %4243 = vmatprep.subr.mxu0 0.0
      %4244 = vmatpush1.msra.mxu0 0.0
      %4245 = vmatprep.subr.mxu0 0.0
      %4246 = vmatpush1.msra.mxu0 0.0
      %4247 = vmatprep.subr.mxu0 0.0
      %4248 = vmatpush1.msra.mxu0 0.0
      %4249 = vmatprep.subr.mxu0 0.0
      %4250 = vmatpush1.msra.mxu0 0.0
      %4251 = vmatprep.subr.mxu0 0.0
      %4252 = vmatpush1.msra.mxu0 0.0
      %4253 = vmatprep.subr.mxu0 0.0
      %4254 = vmatpush1.msra.mxu0 0.0
      %4255 = vmatprep.subr.mxu0 0.0
      %4256 = vmatpush1.msra.mxu0 0.0
      %4257 = vmatprep.subr.mxu0 0.0
      %4258 = vmatpush1.msra.mxu0 0.0
      %4259 = vmatprep.subr.mxu0 0.0
      %4260 = vmatpush1.msra.mxu0 0.0
      %4261 = vmatprep.subr.mxu0 0.0
      %4262 = vmatpush1.msra.mxu0 0.0
      %4263 = vmatprep.subr.mxu0 0.0
      %4264 = vmatpush1.msra.mxu0 0.0
      %4265 = vmatprep.mubr.f32.mxu0 0.0
      %4266 = vmatmul.mubr.f32.gmra.mrb[0].mxu0 %v4199
      %v4267 = vpop.f32.mrb[0].mxu0
      %v4268 = vadd.f32 0.0, %v4267
      %v4269 = vpop.f32.mrb[0].mxu0
      %4270 = vdwg.mxu0
      %4271 = vmatprep.subr.mxu0 0.0
      %4272 = vmatpush1.msra.mxu0 %v3436
      %4273 = vmatprep.subr.mxu0 0.0
      %4274 = vmatpush1.msra.mxu0 %v3437
      %4275 = vmatprep.subr.mxu0 0.0
      %4276 = vmatpush1.msra.mxu0 0.0
      %4277 = vmatprep.subr.mxu0 0.0
      %4278 = vmatpush1.msra.mxu0 0.0
      %4279 = vmatprep.subr.mxu0 0.0
      %4280 = vmatpush1.msra.mxu0 0.0
      %4281 = vmatprep.subr.mxu0 0.0
      %4282 = vmatpush1.msra.mxu0 0.0
      %4283 = vmatprep.subr.mxu0 0.0
      %4284 = vmatpush1.msra.mxu0 0.0
      %4285 = vmatprep.subr.mxu0 0.0
      %4286 = vmatpush1.msra.mxu0 0.0
      %4287 = vmatprep.subr.mxu0 0.0
      %4288 = vmatpush1.msra.mxu0 0.0
      %4289 = vmatprep.subr.mxu0 0.0
      %4290 = vmatpush1.msra.mxu0 0.0
      %4291 = vmatprep.subr.mxu0 0.0
      %4292 = vmatpush1.msra.mxu0 0.0
      %4293 = vmatprep.subr.mxu0 0.0
      %4294 = vmatpush1.msra.mxu0 0.0
      %4295 = vmatprep.subr.mxu0 0.0
      %4296 = vmatpush1.msra.mxu0 0.0
      %4297 = vmatprep.subr.mxu0 0.0
      %4298 = vmatpush1.msra.mxu0 0.0
      %4299 = vmatprep.subr.mxu0 0.0
      %4300 = vmatpush1.msra.mxu0 0.0
      %4301 = vmatprep.subr.mxu0 0.0
      %4302 = vmatpush1.msra.mxu0 0.0
      %4303 = vmatprep.subr.mxu0 0.0
      %4304 = vmatpush1.msra.mxu0 0.0
      %4305 = vmatprep.subr.mxu0 0.0
      %4306 = vmatpush1.msra.mxu0 0.0
      %4307 = vmatprep.subr.mxu0 0.0
      %4308 = vmatpush1.msra.mxu0 0.0
      %4309 = vmatprep.subr.mxu0 0.0
      %4310 = vmatpush1.msra.mxu0 0.0
      %4311 = vmatprep.subr.mxu0 0.0
      %4312 = vmatpush1.msra.mxu0 0.0
      %4313 = vmatprep.subr.mxu0 0.0
      %4314 = vmatpush1.msra.mxu0 0.0
      %4315 = vmatprep.subr.mxu0 0.0
      %4316 = vmatpush1.msra.mxu0 0.0
      %4317 = vmatprep.subr.mxu0 0.0
      %4318 = vmatpush1.msra.mxu0 0.0
      %4319 = vmatprep.subr.mxu0 0.0
      %4320 = vmatpush1.msra.mxu0 0.0
      %4321 = vmatprep.subr.mxu0 0.0
      %4322 = vmatpush1.msra.mxu0 0.0
      %4323 = vmatprep.subr.mxu0 0.0
      %4324 = vmatpush1.msra.mxu0 0.0
      %4325 = vmatprep.subr.mxu0 0.0
      %4326 = vmatpush1.msra.mxu0 0.0
      %4327 = vmatprep.subr.mxu0 0.0
      %4328 = vmatpush1.msra.mxu0 0.0
      %4329 = vmatprep.subr.mxu0 0.0
      %4330 = vmatpush1.msra.mxu0 0.0
      %4331 = vmatprep.subr.mxu0 0.0
      %4332 = vmatpush1.msra.mxu0 0.0
      %4333 = vmatprep.subr.mxu0 0.0
      %4334 = vmatpush1.msra.mxu0 0.0
      %4335 = vmatprep.mubr.f32.mxu0 0.0
      %4336 = vmatmul.mubr.f32.gmra.mrb[0].mxu0 %v4199
      %v4337 = vpop.f32.mrb[0].mxu0
      %v4338 = vadd.f32 0.0, %v4337
      %v4339 = vpop.f32.mrb[0].mxu0
      %4340 = vdwg.mxu0
      %v4341 = vmax.f32 %v4268, %v4338
      %4343 = vrot.lane.b32.xlu0 %v4341, 40
      %v4344 = vpop.permute.xlu0 %4343
      %vm4346 = vcmask 392512
      %4347 = vst.msk [vmem:[%s343] sm:$0xff] %vm4346, %v4344
      %4348 = vrot.lane.b32.xlu0 %v4044, 40
      %v4349 = vpop.permute.xlu0 %4348
      %v4350 = vsel %vm3354, %v4349, 0
      %4352 = vmatprep.subr.mxu0 0.0
      %4353 = vmatpush1.msra.mxu0 %v3434
      %4354 = vmatprep.subr.mxu0 0.0
      %4355 = vmatpush1.msra.mxu0 %v3435
      %4356 = vmatprep.subr.mxu0 0.0
      %4357 = vmatpush1.msra.mxu0 0.0
      %4358 = vmatprep.subr.mxu0 0.0
      %4359 = vmatpush1.msra.mxu0 0.0
      %4360 = vmatprep.subr.mxu0 0.0
      %4361 = vmatpush1.msra.mxu0 0.0
      %4362 = vmatprep.subr.mxu0 0.0
      %4363 = vmatpush1.msra.mxu0 0.0
      %4364 = vmatprep.subr.mxu0 0.0
      %4365 = vmatpush1.msra.mxu0 0.0
      %4366 = vmatprep.subr.mxu0 0.0
      %4367 = vmatpush1.msra.mxu0 0.0
      %4368 = vmatprep.subr.mxu0 0.0
      %4369 = vmatpush1.msra.mxu0 0.0
      %4370 = vmatprep.subr.mxu0 0.0
      %4371 = vmatpush1.msra.mxu0 0.0
      %4372 = vmatprep.subr.mxu0 0.0
      %4373 = vmatpush1.msra.mxu0 0.0
      %4374 = vmatprep.subr.mxu0 0.0
      %4375 = vmatpush1.msra.mxu0 0.0
      %4376 = vmatprep.subr.mxu0 0.0
      %4377 = vmatpush1.msra.mxu0 0.0
      %4378 = vmatprep.subr.mxu0 0.0
      %4379 = vmatpush1.msra.mxu0 0.0
      %4380 = vmatprep.subr.mxu0 0.0
      %4381 = vmatpush1.msra.mxu0 0.0
      %4382 = vmatprep.subr.mxu0 0.0
      %4383 = vmatpush1.msra.mxu0 0.0
      %4384 = vmatprep.subr.mxu0 0.0
      %4385 = vmatpush1.msra.mxu0 0.0
      %4386 = vmatprep.subr.mxu0 0.0
      %4387 = vmatpush1.msra.mxu0 0.0
      %4388 = vmatprep.subr.mxu0 0.0
      %4389 = vmatpush1.msra.mxu0 0.0
      %4390 = vmatprep.subr.mxu0 0.0
      %4391 = vmatpush1.msra.mxu0 0.0
      %4392 = vmatprep.subr.mxu0 0.0
      %4393 = vmatpush1.msra.mxu0 0.0
      %4394 = vmatprep.subr.mxu0 0.0
      %4395 = vmatpush1.msra.mxu0 0.0
      %4396 = vmatprep.subr.mxu0 0.0
      %4397 = vmatpush1.msra.mxu0 0.0
      %4398 = vmatprep.subr.mxu0 0.0
      %4399 = vmatpush1.msra.mxu0 0.0
      %4400 = vmatprep.subr.mxu0 0.0
      %4401 = vmatpush1.msra.mxu0 0.0
      %4402 = vmatprep.subr.mxu0 0.0
      %4403 = vmatpush1.msra.mxu0 0.0
      %4404 = vmatprep.subr.mxu0 0.0
      %4405 = vmatpush1.msra.mxu0 0.0
      %4406 = vmatprep.subr.mxu0 0.0
      %4407 = vmatpush1.msra.mxu0 0.0
      %4408 = vmatprep.subr.mxu0 0.0
      %4409 = vmatpush1.msra.mxu0 0.0
      %4410 = vmatprep.subr.mxu0 0.0
      %4411 = vmatpush1.msra.mxu0 0.0
      %4412 = vmatprep.subr.mxu0 0.0
      %4413 = vmatpush1.msra.mxu0 0.0
      %4414 = vmatprep.subr.mxu0 0.0
      %4415 = vmatpush1.msra.mxu0 0.0
      %4416 = vmatprep.mubr.f32.mxu0 0.0
      %4417 = vmatmul.mubr.f32.gmra.mrb[0].mxu0 %v4350
      %v4418 = vpop.f32.mrb[0].mxu0
      %v4419 = vadd.f32 0.0, %v4418
      %v4420 = vpop.f32.mrb[0].mxu0
      %4421 = vdwg.mxu0
      %4422 = vmatprep.subr.mxu0 0.0
      %4423 = vmatpush1.msra.mxu0 %v3436
      %4424 = vmatprep.subr.mxu0 0.0
      %4425 = vmatpush1.msra.mxu0 %v3437
      %4426 = vmatprep.subr.mxu0 0.0
      %4427 = vmatpush1.msra.mxu0 0.0
      %4428 = vmatprep.subr.mxu0 0.0
      %4429 = vmatpush1.msra.mxu0 0.0
      %4430 = vmatprep.subr.mxu0 0.0
      %4431 = vmatpush1.msra.mxu0 0.0
      %4432 = vmatprep.subr.mxu0 0.0
      %4433 = vmatpush1.msra.mxu0 0.0
      %4434 = vmatprep.subr.mxu0 0.0
      %4435 = vmatpush1.msra.mxu0 0.0
      %4436 = vmatprep.subr.mxu0 0.0
      %4437 = vmatpush1.msra.mxu0 0.0
      %4438 = vmatprep.subr.mxu0 0.0
      %4439 = vmatpush1.msra.mxu0 0.0
      %4440 = vmatprep.subr.mxu0 0.0
      %4441 = vmatpush1.msra.mxu0 0.0
      %4442 = vmatprep.subr.mxu0 0.0
      %4443 = vmatpush1.msra.mxu0 0.0
      %4444 = vmatprep.subr.mxu0 0.0
      %4445 = vmatpush1.msra.mxu0 0.0
      %4446 = vmatprep.subr.mxu0 0.0
      %4447 = vmatpush1.msra.mxu0 0.0
      %4448 = vmatprep.subr.mxu0 0.0
      %4449 = vmatpush1.msra.mxu0 0.0
      %4450 = vmatprep.subr.mxu0 0.0
      %4451 = vmatpush1.msra.mxu0 0.0
      %4452 = vmatprep.subr.mxu0 0.0
      %4453 = vmatpush1.msra.mxu0 0.0
      %4454 = vmatprep.subr.mxu0 0.0
      %4455 = vmatpush1.msra.mxu0 0.0
      %4456 = vmatprep.subr.mxu0 0.0
      %4457 = vmatpush1.msra.mxu0 0.0
      %4458 = vmatprep.subr.mxu0 0.0
      %4459 = vmatpush1.msra.mxu0 0.0
      %4460 = vmatprep.subr.mxu0 0.0
      %4461 = vmatpush1.msra.mxu0 0.0
      %4462 = vmatprep.subr.mxu0 0.0
      %4463 = vmatpush1.msra.mxu0 0.0
      %4464 = vmatprep.subr.mxu0 0.0
      %4465 = vmatpush1.msra.mxu0 0.0
      %4466 = vmatprep.subr.mxu0 0.0
      %4467 = vmatpush1.msra.mxu0 0.0
      %4468 = vmatprep.subr.mxu0 0.0
      %4469 = vmatpush1.msra.mxu0 0.0
      %4470 = vmatprep.subr.mxu0 0.0
      %4471 = vmatpush1.msra.mxu0 0.0
      %4472 = vmatprep.subr.mxu0 0.0
      %4473 = vmatpush1.msra.mxu0 0.0
      %4474 = vmatprep.subr.mxu0 0.0
      %4475 = vmatpush1.msra.mxu0 0.0
      %4476 = vmatprep.subr.mxu0 0.0
      %4477 = vmatpush1.msra.mxu0 0.0
      %4478 = vmatprep.subr.mxu0 0.0
      %4479 = vmatpush1.msra.mxu0 0.0
      %4480 = vmatprep.subr.mxu0 0.0
      %4481 = vmatpush1.msra.mxu0 0.0
      %4482 = vmatprep.subr.mxu0 0.0
      %4483 = vmatpush1.msra.mxu0 0.0
      %4484 = vmatprep.subr.mxu0 0.0
      %4485 = vmatpush1.msra.mxu0 0.0
      %4486 = vmatprep.mubr.f32.mxu0 0.0
      %4487 = vmatmul.mubr.f32.gmra.mrb[0].mxu0 %v4350
      %v4488 = vpop.f32.mrb[0].mxu0
      %v4489 = vadd.f32 0.0, %v4488
      %v4490 = vpop.f32.mrb[0].mxu0
      %4491 = vdwg.mxu0
      %v4492 = vmax.f32 %v4419, %v4489
      %4494 = vrot.lane.b32.xlu0 %v4492, 48
      %v4495 = vpop.permute.xlu0 %4494
      %vm4497 = vcmask 458112
      %4498 = vst.msk [vmem:[%s343] sm:$0xff] %vm4497, %v4495
      %4499 = vrot.lane.b32.xlu0 %v3353, 110
      %v4500 = vpop.permute.xlu0 %4499
      %v4502 = vmax.f32 %v3352, %v4500
      %v4503 = vmax.f32 %v3353, %v4500
      %4506 = vrot.lane.b32.xlu0 %v4502, 4
      %v4507 = vpop.permute.xlu0 %4506
      %4508 = vrot.lane.b32.xlu0 %v4503, 4
      %v4509 = vpop.permute.xlu0 %4508
      %v4510 = vsel %vm361, %v4507, %v4509
      %v4511 = vsel %vm3354, %v4510, 0
      %4513 = vmatprep.subr.mxu0 0.0
      %4514 = vmatpush1.msra.mxu0 %v3434
      %4515 = vmatprep.subr.mxu0 0.0
      %4516 = vmatpush1.msra.mxu0 %v3435
      %4517 = vmatprep.subr.mxu0 0.0
      %4518 = vmatpush1.msra.mxu0 0.0
      %4519 = vmatprep.subr.mxu0 0.0
      %4520 = vmatpush1.msra.mxu0 0.0
      %4521 = vmatprep.subr.mxu0 0.0
      %4522 = vmatpush1.msra.mxu0 0.0
      %4523 = vmatprep.subr.mxu0 0.0
      %4524 = vmatpush1.msra.mxu0 0.0
      %4525 = vmatprep.subr.mxu0 0.0
      %4526 = vmatpush1.msra.mxu0 0.0
      %4527 = vmatprep.subr.mxu0 0.0
      %4528 = vmatpush1.msra.mxu0 0.0
      %4529 = vmatprep.subr.mxu0 0.0
      %4530 = vmatpush1.msra.mxu0 0.0
      %4531 = vmatprep.subr.mxu0 0.0
      %4532 = vmatpush1.msra.mxu0 0.0
      %4533 = vmatprep.subr.mxu0 0.0
      %4534 = vmatpush1.msra.mxu0 0.0
      %4535 = vmatprep.subr.mxu0 0.0
      %4536 = vmatpush1.msra.mxu0 0.0
      %4537 = vmatprep.subr.mxu0 0.0
      %4538 = vmatpush1.msra.mxu0 0.0
      %4539 = vmatprep.subr.mxu0 0.0
      %4540 = vmatpush1.msra.mxu0 0.0
      %4541 = vmatprep.subr.mxu0 0.0
      %4542 = vmatpush1.msra.mxu0 0.0
      %4543 = vmatprep.subr.mxu0 0.0
      %4544 = vmatpush1.msra.mxu0 0.0
      %4545 = vmatprep.subr.mxu0 0.0
      %4546 = vmatpush1.msra.mxu0 0.0
      %4547 = vmatprep.subr.mxu0 0.0
      %4548 = vmatpush1.msra.mxu0 0.0
      %4549 = vmatprep.subr.mxu0 0.0
      %4550 = vmatpush1.msra.mxu0 0.0
      %4551 = vmatprep.subr.mxu0 0.0
      %4552 = vmatpush1.msra.mxu0 0.0
      %4553 = vmatprep.subr.mxu0 0.0
      %4554 = vmatpush1.msra.mxu0 0.0
      %4555 = vmatprep.subr.mxu0 0.0
      %4556 = vmatpush1.msra.mxu0 0.0
      %4557 = vmatprep.subr.mxu0 0.0
      %4558 = vmatpush1.msra.mxu0 0.0
      %4559 = vmatprep.subr.mxu0 0.0
      %4560 = vmatpush1.msra.mxu0 0.0
      %4561 = vmatprep.subr.mxu0 0.0
      %4562 = vmatpush1.msra.mxu0 0.0
      %4563 = vmatprep.subr.mxu0 0.0
      %4564 = vmatpush1.msra.mxu0 0.0
      %4565 = vmatprep.subr.mxu0 0.0
      %4566 = vmatpush1.msra.mxu0 0.0
      %4567 = vmatprep.subr.mxu0 0.0
      %4568 = vmatpush1.msra.mxu0 0.0
      %4569 = vmatprep.subr.mxu0 0.0
      %4570 = vmatpush1.msra.mxu0 0.0
      %4571 = vmatprep.subr.mxu0 0.0
      %4572 = vmatpush1.msra.mxu0 0.0
      %4573 = vmatprep.subr.mxu0 0.0
      %4574 = vmatpush1.msra.mxu0 0.0
      %4575 = vmatprep.subr.mxu0 0.0
      %4576 = vmatpush1.msra.mxu0 0.0
      %4577 = vmatprep.mubr.f32.mxu0 0.0
      %4578 = vmatmul.mubr.f32.gmra.mrb[0].mxu0 %v4511
      %v4579 = vpop.f32.mrb[0].mxu0
      %v4580 = vadd.f32 0.0, %v4579
      %v4581 = vpop.f32.mrb[0].mxu0
      %4582 = vdwg.mxu0
      %4583 = vmatprep.subr.mxu0 0.0
      %4584 = vmatpush1.msra.mxu0 %v3436
      %4585 = vmatprep.subr.mxu0 0.0
      %4586 = vmatpush1.msra.mxu0 %v3437
      %4587 = vmatprep.subr.mxu0 0.0
      %4588 = vmatpush1.msra.mxu0 0.0
      %4589 = vmatprep.subr.mxu0 0.0
      %4590 = vmatpush1.msra.mxu0 0.0
      %4591 = vmatprep.subr.mxu0 0.0
      %4592 = vmatpush1.msra.mxu0 0.0
      %4593 = vmatprep.subr.mxu0 0.0
      %4594 = vmatpush1.msra.mxu0 0.0
      %4595 = vmatprep.subr.mxu0 0.0
      %4596 = vmatpush1.msra.mxu0 0.0
      %4597 = vmatprep.subr.mxu0 0.0
      %4598 = vmatpush1.msra.mxu0 0.0
      %4599 = vmatprep.subr.mxu0 0.0
      %4600 = vmatpush1.msra.mxu0 0.0
      %4601 = vmatprep.subr.mxu0 0.0
      %4602 = vmatpush1.msra.mxu0 0.0
      %4603 = vmatprep.subr.mxu0 0.0
      %4604 = vmatpush1.msra.mxu0 0.0
      %4605 = vmatprep.subr.mxu0 0.0
      %4606 = vmatpush1.msra.mxu0 0.0
      %4607 = vmatprep.subr.mxu0 0.0
      %4608 = vmatpush1.msra.mxu0 0.0
      %4609 = vmatprep.subr.mxu0 0.0
      %4610 = vmatpush1.msra.mxu0 0.0
      %4611 = vmatprep.subr.mxu0 0.0
      %4612 = vmatpush1.msra.mxu0 0.0
      %4613 = vmatprep.subr.mxu0 0.0
      %4614 = vmatpush1.msra.mxu0 0.0
      %4615 = vmatprep.subr.mxu0 0.0
      %4616 = vmatpush1.msra.mxu0 0.0
      %4617 = vmatprep.subr.mxu0 0.0
      %4618 = vmatpush1.msra.mxu0 0.0
      %4619 = vmatprep.subr.mxu0 0.0
      %4620 = vmatpush1.msra.mxu0 0.0
      %4621 = vmatprep.subr.mxu0 0.0
      %4622 = vmatpush1.msra.mxu0 0.0
      %4623 = vmatprep.subr.mxu0 0.0
      %4624 = vmatpush1.msra.mxu0 0.0
      %4625 = vmatprep.subr.mxu0 0.0
      %4626 = vmatpush1.msra.mxu0 0.0
      %4627 = vmatprep.subr.mxu0 0.0
      %4628 = vmatpush1.msra.mxu0 0.0
      %4629 = vmatprep.subr.mxu0 0.0
      %4630 = vmatpush1.msra.mxu0 0.0
      %4631 = vmatprep.subr.mxu0 0.0
      %4632 = vmatpush1.msra.mxu0 0.0
      %4633 = vmatprep.subr.mxu0 0.0
      %4634 = vmatpush1.msra.mxu0 0.0
      %4635 = vmatprep.subr.mxu0 0.0
      %4636 = vmatpush1.msra.mxu0 0.0
      %4637 = vmatprep.subr.mxu0 0.0
      %4638 = vmatpush1.msra.mxu0 0.0
      %4639 = vmatprep.subr.mxu0 0.0
      %4640 = vmatpush1.msra.mxu0 0.0
      %4641 = vmatprep.subr.mxu0 0.0
      %4642 = vmatpush1.msra.mxu0 0.0
      %4643 = vmatprep.subr.mxu0 0.0
      %4644 = vmatpush1.msra.mxu0 0.0
      %4645 = vmatprep.subr.mxu0 0.0
      %4646 = vmatpush1.msra.mxu0 0.0
      %4647 = vmatprep.mubr.f32.mxu0 0.0
      %4648 = vmatmul.mubr.f32.gmra.mrb[0].mxu0 %v4511
      %v4649 = vpop.f32.mrb[0].mxu0
      %v4650 = vadd.f32 0.0, %v4649
      %v4651 = vpop.f32.mrb[0].mxu0
      %4652 = vdwg.mxu0
      %v4653 = vmax.f32 %v4580, %v4650
      %4655 = vrot.lane.b32.xlu0 %v4653, 56
      %v4656 = vpop.permute.xlu0 %4655
      %vm4658 = vcmask 523712
      %4659 = vst.msk [vmem:[%s343] sm:$0xff] %vm4658, %v4656
      %p4660 = scmp.lt.s32.totalorder %s21, 1
      %s4661 = scalar_select %p4660, %s21, 1
      %s4662 = smul.addr %s4661, 2
      %s4663 = smul.addr %s4662, 8
      %s4664 = scalar_lea.vmem %s8, %s4663
      %p4665 = scmp.lt.s32.totalorder %s21, 1
      %s4666 = scalar_select %p4665, %s21, 1
      %s4667 = smul.addr %s4666, 8
      %s4668 = scalar_lea.vmem %s9, %s4667
      // Predicated region
      $region53: #{down_forward.1} parent=51 // pred_check
        %p4669 = pneg %p212
      $region54: #{down_forward.1} parent=51 // pred_check_branch
        %4671 = sbr.rel (%p4669) target = $region56
      $region55: #{down_forward.1} parent=51 // pred_region
        _
      $region56: #{down_forward.1} parent=51 // pred_fallthru
        _
      // Predicated region
      $region57: #{down_forward.1} parent=51 // pred_check
        %p4672 = pneg %p238
      $region58: #{down_forward.1} parent=51 // pred_check_branch
        %4674 = sbr.rel (%p4672) target = $region60
      $region59: #{down_forward.1} parent=51 // pred_region
        _
      $region60: #{down_forward.1} parent=51 // pred_fallthru
        _
    $region52: #{down_forward.1} parent=5 // pred_fallthru
      _
    %p4675 = scmp.le.s32.totalorder 2, %s16
    // Predicated region
    $region61: #{down_forward.1} parent=5 // pred_check
      %p4676 = pneg %p4675
    $region62: #{down_forward.1} parent=5 // pred_check_branch
      %4678 = sbr.rel (%p4676) target = $region64
    $region63: #{down_forward.1} parent=5 // pred_region
      %s4679 = ssub.s32 %s16, 2
      // Predicated region
      $region65: #{down_forward.1} parent=63 // pred_check
        %p4680 = pneg %p218
      $region66: #{down_forward.1} parent=63 // pred_check_branch
        %4682 = sbr.rel (%p4680) target = $region68
      $region67: #{down_forward.1} parent=63 // pred_region
        %p4683 = scmp.lt.s32.totalorder %s22, 1
        %s4684 = scalar_select %p4683, %s22, 1
        %s4685 = smul.addr %s4684, 2
        %s4686 = smul.addr %s4685, 8
        %s4687 = scalar_lea.vmem %s8, %s4686
      $region68: #{down_forward.1} parent=63 // pred_fallthru
        _
      // Predicated region
      $region69: #{down_forward.1} parent=63 // pred_check
        %p4688 = pneg %p244
      $region70: #{down_forward.1} parent=63 // pred_check_branch
        %4690 = sbr.rel (%p4688) target = $region72
      $region71: #{down_forward.1} parent=63 // pred_region
        %p4691 = scmp.lt.s32.totalorder %s22, 1
        %s4692 = scalar_select %p4691, %s22, 1
        %s4693 = smul.addr %s4692, 8
        %s4694 = scalar_lea.vmem %s9, %s4693
      $region72: #{down_forward.1} parent=63 // pred_fallthru
        _
    $region64: #{down_forward.1} parent=5 // pred_fallthru
      _
  $region6: #{down_forward.1} parent=0 // loop_footer
    %s20 = sadd.s32 1, %s16
  $region7: #{down_forward.1} parent=0 // loop_footer_branch
    %15 = sbr.rel target = $region3
  $region8: #{down_forward.1} parent=0 // loop_exit
    _

</llo_original>
